<compile_context>
chip_gen: v7x
topology: tpu7x:2x2x1
jax: 0.10.0
libtpu: 0.0.40
codegen_flags: <defaults>
</compile_context>

<pallas_src>
import numpy as np
import jax
import jax.numpy as jnp
from jax.experimental import pallas as pl
from jax.experimental.pallas import tpu as pltpu

LEAKY_SLOPE = 0.2
IN_EPS = 1e-5
KSIZE = 4


def _reflect_src(idx, size):
    """Source index of padded index `idx` for reflect padding of width 1."""
    if idx == 0:
        return 1
    if idx == size + 1:
        return size - 2
    return idx - 1


def init_params(key, in_channels=3, features=(8, 16, 32, 64)):
    """Deterministic synthetic weights with the same shapes as the PyTorch module."""
    params = []
    cin = in_channels
    for cout in list(features) + [1]:
        key, kw_, kb_ = jax.random.split(key, 3)
        fan_in = cin * KSIZE * KSIZE
        w = jax.random.normal(kw_, (cout, cin, KSIZE, KSIZE), jnp.float32) / jnp.sqrt(float(fan_in))
        b = jax.random.normal(kb_, (cout,), jnp.float32) * 0.01
        params.append((w, b))
        cin = cout
    return params


def pack_params(params, in_channels, H, W):
    """Fold conv weights + reflect padding + stride into matmul operands (host, once).

    Per layer, with the transposed activation layout X[w, c*H + h], the conv is
        Y[wo, cout*Ho + ho] = sum_j (SEL_j @ X @ A_j)[wo, cout*Ho + ho] + b[cout]
    Returns (flat list of device arrays in kernel order, per-layer configs, out dims).
    """
    ops = []
    cfgs = []
    n_layers = len(params)
    C, h, w_sp = in_channels, H, W
    for li, (wt, b) in enumerate(params):
        cout = int(wt.shape[0])
        # `features == features[-1]` in the PyTorch code is always False (list vs int),
        # so every Block downsamples with stride=2; only the final conv is stride 1.
        stride = 1 if li == n_layers - 1 else 2
        use_norm = 0 < li < n_layers - 1
        act = "sigmoid" if li == n_layers - 1 else "leaky"
        Ho = (h + 2 - KSIZE) // stride + 1
        Wo = (w_sp + 2 - KSIZE) // stride + 1

        # Height selection (reflect pad + stride), folded into the weights.
        rsel = np.zeros((KSIZE, Ho, h), np.float32)
        for i in range(KSIZE):
            for ho in range(Ho):
                rsel[i, ho, _reflect_src(stride * ho + i, h)] = 1.0
        # Width selection (reflect pad + stride), applied as a row-select matmul.
        csel = np.zeros((KSIZE, Wo, w_sp), np.float32)
        for j in range(KSIZE):
            for wo in range(Wo):
                csel[j, wo, _reflect_src(stride * wo + j, w_sp)] = 1.0

        w_np = np.asarray(wt, np.float32)                      # (cout, C, kh, kw)
        a = np.einsum("ocij,iph->jchop", w_np, rsel)           # (kw, C, h, cout, Ho)
        a = a.reshape(KSIZE, C * h, cout * Ho)
        bexp = np.repeat(np.asarray(b, np.float32), Ho)[None, :]   # (1, cout*Ho)

        layer = [jnp.asarray(a, jnp.bfloat16),
                 jnp.asarray(csel, jnp.bfloat16),
                 jnp.asarray(bexp, jnp.float32)]
        if use_norm:
            R = cout * Ho
            blk = (np.arange(R)[:, None] // Ho) == (np.arange(R)[None, :] // Ho)
            m = blk.astype(np.float32) / float(Ho * Wo)        # per-channel block average
            layer.append(jnp.asarray(m, jnp.float32))
        ops.extend(layer)
        cfgs.append((use_norm, act))
        C, h, w_sp = cout, Ho, Wo
    return ops, tuple(cfgs), (C, h, w_sp)


def _make_fused_kernel(cfgs):
    """Whole-network forward for one sample: X[w, c*H+h] -> final Y[wo, cout*Ho+ho]."""

    def kernel(*refs):
        x_ref, o_ref = refs[0], refs[-1]
        w_refs = refs[1:-1]
        X = x_ref[0].astype(jnp.bfloat16)                      # (W, Cin*H)
        Y = None
        idx = 0
        for use_norm, act in cfgs:
            a_ref, sel_ref, b_ref = w_refs[idx], w_refs[idx + 1], w_refs[idx + 2]
            idx += 3
            m_ref = None
            if use_norm:
                m_ref = w_refs[idx]
                idx += 1

            # Conv(4x4, reflect pad 1, stride s): per kernel-column j,
            # width-select rows of X (exact copies) then contract (c, h, i) on MXU.
            acc = None
            for j in range(KSIZE):
                xs = jnp.dot(sel_ref[j], X,
                             preferred_element_type=jnp.float32).astype(jnp.bfloat16)
                t = jnp.dot(xs, a_ref[j], preferred_element_type=jnp.float32)
                acc = t if acc is None else acc + t
            Y = acc + b_ref[...]                               # (Wo, Cout*Ho), f32

            if use_norm:
                # InstanceNorm2d (eps=1e-5, no affine): per-channel stats over spatial
                # positions = column-block average via the precomputed M matrix.
                s1 = jnp.sum(Y, axis=0, keepdims=True)
                mean = jnp.dot(s1, m_ref[...], preferred_element_type=jnp.float32)
                d = Y - mean
                s2 = jnp.sum(d * d, axis=0, keepdims=True)
                var = jnp.dot(s2, m_ref[...], preferred_element_type=jnp.float32)
                Y = d * jax.lax.rsqrt(var + IN_EPS)

            if act == "leaky":
                Y = jnp.where(Y >= 0, Y, LEAKY_SLOPE * Y)
            else:
                Y = jax.nn.sigmoid(Y)
            X = Y.astype(jnp.bfloat16)                         # next layer's input

        o_ref[0] = Y.astype(o_ref.dtype)

    return kernel


def discriminator_forward(x, packed, cfgs, out_dims):
    N, C, H, W = x.shape
    Cf, Hf, Wf = out_dims
    # NCHW -> transposed layout X[n, w, c*H + h] (one cheap XLA transpose on the input only).
    xt = jnp.transpose(x, (0, 3, 1, 2)).reshape(N, W, C * H)

    in_specs = [pl.BlockSpec((1, W, C * H), lambda n: (n, 0, 0))]
    for arr in packed:
        in_specs.append(pl.BlockSpec(arr.shape, lambda n, _r=arr.ndim: (0,) * _r))

    out = pl.pallas_call(
        _make_fused_kernel(cfgs),
        out_shape=jax.ShapeDtypeStruct((N, Wf, Cf * Hf), jnp.float32),
        grid=(N,),
        in_specs=in_specs,
        out_specs=pl.BlockSpec((1, Wf, Cf * Hf), lambda n: (n, 0, 0)),
        compiler_params=pltpu.CompilerParams(
            dimension_semantics=("parallel",)),                # v7x: batch over 2 TCs
    )(xt, *packed)

    # (N, Wf, Cf*Hf) -> NCHW
    return out.reshape(N, Wf, Cf, Hf).transpose(0, 2, 3, 1)


def ref_forward(x, params):
    """Pure-JAX reference (lax.conv) to validate the Pallas implementation."""

    def conv(x, w, b, stride):
        xp = jnp.pad(x, ((0, 0), (0, 0), (1, 1), (1, 1)), mode="reflect")
        y = jax.lax.conv_general_dilated(
            xp, w, (stride, stride), "VALID",
            dimension_numbers=("NCHW", "OIHW", "NCHW"))
        return y + b[None, :, None, None]

    def leaky(y):
        return jnp.where(y >= 0, y, LEAKY_SLOPE * y)

    def inorm(y):
        m = jnp.mean(y, axis=(2, 3), keepdims=True)
        v = jnp.mean(jnp.square(y - m), axis=(2, 3), keepdims=True)
        return (y - m) * jax.lax.rsqrt(v + IN_EPS)

    w, b = params[0]
    x = leaky(conv(x, w, b, 2))
    for w, b in params[1:-1]:
        x = leaky(inorm(conv(x, w, b, 2)))
    w, b = params[-1]
    return jax.nn.sigmoid(conv(x, w, b, 1))


if __name__ == "__main__":
    key = jax.random.PRNGKey(0)
    kx, kp = jax.random.split(key)
    # Small shapes consistent with the module: NCHW, 4x4 convs,
    # spatial 32 -> 16 -> 8 -> 4 -> 2 -> 1.
    x = jax.random.normal(kx, (2, 3, 32, 32), jnp.float32)
    params = init_params(kp, in_channels=3, features=(8, 16, 32, 64))

    packed, cfgs, out_dims = pack_params(params, 3, 32, 32)
    out = discriminator_forward(x, packed, cfgs, out_dims)
    out = jax.block_until_ready(out)
    assert out.shape == (2, 1, 1, 1), out.shape

    ref = ref_forward(x, params)
    # bf16 MXU inputs with f32 accumulation -> compare at a bf16-appropriate tolerance.
    np.testing.assert_allclose(np.asarray(out), np.asarray(ref), rtol=2e-2, atol=2e-2)

    print("KERNEL_OK")
</pallas_src>

<mosaic_0001>
module attributes {stable_mosaic.version = 11 : i64} {
  func.func @kernel(%arg0: i32, %arg1: memref<1x32x96xf32, #tpu.memory_space<vmem>>, %arg2: memref<4x96x128xbf16, #tpu.memory_space<vmem>>, %arg3: memref<4x16x32xbf16, #tpu.memory_space<vmem>>, %arg4: memref<1x128xf32, #tpu.memory_space<vmem>>, %arg5: memref<4x128x128xbf16, #tpu.memory_space<vmem>>, %arg6: memref<4x8x16xbf16, #tpu.memory_space<vmem>>, %arg7: memref<1x128xf32, #tpu.memory_space<vmem>>, %arg8: memref<128x128xf32, #tpu.memory_space<vmem>>, %arg9: memref<4x128x128xbf16, #tpu.memory_space<vmem>>, %arg10: memref<4x4x8xbf16, #tpu.memory_space<vmem>>, %arg11: memref<1x128xf32, #tpu.memory_space<vmem>>, %arg12: memref<128x128xf32, #tpu.memory_space<vmem>>, %arg13: memref<4x128x128xbf16, #tpu.memory_space<vmem>>, %arg14: memref<4x2x4xbf16, #tpu.memory_space<vmem>>, %arg15: memref<1x128xf32, #tpu.memory_space<vmem>>, %arg16: memref<128x128xf32, #tpu.memory_space<vmem>>, %arg17: memref<4x128x1xbf16, #tpu.memory_space<vmem>>, %arg18: memref<4x1x2xbf16, #tpu.memory_space<vmem>>, %arg19: memref<1x1xf32, #tpu.memory_space<vmem>>, %arg20: memref<1x1x1xf32, #tpu.memory_space<vmem>>) attributes {dimension_semantics = [#tpu.dimension_semantics<parallel>], iteration_bounds = array<i64: 2>, scalar_prefetch = 0 : i64, scratch_operands = 0 : i64, tpu.core_type = #tpu.core_type<tc>, window_params = [{transform_indices = @transform_0, window_bounds = array<i64: 1, 32, 96>}, {pipeline_mode = #tpu.pipeline_mode<synchronous>, transform_indices = @transform_1, window_bounds = array<i64: 4, 96, 128>}, {pipeline_mode = #tpu.pipeline_mode<synchronous>, transform_indices = @transform_2, window_bounds = array<i64: 4, 16, 32>}, {pipeline_mode = #tpu.pipeline_mode<synchronous>, transform_indices = @transform_3, window_bounds = array<i64: 1, 128>}, {pipeline_mode = #tpu.pipeline_mode<synchronous>, transform_indices = @transform_4, window_bounds = array<i64: 4, 128, 128>}, {pipeline_mode = #tpu.pipeline_mode<synchronous>, transform_indices = @transform_5, window_bounds = array<i64: 4, 8, 16>}, {pipeline_mode = #tpu.pipeline_mode<synchronous>, transform_indices = @transform_6, window_bounds = array<i64: 1, 128>}, {pipeline_mode = #tpu.pipeline_mode<synchronous>, transform_indices = @transform_7, window_bounds = array<i64: 128, 128>}, {pipeline_mode = #tpu.pipeline_mode<synchronous>, transform_indices = @transform_8, window_bounds = array<i64: 4, 128, 128>}, {pipeline_mode = #tpu.pipeline_mode<synchronous>, transform_indices = @transform_9, window_bounds = array<i64: 4, 4, 8>}, {pipeline_mode = #tpu.pipeline_mode<synchronous>, transform_indices = @transform_10, window_bounds = array<i64: 1, 128>}, {pipeline_mode = #tpu.pipeline_mode<synchronous>, transform_indices = @transform_11, window_bounds = array<i64: 128, 128>}, {pipeline_mode = #tpu.pipeline_mode<synchronous>, transform_indices = @transform_12, window_bounds = array<i64: 4, 128, 128>}, {pipeline_mode = #tpu.pipeline_mode<synchronous>, transform_indices = @transform_13, window_bounds = array<i64: 4, 2, 4>}, {pipeline_mode = #tpu.pipeline_mode<synchronous>, transform_indices = @transform_14, window_bounds = array<i64: 1, 128>}, {pipeline_mode = #tpu.pipeline_mode<synchronous>, transform_indices = @transform_15, window_bounds = array<i64: 128, 128>}, {pipeline_mode = #tpu.pipeline_mode<synchronous>, transform_indices = @transform_16, window_bounds = array<i64: 4, 128, 1>}, {pipeline_mode = #tpu.pipeline_mode<synchronous>, transform_indices = @transform_17, window_bounds = array<i64: 4, 1, 2>}, {pipeline_mode = #tpu.pipeline_mode<synchronous>, transform_indices = @transform_18, window_bounds = array<i64: 1, 1>}, {transform_indices = @transform_19, window_bounds = array<i64: 1, 1, 1>}]} {
    %c0 = arith.constant 0 : index
    %c0_0 = arith.constant 0 : index
    %c0_1 = arith.constant 0 : index
    %0 = vector.load %arg1[%c0, %c0_0, %c0_1] : memref<1x32x96xf32, #tpu.memory_space<vmem>>, vector<1x32x96xf32>
    %1 = vector.shape_cast %0 : vector<1x32x96xf32> to vector<32x96xf32>
    %2 = arith.truncf %1 : vector<32x96xf32> to vector<32x96xbf16>
    %c0_2 = arith.constant 0 : index
    %c0_3 = arith.constant 0 : index
    %c0_4 = arith.constant 0 : index
    %3 = vector.load %arg3[%c0_2, %c0_3, %c0_4] : memref<4x16x32xbf16, #tpu.memory_space<vmem>>, vector<1x16x32xbf16>
    %4 = vector.shape_cast %3 : vector<1x16x32xbf16> to vector<16x32xbf16>
    %cst = arith.constant dense<0.000000e+00> : vector<16x96xf32>
    %5 = tpu.matmul %4, %2, %cst {dimension_numbers = #tpu.dot_dimension_numbers<[1], [0], [0], [1], [0, 0, 1, 1], [], []>} : vector<16x32xbf16>, vector<32x96xbf16>, vector<16x96xf32> -> vector<16x96xf32>
    %6 = arith.truncf %5 : vector<16x96xf32> to vector<16x96xbf16>
    %c0_5 = arith.constant 0 : index
    %c0_6 = arith.constant 0 : index
    %c0_7 = arith.constant 0 : index
    %7 = vector.load %arg2[%c0_5, %c0_6, %c0_7] : memref<4x96x128xbf16, #tpu.memory_space<vmem>>, vector<1x96x128xbf16>
    %8 = vector.shape_cast %7 : vector<1x96x128xbf16> to vector<96x128xbf16>
    %cst_8 = arith.constant dense<0.000000e+00> : vector<16x128xf32>
    %9 = tpu.matmul %6, %8, %cst_8 {dimension_numbers = #tpu.dot_dimension_numbers<[1], [0], [0], [1], [0, 0, 1, 1], [], []>} : vector<16x96xbf16>, vector<96x128xbf16>, vector<16x128xf32> -> vector<16x128xf32>
    %c1 = arith.constant 1 : index
    %c0_9 = arith.constant 0 : index
    %c0_10 = arith.constant 0 : index
    %10 = vector.load %arg3[%c1, %c0_9, %c0_10] : memref<4x16x32xbf16, #tpu.memory_space<vmem>>, vector<1x16x32xbf16>
    %11 = vector.shape_cast %10 : vector<1x16x32xbf16> to vector<16x32xbf16>
    %cst_11 = arith.constant dense<0.000000e+00> : vector<16x96xf32>
    %12 = tpu.matmul %11, %2, %cst_11 {dimension_numbers = #tpu.dot_dimension_numbers<[1], [0], [0], [1], [0, 0, 1, 1], [], []>} : vector<16x32xbf16>, vector<32x96xbf16>, vector<16x96xf32> -> vector<16x96xf32>
    %13 = arith.truncf %12 : vector<16x96xf32> to vector<16x96xbf16>
    %c1_12 = arith.constant 1 : index
    %c0_13 = arith.constant 0 : index
    %c0_14 = arith.constant 0 : index
    %14 = vector.load %arg2[%c1_12, %c0_13, %c0_14] : memref<4x96x128xbf16, #tpu.memory_space<vmem>>, vector<1x96x128xbf16>
    %15 = vector.shape_cast %14 : vector<1x96x128xbf16> to vector<96x128xbf16>
    %cst_15 = arith.constant dense<0.000000e+00> : vector<16x128xf32>
    %16 = tpu.matmul %13, %15, %cst_15 {dimension_numbers = #tpu.dot_dimension_numbers<[1], [0], [0], [1], [0, 0, 1, 1], [], []>} : vector<16x96xbf16>, vector<96x128xbf16>, vector<16x128xf32> -> vector<16x128xf32>
    %17 = arith.addf %9, %16 : vector<16x128xf32>
    %c2 = arith.constant 2 : index
    %c0_16 = arith.constant 0 : index
    %c0_17 = arith.constant 0 : index
    %18 = vector.load %arg3[%c2, %c0_16, %c0_17] : memref<4x16x32xbf16, #tpu.memory_space<vmem>>, vector<1x16x32xbf16>
    %19 = vector.shape_cast %18 : vector<1x16x32xbf16> to vector<16x32xbf16>
    %cst_18 = arith.constant dense<0.000000e+00> : vector<16x96xf32>
    %20 = tpu.matmul %19, %2, %cst_18 {dimension_numbers = #tpu.dot_dimension_numbers<[1], [0], [0], [1], [0, 0, 1, 1], [], []>} : vector<16x32xbf16>, vector<32x96xbf16>, vector<16x96xf32> -> vector<16x96xf32>
    %21 = arith.truncf %20 : vector<16x96xf32> to vector<16x96xbf16>
    %c2_19 = arith.constant 2 : index
    %c0_20 = arith.constant 0 : index
    %c0_21 = arith.constant 0 : index
    %22 = vector.load %arg2[%c2_19, %c0_20, %c0_21] : memref<4x96x128xbf16, #tpu.memory_space<vmem>>, vector<1x96x128xbf16>
    %23 = vector.shape_cast %22 : vector<1x96x128xbf16> to vector<96x128xbf16>
    %cst_22 = arith.constant dense<0.000000e+00> : vector<16x128xf32>
    %24 = tpu.matmul %21, %23, %cst_22 {dimension_numbers = #tpu.dot_dimension_numbers<[1], [0], [0], [1], [0, 0, 1, 1], [], []>} : vector<16x96xbf16>, vector<96x128xbf16>, vector<16x128xf32> -> vector<16x128xf32>
    %25 = arith.addf %17, %24 : vector<16x128xf32>
    %c3 = arith.constant 3 : index
    %c0_23 = arith.constant 0 : index
    %c0_24 = arith.constant 0 : index
    %26 = vector.load %arg3[%c3, %c0_23, %c0_24] : memref<4x16x32xbf16, #tpu.memory_space<vmem>>, vector<1x16x32xbf16>
    %27 = vector.shape_cast %26 : vector<1x16x32xbf16> to vector<16x32xbf16>
    %cst_25 = arith.constant dense<0.000000e+00> : vector<16x96xf32>
    %28 = tpu.matmul %27, %2, %cst_25 {dimension_numbers = #tpu.dot_dimension_numbers<[1], [0], [0], [1], [0, 0, 1, 1], [], []>} : vector<16x32xbf16>, vector<32x96xbf16>, vector<16x96xf32> -> vector<16x96xf32>
    %29 = arith.truncf %28 : vector<16x96xf32> to vector<16x96xbf16>
    %c3_26 = arith.constant 3 : index
    %c0_27 = arith.constant 0 : index
    %c0_28 = arith.constant 0 : index
    %30 = vector.load %arg2[%c3_26, %c0_27, %c0_28] : memref<4x96x128xbf16, #tpu.memory_space<vmem>>, vector<1x96x128xbf16>
    %31 = vector.shape_cast %30 : vector<1x96x128xbf16> to vector<96x128xbf16>
    %cst_29 = arith.constant dense<0.000000e+00> : vector<16x128xf32>
    %32 = tpu.matmul %29, %31, %cst_29 {dimension_numbers = #tpu.dot_dimension_numbers<[1], [0], [0], [1], [0, 0, 1, 1], [], []>} : vector<16x96xbf16>, vector<96x128xbf16>, vector<16x128xf32> -> vector<16x128xf32>
    %33 = arith.addf %25, %32 : vector<16x128xf32>
    %c0_30 = arith.constant 0 : index
    %c0_31 = arith.constant 0 : index
    %34 = vector.load %arg4[%c0_30, %c0_31] : memref<1x128xf32, #tpu.memory_space<vmem>>, vector<1x128xf32>
    %35 = vector.broadcast %34 : vector<1x128xf32> to vector<16x128xf32>
    %36 = arith.addf %33, %35 : vector<16x128xf32>
    %cst_32 = arith.constant 0.000000e+00 : f32
    %37 = vector.broadcast %cst_32 : f32 to vector<16x128xf32>
    %38 = arith.cmpf oge, %36, %37 : vector<16x128xf32>
    %cst_33 = arith.constant 2.000000e-01 : f32
    %39 = vector.broadcast %cst_33 : f32 to vector<16x128xf32>
    %40 = arith.mulf %39, %36 : vector<16x128xf32>
    %41 = arith.select %38, %36, %40 : vector<16x128xi1>, vector<16x128xf32>
    %42 = arith.truncf %41 : vector<16x128xf32> to vector<16x128xbf16>
    %c0_34 = arith.constant 0 : index
    %c0_35 = arith.constant 0 : index
    %c0_36 = arith.constant 0 : index
    %43 = vector.load %arg6[%c0_34, %c0_35, %c0_36] : memref<4x8x16xbf16, #tpu.memory_space<vmem>>, vector<1x8x16xbf16>
    %44 = vector.shape_cast %43 : vector<1x8x16xbf16> to vector<8x16xbf16>
    %cst_37 = arith.constant dense<0.000000e+00> : vector<8x128xf32>
    %45 = tpu.matmul %44, %42, %cst_37 {dimension_numbers = #tpu.dot_dimension_numbers<[1], [0], [0], [1], [0, 0, 1, 1], [], []>} : vector<8x16xbf16>, vector<16x128xbf16>, vector<8x128xf32> -> vector<8x128xf32>
    %46 = arith.truncf %45 : vector<8x128xf32> to vector<8x128xbf16>
    %c0_38 = arith.constant 0 : index
    %c0_39 = arith.constant 0 : index
    %c0_40 = arith.constant 0 : index
    %47 = vector.load %arg5[%c0_38, %c0_39, %c0_40] : memref<4x128x128xbf16, #tpu.memory_space<vmem>>, vector<1x128x128xbf16>
    %48 = vector.shape_cast %47 : vector<1x128x128xbf16> to vector<128x128xbf16>
    %cst_41 = arith.constant dense<0.000000e+00> : vector<8x128xf32>
    %49 = tpu.matmul %46, %48, %cst_41 {dimension_numbers = #tpu.dot_dimension_numbers<[1], [0], [0], [1], [0, 0, 1, 1], [], []>} : vector<8x128xbf16>, vector<128x128xbf16>, vector<8x128xf32> -> vector<8x128xf32>
    %c1_42 = arith.constant 1 : index
    %c0_43 = arith.constant 0 : index
    %c0_44 = arith.constant 0 : index
    %50 = vector.load %arg6[%c1_42, %c0_43, %c0_44] : memref<4x8x16xbf16, #tpu.memory_space<vmem>>, vector<1x8x16xbf16>
    %51 = vector.shape_cast %50 : vector<1x8x16xbf16> to vector<8x16xbf16>
    %cst_45 = arith.constant dense<0.000000e+00> : vector<8x128xf32>
    %52 = tpu.matmul %51, %42, %cst_45 {dimension_numbers = #tpu.dot_dimension_numbers<[1], [0], [0], [1], [0, 0, 1, 1], [], []>} : vector<8x16xbf16>, vector<16x128xbf16>, vector<8x128xf32> -> vector<8x128xf32>
    %53 = arith.truncf %52 : vector<8x128xf32> to vector<8x128xbf16>
    %c1_46 = arith.constant 1 : index
    %c0_47 = arith.constant 0 : index
    %c0_48 = arith.constant 0 : index
    %54 = vector.load %arg5[%c1_46, %c0_47, %c0_48] : memref<4x128x128xbf16, #tpu.memory_space<vmem>>, vector<1x128x128xbf16>
    %55 = vector.shape_cast %54 : vector<1x128x128xbf16> to vector<128x128xbf16>
    %cst_49 = arith.constant dense<0.000000e+00> : vector<8x128xf32>
    %56 = tpu.matmul %53, %55, %cst_49 {dimension_numbers = #tpu.dot_dimension_numbers<[1], [0], [0], [1], [0, 0, 1, 1], [], []>} : vector<8x128xbf16>, vector<128x128xbf16>, vector<8x128xf32> -> vector<8x128xf32>
    %57 = arith.addf %49, %56 : vector<8x128xf32>
    %c2_50 = arith.constant 2 : index
    %c0_51 = arith.constant 0 : index
    %c0_52 = arith.constant 0 : index
    %58 = vector.load %arg6[%c2_50, %c0_51, %c0_52] : memref<4x8x16xbf16, #tpu.memory_space<vmem>>, vector<1x8x16xbf16>
    %59 = vector.shape_cast %58 : vector<1x8x16xbf16> to vector<8x16xbf16>
    %cst_53 = arith.constant dense<0.000000e+00> : vector<8x128xf32>
    %60 = tpu.matmul %59, %42, %cst_53 {dimension_numbers = #tpu.dot_dimension_numbers<[1], [0], [0], [1], [0, 0, 1, 1], [], []>} : vector<8x16xbf16>, vector<16x128xbf16>, vector<8x128xf32> -> vector<8x128xf32>
    %61 = arith.truncf %60 : vector<8x128xf32> to vector<8x128xbf16>
    %c2_54 = arith.constant 2 : index
    %c0_55 = arith.constant 0 : index
    %c0_56 = arith.constant 0 : index
    %62 = vector.load %arg5[%c2_54, %c0_55, %c0_56] : memref<4x128x128xbf16, #tpu.memory_space<vmem>>, vector<1x128x128xbf16>
    %63 = vector.shape_cast %62 : vector<1x128x128xbf16> to vector<128x128xbf16>
    %cst_57 = arith.constant dense<0.000000e+00> : vector<8x128xf32>
    %64 = tpu.matmul %61, %63, %cst_57 {dimension_numbers = #tpu.dot_dimension_numbers<[1], [0], [0], [1], [0, 0, 1, 1], [], []>} : vector<8x128xbf16>, vector<128x128xbf16>, vector<8x128xf32> -> vector<8x128xf32>
    %65 = arith.addf %57, %64 : vector<8x128xf32>
    %c3_58 = arith.constant 3 : index
    %c0_59 = arith.constant 0 : index
    %c0_60 = arith.constant 0 : index
    %66 = vector.load %arg6[%c3_58, %c0_59, %c0_60] : memref<4x8x16xbf16, #tpu.memory_space<vmem>>, vector<1x8x16xbf16>
    %67 = vector.shape_cast %66 : vector<1x8x16xbf16> to vector<8x16xbf16>
    %cst_61 = arith.constant dense<0.000000e+00> : vector<8x128xf32>
    %68 = tpu.matmul %67, %42, %cst_61 {dimension_numbers = #tpu.dot_dimension_numbers<[1], [0], [0], [1], [0, 0, 1, 1], [], []>} : vector<8x16xbf16>, vector<16x128xbf16>, vector<8x128xf32> -> vector<8x128xf32>
    %69 = arith.truncf %68 : vector<8x128xf32> to vector<8x128xbf16>
    %c3_62 = arith.constant 3 : index
    %c0_63 = arith.constant 0 : index
    %c0_64 = arith.constant 0 : index
    %70 = vector.load %arg5[%c3_62, %c0_63, %c0_64] : memref<4x128x128xbf16, #tpu.memory_space<vmem>>, vector<1x128x128xbf16>
    %71 = vector.shape_cast %70 : vector<1x128x128xbf16> to vector<128x128xbf16>
    %cst_65 = arith.constant dense<0.000000e+00> : vector<8x128xf32>
    %72 = tpu.matmul %69, %71, %cst_65 {dimension_numbers = #tpu.dot_dimension_numbers<[1], [0], [0], [1], [0, 0, 1, 1], [], []>} : vector<8x128xbf16>, vector<128x128xbf16>, vector<8x128xf32> -> vector<8x128xf32>
    %73 = arith.addf %65, %72 : vector<8x128xf32>
    %c0_66 = arith.constant 0 : index
    %c0_67 = arith.constant 0 : index
    %74 = vector.load %arg7[%c0_66, %c0_67] : memref<1x128xf32, #tpu.memory_space<vmem>>, vector<1x128xf32>
    %75 = vector.broadcast %74 : vector<1x128xf32> to vector<8x128xf32>
    %76 = arith.addf %73, %75 : vector<8x128xf32>
    %cst_68 = arith.constant dense<0.000000e+00> : vector<128xf32>
    %77 = vector.multi_reduction <add>, %76, %cst_68 [0] : vector<8x128xf32> to vector<128xf32>
    %78 = vector.shape_cast %77 : vector<128xf32> to vector<1x128xf32>
    %c0_69 = arith.constant 0 : index
    %c0_70 = arith.constant 0 : index
    %79 = vector.load %arg8[%c0_69, %c0_70] : memref<128x128xf32, #tpu.memory_space<vmem>>, vector<128x128xf32>
    %cst_71 = arith.constant dense<0.000000e+00> : vector<1x128xf32>
    %80 = tpu.matmul %78, %79, %cst_71 {dimension_numbers = #tpu.dot_dimension_numbers<[1], [0], [0], [1], [0, 0, 1, 1], [], []>} : vector<1x128xf32>, vector<128x128xf32>, vector<1x128xf32> -> vector<1x128xf32>
    %81 = vector.broadcast %80 : vector<1x128xf32> to vector<8x128xf32>
    %82 = arith.subf %76, %81 : vector<8x128xf32>
    %83 = arith.mulf %82, %82 : vector<8x128xf32>
    %cst_72 = arith.constant dense<0.000000e+00> : vector<128xf32>
    %84 = vector.multi_reduction <add>, %83, %cst_72 [0] : vector<8x128xf32> to vector<128xf32>
    %85 = vector.shape_cast %84 : vector<128xf32> to vector<1x128xf32>
    %c0_73 = arith.constant 0 : index
    %c0_74 = arith.constant 0 : index
    %86 = vector.load %arg8[%c0_73, %c0_74] : memref<128x128xf32, #tpu.memory_space<vmem>>, vector<128x128xf32>
    %cst_75 = arith.constant dense<0.000000e+00> : vector<1x128xf32>
    %87 = tpu.matmul %85, %86, %cst_75 {dimension_numbers = #tpu.dot_dimension_numbers<[1], [0], [0], [1], [0, 0, 1, 1], [], []>} : vector<1x128xf32>, vector<128x128xf32>, vector<1x128xf32> -> vector<1x128xf32>
    %cst_76 = arith.constant 9.99999974E-6 : f32
    %88 = vector.broadcast %cst_76 : f32 to vector<1x128xf32>
    %89 = arith.addf %87, %88 : vector<1x128xf32>
    %90 = math.rsqrt %89 : vector<1x128xf32>
    %91 = vector.broadcast %90 : vector<1x128xf32> to vector<8x128xf32>
    %92 = arith.mulf %82, %91 : vector<8x128xf32>
    %cst_77 = arith.constant 0.000000e+00 : f32
    %93 = vector.broadcast %cst_77 : f32 to vector<8x128xf32>
    %94 = arith.cmpf oge, %92, %93 : vector<8x128xf32>
    %cst_78 = arith.constant 2.000000e-01 : f32
    %95 = vector.broadcast %cst_78 : f32 to vector<8x128xf32>
    %96 = arith.mulf %95, %92 : vector<8x128xf32>
    %97 = arith.select %94, %92, %96 : vector<8x128xi1>, vector<8x128xf32>
    %98 = arith.truncf %97 : vector<8x128xf32> to vector<8x128xbf16>
    %c0_79 = arith.constant 0 : index
    %c0_80 = arith.constant 0 : index
    %c0_81 = arith.constant 0 : index
    %99 = vector.load %arg10[%c0_79, %c0_80, %c0_81] : memref<4x4x8xbf16, #tpu.memory_space<vmem>>, vector<1x4x8xbf16>
    %100 = vector.shape_cast %99 : vector<1x4x8xbf16> to vector<4x8xbf16>
    %cst_82 = arith.constant dense<0.000000e+00> : vector<4x128xf32>
    %101 = tpu.matmul %100, %98, %cst_82 {dimension_numbers = #tpu.dot_dimension_numbers<[1], [0], [0], [1], [0, 0, 1, 1], [], []>} : vector<4x8xbf16>, vector<8x128xbf16>, vector<4x128xf32> -> vector<4x128xf32>
    %102 = arith.truncf %101 : vector<4x128xf32> to vector<4x128xbf16>
    %c0_83 = arith.constant 0 : index
    %c0_84 = arith.constant 0 : index
    %c0_85 = arith.constant 0 : index
    %103 = vector.load %arg9[%c0_83, %c0_84, %c0_85] : memref<4x128x128xbf16, #tpu.memory_space<vmem>>, vector<1x128x128xbf16>
    %104 = vector.shape_cast %103 : vector<1x128x128xbf16> to vector<128x128xbf16>
    %cst_86 = arith.constant dense<0.000000e+00> : vector<4x128xf32>
    %105 = tpu.matmul %102, %104, %cst_86 {dimension_numbers = #tpu.dot_dimension_numbers<[1], [0], [0], [1], [0, 0, 1, 1], [], []>} : vector<4x128xbf16>, vector<128x128xbf16>, vector<4x128xf32> -> vector<4x128xf32>
    %c1_87 = arith.constant 1 : index
    %c0_88 = arith.constant 0 : index
    %c0_89 = arith.constant 0 : index
    %106 = vector.load %arg10[%c1_87, %c0_88, %c0_89] : memref<4x4x8xbf16, #tpu.memory_space<vmem>>, vector<1x4x8xbf16>
    %107 = vector.shape_cast %106 : vector<1x4x8xbf16> to vector<4x8xbf16>
    %cst_90 = arith.constant dense<0.000000e+00> : vector<4x128xf32>
    %108 = tpu.matmul %107, %98, %cst_90 {dimension_numbers = #tpu.dot_dimension_numbers<[1], [0], [0], [1], [0, 0, 1, 1], [], []>} : vector<4x8xbf16>, vector<8x128xbf16>, vector<4x128xf32> -> vector<4x128xf32>
    %109 = arith.truncf %108 : vector<4x128xf32> to vector<4x128xbf16>
    %c1_91 = arith.constant 1 : index
    %c0_92 = arith.constant 0 : index
    %c0_93 = arith.constant 0 : index
    %110 = vector.load %arg9[%c1_91, %c0_92, %c0_93] : memref<4x128x128xbf16, #tpu.memory_space<vmem>>, vector<1x128x128xbf16>
    %111 = vector.shape_cast %110 : vector<1x128x128xbf16> to vector<128x128xbf16>
    %cst_94 = arith.constant dense<0.000000e+00> : vector<4x128xf32>
    %112 = tpu.matmul %109, %111, %cst_94 {dimension_numbers = #tpu.dot_dimension_numbers<[1], [0], [0], [1], [0, 0, 1, 1], [], []>} : vector<4x128xbf16>, vector<128x128xbf16>, vector<4x128xf32> -> vector<4x128xf32>
    %113 = arith.addf %105, %112 : vector<4x128xf32>
    %c2_95 = arith.constant 2 : index
    %c0_96 = arith.constant 0 : index
    %c0_97 = arith.constant 0 : index
    %114 = vector.load %arg10[%c2_95, %c0_96, %c0_97] : memref<4x4x8xbf16, #tpu.memory_space<vmem>>, vector<1x4x8xbf16>
    %115 = vector.shape_cast %114 : vector<1x4x8xbf16> to vector<4x8xbf16>
    %cst_98 = arith.constant dense<0.000000e+00> : vector<4x128xf32>
    %116 = tpu.matmul %115, %98, %cst_98 {dimension_numbers = #tpu.dot_dimension_numbers<[1], [0], [0], [1], [0, 0, 1, 1], [], []>} : vector<4x8xbf16>, vector<8x128xbf16>, vector<4x128xf32> -> vector<4x128xf32>
    %117 = arith.truncf %116 : vector<4x128xf32> to vector<4x128xbf16>
    %c2_99 = arith.constant 2 : index
    %c0_100 = arith.constant 0 : index
    %c0_101 = arith.constant 0 : index
    %118 = vector.load %arg9[%c2_99, %c0_100, %c0_101] : memref<4x128x128xbf16, #tpu.memory_space<vmem>>, vector<1x128x128xbf16>
    %119 = vector.shape_cast %118 : vector<1x128x128xbf16> to vector<128x128xbf16>
    %cst_102 = arith.constant dense<0.000000e+00> : vector<4x128xf32>
    %120 = tpu.matmul %117, %119, %cst_102 {dimension_numbers = #tpu.dot_dimension_numbers<[1], [0], [0], [1], [0, 0, 1, 1], [], []>} : vector<4x128xbf16>, vector<128x128xbf16>, vector<4x128xf32> -> vector<4x128xf32>
    %121 = arith.addf %113, %120 : vector<4x128xf32>
    %c3_103 = arith.constant 3 : index
    %c0_104 = arith.constant 0 : index
    %c0_105 = arith.constant 0 : index
    %122 = vector.load %arg10[%c3_103, %c0_104, %c0_105] : memref<4x4x8xbf16, #tpu.memory_space<vmem>>, vector<1x4x8xbf16>
    %123 = vector.shape_cast %122 : vector<1x4x8xbf16> to vector<4x8xbf16>
    %cst_106 = arith.constant dense<0.000000e+00> : vector<4x128xf32>
    %124 = tpu.matmul %123, %98, %cst_106 {dimension_numbers = #tpu.dot_dimension_numbers<[1], [0], [0], [1], [0, 0, 1, 1], [], []>} : vector<4x8xbf16>, vector<8x128xbf16>, vector<4x128xf32> -> vector<4x128xf32>
    %125 = arith.truncf %124 : vector<4x128xf32> to vector<4x128xbf16>
    %c3_107 = arith.constant 3 : index
    %c0_108 = arith.constant 0 : index
    %c0_109 = arith.constant 0 : index
    %126 = vector.load %arg9[%c3_107, %c0_108, %c0_109] : memref<4x128x128xbf16, #tpu.memory_space<vmem>>, vector<1x128x128xbf16>
    %127 = vector.shape_cast %126 : vector<1x128x128xbf16> to vector<128x128xbf16>
    %cst_110 = arith.constant dense<0.000000e+00> : vector<4x128xf32>
    %128 = tpu.matmul %125, %127, %cst_110 {dimension_numbers = #tpu.dot_dimension_numbers<[1], [0], [0], [1], [0, 0, 1, 1], [], []>} : vector<4x128xbf16>, vector<128x128xbf16>, vector<4x128xf32> -> vector<4x128xf32>
    %129 = arith.addf %121, %128 : vector<4x128xf32>
    %c0_111 = arith.constant 0 : index
    %c0_112 = arith.constant 0 : index
    %130 = vector.load %arg11[%c0_111, %c0_112] : memref<1x128xf32, #tpu.memory_space<vmem>>, vector<1x128xf32>
    %131 = vector.broadcast %130 : vector<1x128xf32> to vector<4x128xf32>
    %132 = arith.addf %129, %131 : vector<4x128xf32>
    %cst_113 = arith.constant dense<0.000000e+00> : vector<128xf32>
    %133 = vector.multi_reduction <add>, %132, %cst_113 [0] : vector<4x128xf32> to vector<128xf32>
    %134 = vector.shape_cast %133 : vector<128xf32> to vector<1x128xf32>
    %c0_114 = arith.constant 0 : index
    %c0_115 = arith.constant 0 : index
    %135 = vector.load %arg12[%c0_114, %c0_115] : memref<128x128xf32, #tpu.memory_space<vmem>>, vector<128x128xf32>
    %cst_116 = arith.constant dense<0.000000e+00> : vector<1x128xf32>
    %136 = tpu.matmul %134, %135, %cst_116 {dimension_numbers = #tpu.dot_dimension_numbers<[1], [0], [0], [1], [0, 0, 1, 1], [], []>} : vector<1x128xf32>, vector<128x128xf32>, vector<1x128xf32> -> vector<1x128xf32>
    %137 = vector.broadcast %136 : vector<1x128xf32> to vector<4x128xf32>
    %138 = arith.subf %132, %137 : vector<4x128xf32>
    %139 = arith.mulf %138, %138 : vector<4x128xf32>
    %cst_117 = arith.constant dense<0.000000e+00> : vector<128xf32>
    %140 = vector.multi_reduction <add>, %139, %cst_117 [0] : vector<4x128xf32> to vector<128xf32>
    %141 = vector.shape_cast %140 : vector<128xf32> to vector<1x128xf32>
    %c0_118 = arith.constant 0 : index
    %c0_119 = arith.constant 0 : index
    %142 = vector.load %arg12[%c0_118, %c0_119] : memref<128x128xf32, #tpu.memory_space<vmem>>, vector<128x128xf32>
    %cst_120 = arith.constant dense<0.000000e+00> : vector<1x128xf32>
    %143 = tpu.matmul %141, %142, %cst_120 {dimension_numbers = #tpu.dot_dimension_numbers<[1], [0], [0], [1], [0, 0, 1, 1], [], []>} : vector<1x128xf32>, vector<128x128xf32>, vector<1x128xf32> -> vector<1x128xf32>
    %cst_121 = arith.constant 9.99999974E-6 : f32
    %144 = vector.broadcast %cst_121 : f32 to vector<1x128xf32>
    %145 = arith.addf %143, %144 : vector<1x128xf32>
    %146 = math.rsqrt %145 : vector<1x128xf32>
    %147 = vector.broadcast %146 : vector<1x128xf32> to vector<4x128xf32>
    %148 = arith.mulf %138, %147 : vector<4x128xf32>
    %cst_122 = arith.constant 0.000000e+00 : f32
    %149 = vector.broadcast %cst_122 : f32 to vector<4x128xf32>
    %150 = arith.cmpf oge, %148, %149 : vector<4x128xf32>
    %cst_123 = arith.constant 2.000000e-01 : f32
    %151 = vector.broadcast %cst_123 : f32 to vector<4x128xf32>
    %152 = arith.mulf %151, %148 : vector<4x128xf32>
    %153 = arith.select %150, %148, %152 : vector<4x128xi1>, vector<4x128xf32>
    %154 = arith.truncf %153 : vector<4x128xf32> to vector<4x128xbf16>
    %c0_124 = arith.constant 0 : index
    %c0_125 = arith.constant 0 : index
    %c0_126 = arith.constant 0 : index
    %155 = vector.load %arg14[%c0_124, %c0_125, %c0_126] : memref<4x2x4xbf16, #tpu.memory_space<vmem>>, vector<1x2x4xbf16>
    %156 = vector.shape_cast %155 : vector<1x2x4xbf16> to vector<2x4xbf16>
    %cst_127 = arith.constant dense<0.000000e+00> : vector<2x128xf32>
    %157 = tpu.matmul %156, %154, %cst_127 {dimension_numbers = #tpu.dot_dimension_numbers<[1], [0], [0], [1], [0, 0, 1, 1], [], []>} : vector<2x4xbf16>, vector<4x128xbf16>, vector<2x128xf32> -> vector<2x128xf32>
    %158 = arith.truncf %157 : vector<2x128xf32> to vector<2x128xbf16>
    %c0_128 = arith.constant 0 : index
    %c0_129 = arith.constant 0 : index
    %c0_130 = arith.constant 0 : index
    %159 = vector.load %arg13[%c0_128, %c0_129, %c0_130] : memref<4x128x128xbf16, #tpu.memory_space<vmem>>, vector<1x128x128xbf16>
    %160 = vector.shape_cast %159 : vector<1x128x128xbf16> to vector<128x128xbf16>
    %cst_131 = arith.constant dense<0.000000e+00> : vector<2x128xf32>
    %161 = tpu.matmul %158, %160, %cst_131 {dimension_numbers = #tpu.dot_dimension_numbers<[1], [0], [0], [1], [0, 0, 1, 1], [], []>} : vector<2x128xbf16>, vector<128x128xbf16>, vector<2x128xf32> -> vector<2x128xf32>
    %c1_132 = arith.constant 1 : index
    %c0_133 = arith.constant 0 : index
    %c0_134 = arith.constant 0 : index
    %162 = vector.load %arg14[%c1_132, %c0_133, %c0_134] : memref<4x2x4xbf16, #tpu.memory_space<vmem>>, vector<1x2x4xbf16>
    %163 = vector.shape_cast %162 : vector<1x2x4xbf16> to vector<2x4xbf16>
    %cst_135 = arith.constant dense<0.000000e+00> : vector<2x128xf32>
    %164 = tpu.matmul %163, %154, %cst_135 {dimension_numbers = #tpu.dot_dimension_numbers<[1], [0], [0], [1], [0, 0, 1, 1], [], []>} : vector<2x4xbf16>, vector<4x128xbf16>, vector<2x128xf32> -> vector<2x128xf32>
    %165 = arith.truncf %164 : vector<2x128xf32> to vector<2x128xbf16>
    %c1_136 = arith.constant 1 : index
    %c0_137 = arith.constant 0 : index
    %c0_138 = arith.constant 0 : index
    %166 = vector.load %arg13[%c1_136, %c0_137, %c0_138] : memref<4x128x128xbf16, #tpu.memory_space<vmem>>, vector<1x128x128xbf16>
    %167 = vector.shape_cast %166 : vector<1x128x128xbf16> to vector<128x128xbf16>
    %cst_139 = arith.constant dense<0.000000e+00> : vector<2x128xf32>
    %168 = tpu.matmul %165, %167, %cst_139 {dimension_numbers = #tpu.dot_dimension_numbers<[1], [0], [0], [1], [0, 0, 1, 1], [], []>} : vector<2x128xbf16>, vector<128x128xbf16>, vector<2x128xf32> -> vector<2x128xf32>
    %169 = arith.addf %161, %168 : vector<2x128xf32>
    %c2_140 = arith.constant 2 : index
    %c0_141 = arith.constant 0 : index
    %c0_142 = arith.constant 0 : index
    %170 = vector.load %arg14[%c2_140, %c0_141, %c0_142] : memref<4x2x4xbf16, #tpu.memory_space<vmem>>, vector<1x2x4xbf16>
    %171 = vector.shape_cast %170 : vector<1x2x4xbf16> to vector<2x4xbf16>
    %cst_143 = arith.constant dense<0.000000e+00> : vector<2x128xf32>
    %172 = tpu.matmul %171, %154, %cst_143 {dimension_numbers = #tpu.dot_dimension_numbers<[1], [0], [0], [1], [0, 0, 1, 1], [], []>} : vector<2x4xbf16>, vector<4x128xbf16>, vector<2x128xf32> -> vector<2x128xf32>
    %173 = arith.truncf %172 : vector<2x128xf32> to vector<2x128xbf16>
    %c2_144 = arith.constant 2 : index
    %c0_145 = arith.constant 0 : index
    %c0_146 = arith.constant 0 : index
    %174 = vector.load %arg13[%c2_144, %c0_145, %c0_146] : memref<4x128x128xbf16, #tpu.memory_space<vmem>>, vector<1x128x128xbf16>
    %175 = vector.shape_cast %174 : vector<1x128x128xbf16> to vector<128x128xbf16>
    %cst_147 = arith.constant dense<0.000000e+00> : vector<2x128xf32>
    %176 = tpu.matmul %173, %175, %cst_147 {dimension_numbers = #tpu.dot_dimension_numbers<[1], [0], [0], [1], [0, 0, 1, 1], [], []>} : vector<2x128xbf16>, vector<128x128xbf16>, vector<2x128xf32> -> vector<2x128xf32>
    %177 = arith.addf %169, %176 : vector<2x128xf32>
    %c3_148 = arith.constant 3 : index
    %c0_149 = arith.constant 0 : index
    %c0_150 = arith.constant 0 : index
    %178 = vector.load %arg14[%c3_148, %c0_149, %c0_150] : memref<4x2x4xbf16, #tpu.memory_space<vmem>>, vector<1x2x4xbf16>
    %179 = vector.shape_cast %178 : vector<1x2x4xbf16> to vector<2x4xbf16>
    %cst_151 = arith.constant dense<0.000000e+00> : vector<2x128xf32>
    %180 = tpu.matmul %179, %154, %cst_151 {dimension_numbers = #tpu.dot_dimension_numbers<[1], [0], [0], [1], [0, 0, 1, 1], [], []>} : vector<2x4xbf16>, vector<4x128xbf16>, vector<2x128xf32> -> vector<2x128xf32>
    %181 = arith.truncf %180 : vector<2x128xf32> to vector<2x128xbf16>
    %c3_152 = arith.constant 3 : index
    %c0_153 = arith.constant 0 : index
    %c0_154 = arith.constant 0 : index
    %182 = vector.load %arg13[%c3_152, %c0_153, %c0_154] : memref<4x128x128xbf16, #tpu.memory_space<vmem>>, vector<1x128x128xbf16>
    %183 = vector.shape_cast %182 : vector<1x128x128xbf16> to vector<128x128xbf16>
    %cst_155 = arith.constant dense<0.000000e+00> : vector<2x128xf32>
    %184 = tpu.matmul %181, %183, %cst_155 {dimension_numbers = #tpu.dot_dimension_numbers<[1], [0], [0], [1], [0, 0, 1, 1], [], []>} : vector<2x128xbf16>, vector<128x128xbf16>, vector<2x128xf32> -> vector<2x128xf32>
    %185 = arith.addf %177, %184 : vector<2x128xf32>
    %c0_156 = arith.constant 0 : index
    %c0_157 = arith.constant 0 : index
    %186 = vector.load %arg15[%c0_156, %c0_157] : memref<1x128xf32, #tpu.memory_space<vmem>>, vector<1x128xf32>
    %187 = vector.broadcast %186 : vector<1x128xf32> to vector<2x128xf32>
    %188 = arith.addf %185, %187 : vector<2x128xf32>
    %cst_158 = arith.constant dense<0.000000e+00> : vector<128xf32>
    %189 = vector.multi_reduction <add>, %188, %cst_158 [0] : vector<2x128xf32> to vector<128xf32>
    %190 = vector.shape_cast %189 : vector<128xf32> to vector<1x128xf32>
    %c0_159 = arith.constant 0 : index
    %c0_160 = arith.constant 0 : index
    %191 = vector.load %arg16[%c0_159, %c0_160] : memref<128x128xf32, #tpu.memory_space<vmem>>, vector<128x128xf32>
    %cst_161 = arith.constant dense<0.000000e+00> : vector<1x128xf32>
    %192 = tpu.matmul %190, %191, %cst_161 {dimension_numbers = #tpu.dot_dimension_numbers<[1], [0], [0], [1], [0, 0, 1, 1], [], []>} : vector<1x128xf32>, vector<128x128xf32>, vector<1x128xf32> -> vector<1x128xf32>
    %193 = vector.broadcast %192 : vector<1x128xf32> to vector<2x128xf32>
    %194 = arith.subf %188, %193 : vector<2x128xf32>
    %195 = arith.mulf %194, %194 : vector<2x128xf32>
    %cst_162 = arith.constant dense<0.000000e+00> : vector<128xf32>
    %196 = vector.multi_reduction <add>, %195, %cst_162 [0] : vector<2x128xf32> to vector<128xf32>
    %197 = vector.shape_cast %196 : vector<128xf32> to vector<1x128xf32>
    %c0_163 = arith.constant 0 : index
    %c0_164 = arith.constant 0 : index
    %198 = vector.load %arg16[%c0_163, %c0_164] : memref<128x128xf32, #tpu.memory_space<vmem>>, vector<128x128xf32>
    %cst_165 = arith.constant dense<0.000000e+00> : vector<1x128xf32>
    %199 = tpu.matmul %197, %198, %cst_165 {dimension_numbers = #tpu.dot_dimension_numbers<[1], [0], [0], [1], [0, 0, 1, 1], [], []>} : vector<1x128xf32>, vector<128x128xf32>, vector<1x128xf32> -> vector<1x128xf32>
    %cst_166 = arith.constant 9.99999974E-6 : f32
    %200 = vector.broadcast %cst_166 : f32 to vector<1x128xf32>
    %201 = arith.addf %199, %200 : vector<1x128xf32>
    %202 = math.rsqrt %201 : vector<1x128xf32>
    %203 = vector.broadcast %202 : vector<1x128xf32> to vector<2x128xf32>
    %204 = arith.mulf %194, %203 : vector<2x128xf32>
    %cst_167 = arith.constant 0.000000e+00 : f32
    %205 = vector.broadcast %cst_167 : f32 to vector<2x128xf32>
    %206 = arith.cmpf oge, %204, %205 : vector<2x128xf32>
    %cst_168 = arith.constant 2.000000e-01 : f32
    %207 = vector.broadcast %cst_168 : f32 to vector<2x128xf32>
    %208 = arith.mulf %207, %204 : vector<2x128xf32>
    %209 = arith.select %206, %204, %208 : vector<2x128xi1>, vector<2x128xf32>
    %210 = arith.truncf %209 : vector<2x128xf32> to vector<2x128xbf16>
    %c0_169 = arith.constant 0 : index
    %c0_170 = arith.constant 0 : index
    %c0_171 = arith.constant 0 : index
    %211 = vector.load %arg18[%c0_169, %c0_170, %c0_171] : memref<4x1x2xbf16, #tpu.memory_space<vmem>>, vector<1x1x2xbf16>
    %212 = vector.shape_cast %211 : vector<1x1x2xbf16> to vector<1x2xbf16>
    %cst_172 = arith.constant dense<0.000000e+00> : vector<1x128xf32>
    %213 = tpu.matmul %212, %210, %cst_172 {dimension_numbers = #tpu.dot_dimension_numbers<[1], [0], [0], [1], [0, 0, 1, 1], [], []>} : vector<1x2xbf16>, vector<2x128xbf16>, vector<1x128xf32> -> vector<1x128xf32>
    %214 = arith.truncf %213 : vector<1x128xf32> to vector<1x128xbf16>
    %c0_173 = arith.constant 0 : index
    %c0_174 = arith.constant 0 : index
    %c0_175 = arith.constant 0 : index
    %215 = vector.load %arg17[%c0_173, %c0_174, %c0_175] : memref<4x128x1xbf16, #tpu.memory_space<vmem>>, vector<1x128x1xbf16>
    %216 = vector.shape_cast %215 : vector<1x128x1xbf16> to vector<128x1xbf16>
    %cst_176 = arith.constant dense<0.000000e+00> : vector<1x1xf32>
    %217 = tpu.matmul %214, %216, %cst_176 {dimension_numbers = #tpu.dot_dimension_numbers<[1], [0], [0], [1], [0, 0, 1, 1], [], []>} : vector<1x128xbf16>, vector<128x1xbf16>, vector<1x1xf32> -> vector<1x1xf32>
    %c1_177 = arith.constant 1 : index
    %c0_178 = arith.constant 0 : index
    %c0_179 = arith.constant 0 : index
    %218 = vector.load %arg18[%c1_177, %c0_178, %c0_179] : memref<4x1x2xbf16, #tpu.memory_space<vmem>>, vector<1x1x2xbf16>
    %219 = vector.shape_cast %218 : vector<1x1x2xbf16> to vector<1x2xbf16>
    %cst_180 = arith.constant dense<0.000000e+00> : vector<1x128xf32>
    %220 = tpu.matmul %219, %210, %cst_180 {dimension_numbers = #tpu.dot_dimension_numbers<[1], [0], [0], [1], [0, 0, 1, 1], [], []>} : vector<1x2xbf16>, vector<2x128xbf16>, vector<1x128xf32> -> vector<1x128xf32>
    %221 = arith.truncf %220 : vector<1x128xf32> to vector<1x128xbf16>
    %c1_181 = arith.constant 1 : index
    %c0_182 = arith.constant 0 : index
    %c0_183 = arith.constant 0 : index
    %222 = vector.load %arg17[%c1_181, %c0_182, %c0_183] : memref<4x128x1xbf16, #tpu.memory_space<vmem>>, vector<1x128x1xbf16>
    %223 = vector.shape_cast %222 : vector<1x128x1xbf16> to vector<128x1xbf16>
    %cst_184 = arith.constant dense<0.000000e+00> : vector<1x1xf32>
    %224 = tpu.matmul %221, %223, %cst_184 {dimension_numbers = #tpu.dot_dimension_numbers<[1], [0], [0], [1], [0, 0, 1, 1], [], []>} : vector<1x128xbf16>, vector<128x1xbf16>, vector<1x1xf32> -> vector<1x1xf32>
    %225 = arith.addf %217, %224 : vector<1x1xf32>
    %c2_185 = arith.constant 2 : index
    %c0_186 = arith.constant 0 : index
    %c0_187 = arith.constant 0 : index
    %226 = vector.load %arg18[%c2_185, %c0_186, %c0_187] : memref<4x1x2xbf16, #tpu.memory_space<vmem>>, vector<1x1x2xbf16>
    %227 = vector.shape_cast %226 : vector<1x1x2xbf16> to vector<1x2xbf16>
    %cst_188 = arith.constant dense<0.000000e+00> : vector<1x128xf32>
    %228 = tpu.matmul %227, %210, %cst_188 {dimension_numbers = #tpu.dot_dimension_numbers<[1], [0], [0], [1], [0, 0, 1, 1], [], []>} : vector<1x2xbf16>, vector<2x128xbf16>, vector<1x128xf32> -> vector<1x128xf32>
    %229 = arith.truncf %228 : vector<1x128xf32> to vector<1x128xbf16>
    %c2_189 = arith.constant 2 : index
    %c0_190 = arith.constant 0 : index
    %c0_191 = arith.constant 0 : index
    %230 = vector.load %arg17[%c2_189, %c0_190, %c0_191] : memref<4x128x1xbf16, #tpu.memory_space<vmem>>, vector<1x128x1xbf16>
    %231 = vector.shape_cast %230 : vector<1x128x1xbf16> to vector<128x1xbf16>
    %cst_192 = arith.constant dense<0.000000e+00> : vector<1x1xf32>
    %232 = tpu.matmul %229, %231, %cst_192 {dimension_numbers = #tpu.dot_dimension_numbers<[1], [0], [0], [1], [0, 0, 1, 1], [], []>} : vector<1x128xbf16>, vector<128x1xbf16>, vector<1x1xf32> -> vector<1x1xf32>
    %233 = arith.addf %225, %232 : vector<1x1xf32>
    %c3_193 = arith.constant 3 : index
    %c0_194 = arith.constant 0 : index
    %c0_195 = arith.constant 0 : index
    %234 = vector.load %arg18[%c3_193, %c0_194, %c0_195] : memref<4x1x2xbf16, #tpu.memory_space<vmem>>, vector<1x1x2xbf16>
    %235 = vector.shape_cast %234 : vector<1x1x2xbf16> to vector<1x2xbf16>
    %cst_196 = arith.constant dense<0.000000e+00> : vector<1x128xf32>
    %236 = tpu.matmul %235, %210, %cst_196 {dimension_numbers = #tpu.dot_dimension_numbers<[1], [0], [0], [1], [0, 0, 1, 1], [], []>} : vector<1x2xbf16>, vector<2x128xbf16>, vector<1x128xf32> -> vector<1x128xf32>
    %237 = arith.truncf %236 : vector<1x128xf32> to vector<1x128xbf16>
    %c3_197 = arith.constant 3 : index
    %c0_198 = arith.constant 0 : index
    %c0_199 = arith.constant 0 : index
    %238 = vector.load %arg17[%c3_197, %c0_198, %c0_199] : memref<4x128x1xbf16, #tpu.memory_space<vmem>>, vector<1x128x1xbf16>
    %239 = vector.shape_cast %238 : vector<1x128x1xbf16> to vector<128x1xbf16>
    %cst_200 = arith.constant dense<0.000000e+00> : vector<1x1xf32>
    %240 = tpu.matmul %237, %239, %cst_200 {dimension_numbers = #tpu.dot_dimension_numbers<[1], [0], [0], [1], [0, 0, 1, 1], [], []>} : vector<1x128xbf16>, vector<128x1xbf16>, vector<1x1xf32> -> vector<1x1xf32>
    %241 = arith.addf %233, %240 : vector<1x1xf32>
    %c0_201 = arith.constant 0 : index
    %c0_202 = arith.constant 0 : index
    %242 = vector.load %arg19[%c0_201, %c0_202] : memref<1x1xf32, #tpu.memory_space<vmem>>, vector<1x1xf32>
    %243 = arith.addf %241, %242 : vector<1x1xf32>
    %244 = arith.negf %243 : vector<1x1xf32>
    %245 = math.exp %244 : vector<1x1xf32>
    %cst_203 = arith.constant 1.000000e+00 : f32
    %246 = vector.broadcast %cst_203 : f32 to vector<1x1xf32>
    %247 = arith.addf %246, %245 : vector<1x1xf32>
    %248 = arith.divf %246, %247 : vector<1x1xf32>
    %c0_204 = arith.constant 0 : index
    %c0_205 = arith.constant 0 : index
    %c0_206 = arith.constant 0 : index
    %249 = vector.load %arg20[%c0_204, %c0_205, %c0_206] : memref<1x1x1xf32, #tpu.memory_space<vmem>>, vector<1x1x1xf32>
    %250 = vector.shape_cast %249 : vector<1x1x1xf32> to vector<1x1xf32>
    %251 = vector.shape_cast %248 : vector<1x1xf32> to vector<1x1x1xf32>
    tpu.vector_store %arg20[%c0_204, %c0_205, %c0_206], %251 {strides = array<i32>} : memref<1x1x1xf32, #tpu.memory_space<vmem>>, vector<1x1x1xf32>,
    return
  }
  func.func @transform_0(%arg0: i32) -> (i32, i32, i32) {
    %c0_i32 = arith.constant 0 : i32
    %c0_i32_0 = arith.constant 0 : i32
    %c0_i32_1 = arith.constant 0 : i32
    return %arg0, %c0_i32, %c0_i32_0 : i32, i32, i32
  }
  func.func @transform_1(%arg0: i32) -> (i32, i32, i32) {
    %c0_i32 = arith.constant 0 : i32
    %c0_i32_0 = arith.constant 0 : i32
    %c0_i32_1 = arith.constant 0 : i32
    %c0_i32_2 = arith.constant 0 : i32
    return %c0_i32, %c0_i32_0, %c0_i32_1 : i32, i32, i32
  }
  func.func @transform_2(%arg0: i32) -> (i32, i32, i32) {
    %c0_i32 = arith.constant 0 : i32
    %c0_i32_0 = arith.constant 0 : i32
    %c0_i32_1 = arith.constant 0 : i32
    %c0_i32_2 = arith.constant 0 : i32
    return %c0_i32, %c0_i32_0, %c0_i32_1 : i32, i32, i32
  }
  func.func @transform_3(%arg0: i32) -> (i32, i32) {
    %c0_i32 = arith.constant 0 : i32
    %c0_i32_0 = arith.constant 0 : i32
    %c0_i32_1 = arith.constant 0 : i32
    return %c0_i32, %c0_i32_0 : i32, i32
  }
  func.func @transform_4(%arg0: i32) -> (i32, i32, i32) {
    %c0_i32 = arith.constant 0 : i32
    %c0_i32_0 = arith.constant 0 : i32
    %c0_i32_1 = arith.constant 0 : i32
    %c0_i32_2 = arith.constant 0 : i32
    return %c0_i32, %c0_i32_0, %c0_i32_1 : i32, i32, i32
  }
  func.func @transform_5(%arg0: i32) -> (i32, i32, i32) {
    %c0_i32 = arith.constant 0 : i32
    %c0_i32_0 = arith.constant 0 : i32
    %c0_i32_1 = arith.constant 0 : i32
    %c0_i32_2 = arith.constant 0 : i32
    return %c0_i32, %c0_i32_0, %c0_i32_1 : i32, i32, i32
  }
  func.func @transform_6(%arg0: i32) -> (i32, i32) {
    %c0_i32 = arith.constant 0 : i32
    %c0_i32_0 = arith.constant 0 : i32
    %c0_i32_1 = arith.constant 0 : i32
    return %c0_i32, %c0_i32_0 : i32, i32
  }
  func.func @transform_7(%arg0: i32) -> (i32, i32) {
    %c0_i32 = arith.constant 0 : i32
    %c0_i32_0 = arith.constant 0 : i32
    %c0_i32_1 = arith.constant 0 : i32
    return %c0_i32, %c0_i32_0 : i32, i32
  }
  func.func @transform_8(%arg0: i32) -> (i32, i32, i32) {
    %c0_i32 = arith.constant 0 : i32
    %c0_i32_0 = arith.constant 0 : i32
    %c0_i32_1 = arith.constant 0 : i32
    %c0_i32_2 = arith.constant 0 : i32
    return %c0_i32, %c0_i32_0, %c0_i32_1 : i32, i32, i32
  }
  func.func @transform_9(%arg0: i32) -> (i32, i32, i32) {
    %c0_i32 = arith.constant 0 : i32
    %c0_i32_0 = arith.constant 0 : i32
    %c0_i32_1 = arith.constant 0 : i32
    %c0_i32_2 = arith.constant 0 : i32
    return %c0_i32, %c0_i32_0, %c0_i32_1 : i32, i32, i32
  }
  func.func @transform_10(%arg0: i32) -> (i32, i32) {
    %c0_i32 = arith.constant 0 : i32
    %c0_i32_0 = arith.constant 0 : i32
    %c0_i32_1 = arith.constant 0 : i32
    return %c0_i32, %c0_i32_0 : i32, i32
  }
  func.func @transform_11(%arg0: i32) -> (i32, i32) {
    %c0_i32 = arith.constant 0 : i32
    %c0_i32_0 = arith.constant 0 : i32
    %c0_i32_1 = arith.constant 0 : i32
    return %c0_i32, %c0_i32_0 : i32, i32
  }
  func.func @transform_12(%arg0: i32) -> (i32, i32, i32) {
    %c0_i32 = arith.constant 0 : i32
    %c0_i32_0 = arith.constant 0 : i32
    %c0_i32_1 = arith.constant 0 : i32
    %c0_i32_2 = arith.constant 0 : i32
    return %c0_i32, %c0_i32_0, %c0_i32_1 : i32, i32, i32
  }
  func.func @transform_13(%arg0: i32) -> (i32, i32, i32) {
    %c0_i32 = arith.constant 0 : i32
    %c0_i32_0 = arith.constant 0 : i32
    %c0_i32_1 = arith.constant 0 : i32
    %c0_i32_2 = arith.constant 0 : i32
    return %c0_i32, %c0_i32_0, %c0_i32_1 : i32, i32, i32
  }
  func.func @transform_14(%arg0: i32) -> (i32, i32) {
    %c0_i32 = arith.constant 0 : i32
    %c0_i32_0 = arith.constant 0 : i32
    %c0_i32_1 = arith.constant 0 : i32
    return %c0_i32, %c0_i32_0 : i32, i32
  }
  func.func @transform_15(%arg0: i32) -> (i32, i32) {
    %c0_i32 = arith.constant 0 : i32
    %c0_i32_0 = arith.constant 0 : i32
    %c0_i32_1 = arith.constant 0 : i32
    return %c0_i32, %c0_i32_0 : i32, i32
  }
  func.func @transform_16(%arg0: i32) -> (i32, i32, i32) {
    %c0_i32 = arith.constant 0 : i32
    %c0_i32_0 = arith.constant 0 : i32
    %c0_i32_1 = arith.constant 0 : i32
    %c0_i32_2 = arith.constant 0 : i32
    return %c0_i32, %c0_i32_0, %c0_i32_1 : i32, i32, i32
  }
  func.func @transform_17(%arg0: i32) -> (i32, i32, i32) {
    %c0_i32 = arith.constant 0 : i32
    %c0_i32_0 = arith.constant 0 : i32
    %c0_i32_1 = arith.constant 0 : i32
    %c0_i32_2 = arith.constant 0 : i32
    return %c0_i32, %c0_i32_0, %c0_i32_1 : i32, i32, i32
  }
  func.func @transform_18(%arg0: i32) -> (i32, i32) {
    %c0_i32 = arith.constant 0 : i32
    %c0_i32_0 = arith.constant 0 : i32
    %c0_i32_1 = arith.constant 0 : i32
    return %c0_i32, %c0_i32_0 : i32, i32
  }
  func.func @transform_19(%arg0: i32) -> (i32, i32, i32) {
    %c0_i32 = arith.constant 0 : i32
    %c0_i32_0 = arith.constant 0 : i32
    %c0_i32_1 = arith.constant 0 : i32
    return %arg0, %c0_i32, %c0_i32_0 : i32, i32, i32
  }
}

</mosaic_0001>

<llo_original>
// kernel: tpu_custom_call.1
$region0: #{tpu_custom_call.1}
  #allocation0 [shape = 'u32[]', space=smem, size = 0x4, offset = 0x4, fixed_abs, tag = 'smem constant byte address 0x4 - core index']
  #allocation1 [shape = 'u32[144,128]{1,0:T(1,128)}', space=vmem, size = 0x12000, scoped, tag = 'internal scratch']
  #allocation2 [shape = 'f32[1,1]{1,0:T(1,128)S(1)}', space=vmem, size = 0x200, scoped, tag = 'scoped memory for tpu_custom_call.1']
  %s0 = inlined_call_operand.hbm [shape: f32[2,32,96], index: 0, kind: input, shape index: {}]
  %s1 = inlined_call_operand.hbm [shape: bf16[4,96,128], index: 1, kind: input, shape index: {}]
  %s2 = inlined_call_operand.hbm [shape: bf16[4,16,32], index: 2, kind: input, shape index: {}]
  %s3 = inlined_call_operand.vmem [shape: f32[1,128], index: 3, kind: input, shape index: {}]
  %s4 = inlined_call_operand.vmem [shape: bf16[4,128,128], index: 4, kind: input, shape index: {}]
  %s5 = inlined_call_operand.vmem [shape: bf16[4,8,16], index: 5, kind: input, shape index: {}]
  %s6 = inlined_call_operand.vmem [shape: f32[1,128], index: 6, kind: input, shape index: {}]
  %s7 = inlined_call_operand.hbm [shape: f32[128,128], index: 7, kind: input, shape index: {}]
  %s8 = inlined_call_operand.hbm [shape: bf16[4,128,128], index: 8, kind: input, shape index: {}]
  %s9 = inlined_call_operand.vmem [shape: bf16[4,4,8], index: 9, kind: input, shape index: {}]
  %s10 = inlined_call_operand.vmem [shape: f32[1,128], index: 10, kind: input, shape index: {}]
  %s11 = inlined_call_operand.hbm [shape: f32[128,128], index: 11, kind: input, shape index: {}]
  %s12 = inlined_call_operand.hbm [shape: bf16[4,128,128], index: 12, kind: input, shape index: {}]
  %s13 = inlined_call_operand.vmem [shape: bf16[4,2,4], index: 13, kind: input, shape index: {}]
  %s14 = inlined_call_operand.vmem [shape: f32[1,128], index: 14, kind: input, shape index: {}]
  %s15 = inlined_call_operand.hbm [shape: f32[128,128], index: 15, kind: input, shape index: {}]
  %s16 = inlined_call_operand.vmem [shape: bf16[4,128,1], index: 16, kind: input, shape index: {}]
  %s17 = inlined_call_operand.vmem [shape: bf16[4,1,2], index: 17, kind: input, shape index: {}]
  %s18 = inlined_call_operand.<no memory space> [shape: f32[1,1], index: 18, kind: input, shape index: {}]
  %s19 = inlined_call_operand.vmem [shape: f32[2,1,1], index: 19, kind: output, shape index: {}]
  %s20 = sld [smem:[#allocation0]]
  $region141: #{tpu_custom_call.1} parent=0
    _
  %s22 = ssub.s32 1, %s20
  %s23 = scalar_select 0, %s22, %s20
  %v24 = vstv %s18
  %25 = vst [vmem:[#allocation2] sm:$0x1] %v24
  $region1: #{tpu_custom_call.1} parent=0
    #allocation3 [shape = 'u8[32768]{0}', space=vmem, size = 0x8000, scoped, tag = 'input window, operand 0']
    #allocation4 [shape = 's32[2]{0}', space=sflag, size = 0x8, scoped, tag = 'scoped memory for tpu_custom_call.1']
    #allocation5 [shape = 'u8[98304]{0}', space=vmem, size = 0x18000, scoped, tag = 'input window, operand 1, single buffered']
    #allocation6 [shape = 's32[1]{0}', space=sflag, size = 0x4, scoped, tag = 'scoped memory for tpu_custom_call.1']
    #allocation7 [shape = 'u8[16384]{0}', space=vmem, size = 0x4000, scoped, tag = 'input window, operand 2, single buffered']
    #allocation8 [shape = 'u8[65536]{0}', space=vmem, size = 0x10000, scoped, tag = 'input window, operand 7, single buffered']
    #allocation9 [shape = 's32[1]{0}', space=sflag, size = 0x4, scoped, tag = 'scoped memory for tpu_custom_call.1']
    #allocation10 [shape = 'u8[131072]{0}', space=vmem, size = 0x20000, scoped, tag = 'input window, operand 8, single buffered']
    #allocation11 [shape = 'u8[65536]{0}', space=vmem, size = 0x10000, scoped, tag = 'input window, operand 11, single buffered']
    #allocation12 [shape = 's32[1]{0}', space=sflag, size = 0x4, scoped, tag = 'scoped memory for tpu_custom_call.1']
    #allocation13 [shape = 'u8[131072]{0}', space=vmem, size = 0x20000, scoped, tag = 'input window, operand 12, single buffered']
    #allocation14 [shape = 'u8[65536]{0}', space=vmem, size = 0x10000, scoped, tag = 'input window, operand 15, single buffered']
    #allocation15 [shape = 's32[1]{0}', space=sflag, size = 0x4, scoped, tag = 'scoped memory for tpu_custom_call.1']
    %26 = vsyncpa [#allocation4], 0
    %s27 = scalar_lea.sflag [#allocation4], 1
    %28 = vsyncpa %s27, 0
    %29 = vsyncpa [#allocation6], 0
    %30 = vsyncpa [#allocation9], 0
    %31 = vsyncpa [#allocation12], 0
    %32 = vsyncpa [#allocation15], 0
    loop: start=0, step=1, limit=4
    $region2: #{tpu_custom_call.1} parent=1 // loop_pre_header
      _
    $region3: #{tpu_custom_call.1} parent=1 // loop_header
      %s34 = sphi 0, %s38
      %p35 = scmp.ge.s32.totalorder %s34, 4
      %s44 = sphi 0, %s46
      %s47 = sphi 0, %s44
      %s48 = sphi 0, %s47
      %s64 = sphi 0, %s48
      %s68 = sphi 0, %s68
      %s70 = sphi 0, %s68
      %s71 = sphi 0, %s70
      %s85 = sphi 0, %s71
      %s89 = sphi 0, %s89
      %s91 = sphi 0, %s89
      %s92 = sphi 0, %s91
      %s106 = sphi 0, %s92
      %s110 = sphi 0, %s110
      %s112 = sphi 0, %s110
      %s113 = sphi 0, %s112
      %s127 = sphi 0, %s113
      %s131 = sphi 0, %s131
      %s133 = sphi 0, %s131
      %s134 = sphi 0, %s133
      %s148 = sphi 0, %s134
      %s152 = sphi 0, %s152
      %s154 = sphi 0, %s152
      %s155 = sphi 0, %s154
      %s169 = sphi 0, %s155
      %s173 = sphi 0, %s173
      %s175 = sphi 0, %s173
      %s176 = sphi 0, %s175
      %s190 = sphi 0, %s176
      %s194 = sphi 0, %s194
      %s196 = sphi 0, %s194
      %s197 = sphi 0, %s196
      %s211 = sphi 0, %s197
      %s215 = sphi 0, %s215
      %s217 = sphi 0, %s215
      %s218 = sphi 0, %s217
      %s232 = sphi 0, %s218
      %s236 = sphi 0, %s236
      %s238 = sphi 0, %s236
      %s239 = sphi 0, %s238
      %s253 = sphi 0, %s239
      %s257 = sphi 0, %s257
      %s259 = sphi 0, %s257
      %s260 = sphi 0, %s259
      %s274 = sphi 0, %s260
      %s278 = sphi 0, %s278
      %s280 = sphi 0, %s278
      %s281 = sphi 0, %s280
      %s295 = sphi 0, %s281
      %s299 = sphi 0, %s299
      %s301 = sphi 0, %s299
      %s302 = sphi 0, %s301
      %s316 = sphi 0, %s302
      %s320 = sphi 0, %s320
      %s322 = sphi 0, %s320
      %s323 = sphi 0, %s322
      %s337 = sphi 0, %s323
      %s341 = sphi 0, %s341
      %s343 = sphi 0, %s341
      %s344 = sphi 0, %s343
      %s358 = sphi 0, %s344
      %s362 = sphi 0, %s362
      %s364 = sphi 0, %s362
      %s365 = sphi 0, %s364
      %s379 = sphi 0, %s365
      %s383 = sphi 0, %s383
      %s385 = sphi 0, %s383
      %s386 = sphi 0, %s385
      %s400 = sphi 0, %s386
      %s404 = sphi 0, %s404
      %s406 = sphi 0, %s404
      %s407 = sphi 0, %s406
      %s421 = sphi 0, %s407
      %s425 = sphi 0, %s425
      %s427 = sphi 0, %s425
      %s428 = sphi 0, %s427
      %s442 = sphi 0, %s428
      %s448 = sphi 0, %s450
      %s451 = sphi 0, %s448
      %s452 = sphi 0, %s451
      %s468 = sphi 0, %s452
    $region4: #{tpu_custom_call.1} parent=1 // loop_header_branch
      %37 = sbr.rel (%p35) target = $region8
    $region5: #{tpu_custom_call.1} parent=1 // loop_body
      %s39 = ssub.s32 %s34, 1
      %s40 = ssub.s32 %s34, 2
      %s41 = sadd.s32 %s34, 1
      %s42 = ssub.s32 %s34, %s41
      %p43 = scmp.eq.s32.totalorder %s42, 0
      %s45 = sadd.s32 %s44, 1
      %s46 = scalar_select %p43, %s44, %s45
      %p49 = pneg %p43
      %p50 = scmp.eq.s32.totalorder %s34, 1
      %p51 = por %p49, %p50
      %p52 = scmp.ne.s32.totalorder %s44, %s47
      %p53 = scmp.eq.s32.totalorder %s34, 0
      %p54 = por %p52, %p53
      %p55 = scmp.ne.s32.totalorder %s44, %s47
      %p56 = scmp.eq.s32.totalorder %s39, 1
      %p57 = por %p55, %p56
      %p58 = scmp.ne.s32.totalorder %s47, %s48
      %p59 = scmp.eq.s32.totalorder %s39, 0
      %p60 = por %p58, %p59
      %p61 = scmp.ne.s32.totalorder %s47, %s48
      %p62 = scmp.eq.s32.totalorder %s40, 1
      %p63 = por %p61, %p62
      %p65 = scmp.ne.s32.totalorder %s48, %s64
      %p66 = scmp.eq.s32.totalorder %s40, 0
      %p67 = por %p65, %p66
      %s69 = sadd.s32 %s68, 1
      %p72 = scmp.eq.s32.totalorder %s34, 1
      %p73 = scmp.ne.s32.totalorder %s68, %s70
      %p74 = scmp.eq.s32.totalorder %s34, 0
      %p75 = por %p73, %p74
      %p76 = scmp.ne.s32.totalorder %s68, %s70
      %p77 = scmp.eq.s32.totalorder %s39, 1
      %p78 = por %p76, %p77
      %p79 = scmp.ne.s32.totalorder %s70, %s71
      %p80 = scmp.eq.s32.totalorder %s39, 0
      %p81 = por %p79, %p80
      %p82 = scmp.ne.s32.totalorder %s70, %s71
      %p83 = scmp.eq.s32.totalorder %s40, 1
      %p84 = por %p82, %p83
      %p86 = scmp.ne.s32.totalorder %s71, %s85
      %p87 = scmp.eq.s32.totalorder %s40, 0
      %p88 = por %p86, %p87
      %s90 = sadd.s32 %s89, 1
      %p93 = scmp.eq.s32.totalorder %s34, 1
      %p94 = scmp.ne.s32.totalorder %s89, %s91
      %p95 = scmp.eq.s32.totalorder %s34, 0
      %p96 = por %p94, %p95
      %p97 = scmp.ne.s32.totalorder %s89, %s91
      %p98 = scmp.eq.s32.totalorder %s39, 1
      %p99 = por %p97, %p98
      %p100 = scmp.ne.s32.totalorder %s91, %s92
      %p101 = scmp.eq.s32.totalorder %s39, 0
      %p102 = por %p100, %p101
      %p103 = scmp.ne.s32.totalorder %s91, %s92
      %p104 = scmp.eq.s32.totalorder %s40, 1
      %p105 = por %p103, %p104
      %p107 = scmp.ne.s32.totalorder %s92, %s106
      %p108 = scmp.eq.s32.totalorder %s40, 0
      %p109 = por %p107, %p108
      %s111 = sadd.s32 %s110, 1
      %p114 = scmp.eq.s32.totalorder %s34, 1
      %p115 = scmp.ne.s32.totalorder %s110, %s112
      %p116 = scmp.eq.s32.totalorder %s34, 0
      %p117 = por %p115, %p116
      %p118 = scmp.ne.s32.totalorder %s110, %s112
      %p119 = scmp.eq.s32.totalorder %s39, 1
      %p120 = por %p118, %p119
      %p121 = scmp.ne.s32.totalorder %s112, %s113
      %p122 = scmp.eq.s32.totalorder %s39, 0
      %p123 = por %p121, %p122
      %p124 = scmp.ne.s32.totalorder %s112, %s113
      %p125 = scmp.eq.s32.totalorder %s40, 1
      %p126 = por %p124, %p125
      %p128 = scmp.ne.s32.totalorder %s113, %s127
      %p129 = scmp.eq.s32.totalorder %s40, 0
      %p130 = por %p128, %p129
      %s132 = sadd.s32 %s131, 1
      %p135 = scmp.eq.s32.totalorder %s34, 1
      %p136 = scmp.ne.s32.totalorder %s131, %s133
      %p137 = scmp.eq.s32.totalorder %s34, 0
      %p138 = por %p136, %p137
      %p139 = scmp.ne.s32.totalorder %s131, %s133
      %p140 = scmp.eq.s32.totalorder %s39, 1
      %p141 = por %p139, %p140
      %p142 = scmp.ne.s32.totalorder %s133, %s134
      %p143 = scmp.eq.s32.totalorder %s39, 0
      %p144 = por %p142, %p143
      %p145 = scmp.ne.s32.totalorder %s133, %s134
      %p146 = scmp.eq.s32.totalorder %s40, 1
      %p147 = por %p145, %p146
      %p149 = scmp.ne.s32.totalorder %s134, %s148
      %p150 = scmp.eq.s32.totalorder %s40, 0
      %p151 = por %p149, %p150
      %s153 = sadd.s32 %s152, 1
      %p156 = scmp.eq.s32.totalorder %s34, 1
      %p157 = scmp.ne.s32.totalorder %s152, %s154
      %p158 = scmp.eq.s32.totalorder %s34, 0
      %p159 = por %p157, %p158
      %p160 = scmp.ne.s32.totalorder %s152, %s154
      %p161 = scmp.eq.s32.totalorder %s39, 1
      %p162 = por %p160, %p161
      %p163 = scmp.ne.s32.totalorder %s154, %s155
      %p164 = scmp.eq.s32.totalorder %s39, 0
      %p165 = por %p163, %p164
      %p166 = scmp.ne.s32.totalorder %s154, %s155
      %p167 = scmp.eq.s32.totalorder %s40, 1
      %p168 = por %p166, %p167
      %p170 = scmp.ne.s32.totalorder %s155, %s169
      %p171 = scmp.eq.s32.totalorder %s40, 0
      %p172 = por %p170, %p171
      %s174 = sadd.s32 %s173, 1
      %p177 = scmp.eq.s32.totalorder %s34, 1
      %p178 = scmp.ne.s32.totalorder %s173, %s175
      %p179 = scmp.eq.s32.totalorder %s34, 0
      %p180 = por %p178, %p179
      %p181 = scmp.ne.s32.totalorder %s173, %s175
      %p182 = scmp.eq.s32.totalorder %s39, 1
      %p183 = por %p181, %p182
      %p184 = scmp.ne.s32.totalorder %s175, %s176
      %p185 = scmp.eq.s32.totalorder %s39, 0
      %p186 = por %p184, %p185
      %p187 = scmp.ne.s32.totalorder %s175, %s176
      %p188 = scmp.eq.s32.totalorder %s40, 1
      %p189 = por %p187, %p188
      %p191 = scmp.ne.s32.totalorder %s176, %s190
      %p192 = scmp.eq.s32.totalorder %s40, 0
      %p193 = por %p191, %p192
      %s195 = sadd.s32 %s194, 1
      %p198 = scmp.eq.s32.totalorder %s34, 1
      %p199 = scmp.ne.s32.totalorder %s194, %s196
      %p200 = scmp.eq.s32.totalorder %s34, 0
      %p201 = por %p199, %p200
      %p202 = scmp.ne.s32.totalorder %s194, %s196
      %p203 = scmp.eq.s32.totalorder %s39, 1
      %p204 = por %p202, %p203
      %p205 = scmp.ne.s32.totalorder %s196, %s197
      %p206 = scmp.eq.s32.totalorder %s39, 0
      %p207 = por %p205, %p206
      %p208 = scmp.ne.s32.totalorder %s196, %s197
      %p209 = scmp.eq.s32.totalorder %s40, 1
      %p210 = por %p208, %p209
      %p212 = scmp.ne.s32.totalorder %s197, %s211
      %p213 = scmp.eq.s32.totalorder %s40, 0
      %p214 = por %p212, %p213
      %s216 = sadd.s32 %s215, 1
      %p219 = scmp.eq.s32.totalorder %s34, 1
      %p220 = scmp.ne.s32.totalorder %s215, %s217
      %p221 = scmp.eq.s32.totalorder %s34, 0
      %p222 = por %p220, %p221
      %p223 = scmp.ne.s32.totalorder %s215, %s217
      %p224 = scmp.eq.s32.totalorder %s39, 1
      %p225 = por %p223, %p224
      %p226 = scmp.ne.s32.totalorder %s217, %s218
      %p227 = scmp.eq.s32.totalorder %s39, 0
      %p228 = por %p226, %p227
      %p229 = scmp.ne.s32.totalorder %s217, %s218
      %p230 = scmp.eq.s32.totalorder %s40, 1
      %p231 = por %p229, %p230
      %p233 = scmp.ne.s32.totalorder %s218, %s232
      %p234 = scmp.eq.s32.totalorder %s40, 0
      %p235 = por %p233, %p234
      %s237 = sadd.s32 %s236, 1
      %p240 = scmp.eq.s32.totalorder %s34, 1
      %p241 = scmp.ne.s32.totalorder %s236, %s238
      %p242 = scmp.eq.s32.totalorder %s34, 0
      %p243 = por %p241, %p242
      %p244 = scmp.ne.s32.totalorder %s236, %s238
      %p245 = scmp.eq.s32.totalorder %s39, 1
      %p246 = por %p244, %p245
      %p247 = scmp.ne.s32.totalorder %s238, %s239
      %p248 = scmp.eq.s32.totalorder %s39, 0
      %p249 = por %p247, %p248
      %p250 = scmp.ne.s32.totalorder %s238, %s239
      %p251 = scmp.eq.s32.totalorder %s40, 1
      %p252 = por %p250, %p251
      %p254 = scmp.ne.s32.totalorder %s239, %s253
      %p255 = scmp.eq.s32.totalorder %s40, 0
      %p256 = por %p254, %p255
      %s258 = sadd.s32 %s257, 1
      %p261 = scmp.eq.s32.totalorder %s34, 1
      %p262 = scmp.ne.s32.totalorder %s257, %s259
      %p263 = scmp.eq.s32.totalorder %s34, 0
      %p264 = por %p262, %p263
      %p265 = scmp.ne.s32.totalorder %s257, %s259
      %p266 = scmp.eq.s32.totalorder %s39, 1
      %p267 = por %p265, %p266
      %p268 = scmp.ne.s32.totalorder %s259, %s260
      %p269 = scmp.eq.s32.totalorder %s39, 0
      %p270 = por %p268, %p269
      %p271 = scmp.ne.s32.totalorder %s259, %s260
      %p272 = scmp.eq.s32.totalorder %s40, 1
      %p273 = por %p271, %p272
      %p275 = scmp.ne.s32.totalorder %s260, %s274
      %p276 = scmp.eq.s32.totalorder %s40, 0
      %p277 = por %p275, %p276
      %s279 = sadd.s32 %s278, 1
      %p282 = scmp.eq.s32.totalorder %s34, 1
      %p283 = scmp.ne.s32.totalorder %s278, %s280
      %p284 = scmp.eq.s32.totalorder %s34, 0
      %p285 = por %p283, %p284
      %p286 = scmp.ne.s32.totalorder %s278, %s280
      %p287 = scmp.eq.s32.totalorder %s39, 1
      %p288 = por %p286, %p287
      %p289 = scmp.ne.s32.totalorder %s280, %s281
      %p290 = scmp.eq.s32.totalorder %s39, 0
      %p291 = por %p289, %p290
      %p292 = scmp.ne.s32.totalorder %s280, %s281
      %p293 = scmp.eq.s32.totalorder %s40, 1
      %p294 = por %p292, %p293
      %p296 = scmp.ne.s32.totalorder %s281, %s295
      %p297 = scmp.eq.s32.totalorder %s40, 0
      %p298 = por %p296, %p297
      %s300 = sadd.s32 %s299, 1
      %p303 = scmp.eq.s32.totalorder %s34, 1
      %p304 = scmp.ne.s32.totalorder %s299, %s301
      %p305 = scmp.eq.s32.totalorder %s34, 0
      %p306 = por %p304, %p305
      %p307 = scmp.ne.s32.totalorder %s299, %s301
      %p308 = scmp.eq.s32.totalorder %s39, 1
      %p309 = por %p307, %p308
      %p310 = scmp.ne.s32.totalorder %s301, %s302
      %p311 = scmp.eq.s32.totalorder %s39, 0
      %p312 = por %p310, %p311
      %p313 = scmp.ne.s32.totalorder %s301, %s302
      %p314 = scmp.eq.s32.totalorder %s40, 1
      %p315 = por %p313, %p314
      %p317 = scmp.ne.s32.totalorder %s302, %s316
      %p318 = scmp.eq.s32.totalorder %s40, 0
      %p319 = por %p317, %p318
      %s321 = sadd.s32 %s320, 1
      %p324 = scmp.eq.s32.totalorder %s34, 1
      %p325 = scmp.ne.s32.totalorder %s320, %s322
      %p326 = scmp.eq.s32.totalorder %s34, 0
      %p327 = por %p325, %p326
      %p328 = scmp.ne.s32.totalorder %s320, %s322
      %p329 = scmp.eq.s32.totalorder %s39, 1
      %p330 = por %p328, %p329
      %p331 = scmp.ne.s32.totalorder %s322, %s323
      %p332 = scmp.eq.s32.totalorder %s39, 0
      %p333 = por %p331, %p332
      %p334 = scmp.ne.s32.totalorder %s322, %s323
      %p335 = scmp.eq.s32.totalorder %s40, 1
      %p336 = por %p334, %p335
      %p338 = scmp.ne.s32.totalorder %s323, %s337
      %p339 = scmp.eq.s32.totalorder %s40, 0
      %p340 = por %p338, %p339
      %s342 = sadd.s32 %s341, 1
      %p345 = scmp.eq.s32.totalorder %s34, 1
      %p346 = scmp.ne.s32.totalorder %s341, %s343
      %p347 = scmp.eq.s32.totalorder %s34, 0
      %p348 = por %p346, %p347
      %p349 = scmp.ne.s32.totalorder %s341, %s343
      %p350 = scmp.eq.s32.totalorder %s39, 1
      %p351 = por %p349, %p350
      %p352 = scmp.ne.s32.totalorder %s343, %s344
      %p353 = scmp.eq.s32.totalorder %s39, 0
      %p354 = por %p352, %p353
      %p355 = scmp.ne.s32.totalorder %s343, %s344
      %p356 = scmp.eq.s32.totalorder %s40, 1
      %p357 = por %p355, %p356
      %p359 = scmp.ne.s32.totalorder %s344, %s358
      %p360 = scmp.eq.s32.totalorder %s40, 0
      %p361 = por %p359, %p360
      %s363 = sadd.s32 %s362, 1
      %p366 = scmp.eq.s32.totalorder %s34, 1
      %p367 = scmp.ne.s32.totalorder %s362, %s364
      %p368 = scmp.eq.s32.totalorder %s34, 0
      %p369 = por %p367, %p368
      %p370 = scmp.ne.s32.totalorder %s362, %s364
      %p371 = scmp.eq.s32.totalorder %s39, 1
      %p372 = por %p370, %p371
      %p373 = scmp.ne.s32.totalorder %s364, %s365
      %p374 = scmp.eq.s32.totalorder %s39, 0
      %p375 = por %p373, %p374
      %p376 = scmp.ne.s32.totalorder %s364, %s365
      %p377 = scmp.eq.s32.totalorder %s40, 1
      %p378 = por %p376, %p377
      %p380 = scmp.ne.s32.totalorder %s365, %s379
      %p381 = scmp.eq.s32.totalorder %s40, 0
      %p382 = por %p380, %p381
      %s384 = sadd.s32 %s383, 1
      %p387 = scmp.eq.s32.totalorder %s34, 1
      %p388 = scmp.ne.s32.totalorder %s383, %s385
      %p389 = scmp.eq.s32.totalorder %s34, 0
      %p390 = por %p388, %p389
      %p391 = scmp.ne.s32.totalorder %s383, %s385
      %p392 = scmp.eq.s32.totalorder %s39, 1
      %p393 = por %p391, %p392
      %p394 = scmp.ne.s32.totalorder %s385, %s386
      %p395 = scmp.eq.s32.totalorder %s39, 0
      %p396 = por %p394, %p395
      %p397 = scmp.ne.s32.totalorder %s385, %s386
      %p398 = scmp.eq.s32.totalorder %s40, 1
      %p399 = por %p397, %p398
      %p401 = scmp.ne.s32.totalorder %s386, %s400
      %p402 = scmp.eq.s32.totalorder %s40, 0
      %p403 = por %p401, %p402
      %s405 = sadd.s32 %s404, 1
      %p408 = scmp.eq.s32.totalorder %s34, 1
      %p409 = scmp.ne.s32.totalorder %s404, %s406
      %p410 = scmp.eq.s32.totalorder %s34, 0
      %p411 = por %p409, %p410
      %p412 = scmp.ne.s32.totalorder %s404, %s406
      %p413 = scmp.eq.s32.totalorder %s39, 1
      %p414 = por %p412, %p413
      %p415 = scmp.ne.s32.totalorder %s406, %s407
      %p416 = scmp.eq.s32.totalorder %s39, 0
      %p417 = por %p415, %p416
      %p418 = scmp.ne.s32.totalorder %s406, %s407
      %p419 = scmp.eq.s32.totalorder %s40, 1
      %p420 = por %p418, %p419
      %p422 = scmp.ne.s32.totalorder %s407, %s421
      %p423 = scmp.eq.s32.totalorder %s40, 0
      %p424 = por %p422, %p423
      %s426 = sadd.s32 %s425, 1
      %p429 = scmp.eq.s32.totalorder %s34, 1
      %p430 = scmp.ne.s32.totalorder %s425, %s427
      %p431 = scmp.eq.s32.totalorder %s34, 0
      %p432 = por %p430, %p431
      %p433 = scmp.ne.s32.totalorder %s425, %s427
      %p434 = scmp.eq.s32.totalorder %s39, 1
      %p435 = por %p433, %p434
      %p436 = scmp.ne.s32.totalorder %s427, %s428
      %p437 = scmp.eq.s32.totalorder %s39, 0
      %p438 = por %p436, %p437
      %p439 = scmp.ne.s32.totalorder %s427, %s428
      %p440 = scmp.eq.s32.totalorder %s40, 1
      %p441 = por %p439, %p440
      %p443 = scmp.ne.s32.totalorder %s428, %s442
      %p444 = scmp.eq.s32.totalorder %s40, 0
      %p445 = por %p443, %p444
      %s446 = ssub.s32 %s34, %s41
      %p447 = scmp.eq.s32.totalorder %s446, 0
      %s449 = sadd.s32 %s448, 1
      %s450 = scalar_select %p447, %s448, %s449
      %p453 = pneg %p447
      %p454 = scmp.eq.s32.totalorder %s34, 1
      %p455 = por %p453, %p454
      %p456 = scmp.ne.s32.totalorder %s448, %s451
      %p457 = scmp.eq.s32.totalorder %s34, 0
      %p458 = por %p456, %p457
      %p459 = scmp.ne.s32.totalorder %s448, %s451
      %p460 = scmp.eq.s32.totalorder %s39, 1
      %p461 = por %p459, %p460
      %p462 = scmp.ne.s32.totalorder %s451, %s452
      %p463 = scmp.eq.s32.totalorder %s39, 0
      %p464 = por %p462, %p463
      %p465 = scmp.ne.s32.totalorder %s451, %s452
      %p466 = scmp.eq.s32.totalorder %s40, 1
      %p467 = por %p465, %p466
      %p469 = scmp.ne.s32.totalorder %s452, %s468
      %p470 = scmp.eq.s32.totalorder %s40, 0
      %p471 = por %p469, %p470
      %p472 = scmp.le.s32.totalorder 1, %s34
      %p473 = scmp.lt.s32.totalorder %s34, 3
      %p474 = pnand %p472, %p473
      %p475 = pneg %p474
      // Predicated region
      $region9: #{tpu_custom_call.1} parent=5 // pred_check
        _
      $region10: #{tpu_custom_call.1} parent=5 // pred_check_branch
        %477 = sbr.rel (%p474) target = $region12
      $region11: #{tpu_custom_call.1} parent=5 // pred_region
        %s478 = ssub.s32 %s34, 1
        // Predicated region
        $region13: #{tpu_custom_call.1} parent=11 // pred_check
          %p479 = pneg %p81
        $region14: #{tpu_custom_call.1} parent=11 // pred_check_branch
          %481 = sbr.rel (%p479) target = $region16
        $region15: #{tpu_custom_call.1} parent=11 // pred_region
          %s483 = ssub.s32 3072, 3072
          %484 = vsyncadd [#allocation6], %s483
          %s485 = sshll.u32 [#allocation5], 4
          %s486 = int_to_ptr.vmem [resolvable:$true] %s485
          %491 = dma.hbm_to_vmem [thread:$0]  %s1, 3072, %s486, [#allocation6], 64, 64, 4
        $region16: #{tpu_custom_call.1} parent=11 // pred_fallthru
          _
        // Predicated region
        $region17: #{tpu_custom_call.1} parent=11 // pred_check
          %p492 = pneg %p102
        $region18: #{tpu_custom_call.1} parent=11 // pred_check_branch
          %494 = sbr.rel (%p492) target = $region20
        $region19: #{tpu_custom_call.1} parent=11 // pred_region
          %s496 = ssub.s32 512, 512
          %497 = vsyncadd [#allocation6], %s496
          %s498 = sshll.u32 [#allocation7], 4
          %s499 = int_to_ptr.vmem [resolvable:$true] %s498
          %504 = dma.hbm_to_vmem [thread:$0]  %s2, 512, %s499, [#allocation6], 64, 64, 4
        $region20: #{tpu_custom_call.1} parent=11 // pred_fallthru
          _
        // Predicated region
        $region21: #{tpu_custom_call.1} parent=11 // pred_check
          %p505 = pneg %p123
        $region22: #{tpu_custom_call.1} parent=11 // pred_check_branch
          %507 = sbr.rel (%p505) target = $region24
        $region23: #{tpu_custom_call.1} parent=11 // pred_region
          _
        $region24: #{tpu_custom_call.1} parent=11 // pred_fallthru
          _
        // Predicated region
        $region25: #{tpu_custom_call.1} parent=11 // pred_check
          %p508 = pneg %p144
        $region26: #{tpu_custom_call.1} parent=11 // pred_check_branch
          %510 = sbr.rel (%p508) target = $region28
        $region27: #{tpu_custom_call.1} parent=11 // pred_region
          _
        $region28: #{tpu_custom_call.1} parent=11 // pred_fallthru
          _
        // Predicated region
        $region29: #{tpu_custom_call.1} parent=11 // pred_check
          %p511 = pneg %p165
        $region30: #{tpu_custom_call.1} parent=11 // pred_check_branch
          %513 = sbr.rel (%p511) target = $region32
        $region31: #{tpu_custom_call.1} parent=11 // pred_region
          _
        $region32: #{tpu_custom_call.1} parent=11 // pred_fallthru
          _
        // Predicated region
        $region33: #{tpu_custom_call.1} parent=11 // pred_check
          %p514 = pneg %p186
        $region34: #{tpu_custom_call.1} parent=11 // pred_check_branch
          %516 = sbr.rel (%p514) target = $region36
        $region35: #{tpu_custom_call.1} parent=11 // pred_region
          _
        $region36: #{tpu_custom_call.1} parent=11 // pred_fallthru
          _
        // Predicated region
        $region37: #{tpu_custom_call.1} parent=11 // pred_check
          %p517 = pneg %p207
        $region38: #{tpu_custom_call.1} parent=11 // pred_check_branch
          %519 = sbr.rel (%p517) target = $region40
        $region39: #{tpu_custom_call.1} parent=11 // pred_region
          %s521 = ssub.s32 2048, 2048
          %522 = vsyncadd [#allocation9], %s521
          %s523 = sshll.u32 [#allocation8], 4
          %s524 = int_to_ptr.vmem [resolvable:$true] %s523
          %529 = dma.hbm_to_vmem [thread:$0]  %s7, 2048, %s524, [#allocation9], 128, 128, 8
        $region40: #{tpu_custom_call.1} parent=11 // pred_fallthru
          _
        // Predicated region
        $region41: #{tpu_custom_call.1} parent=11 // pred_check
          %p530 = pneg %p228
        $region42: #{tpu_custom_call.1} parent=11 // pred_check_branch
          %532 = sbr.rel (%p530) target = $region44
        $region43: #{tpu_custom_call.1} parent=11 // pred_region
          %s534 = ssub.s32 4096, 4096
          %535 = vsyncadd [#allocation9], %s534
          %s536 = sshll.u32 [#allocation10], 4
          %s537 = int_to_ptr.vmem [resolvable:$true] %s536
          %542 = dma.hbm_to_vmem [thread:$0]  %s8, 4096, %s537, [#allocation9], 64, 64, 4
        $region44: #{tpu_custom_call.1} parent=11 // pred_fallthru
          _
        // Predicated region
        $region45: #{tpu_custom_call.1} parent=11 // pred_check
          %p543 = pneg %p249
        $region46: #{tpu_custom_call.1} parent=11 // pred_check_branch
          %545 = sbr.rel (%p543) target = $region48
        $region47: #{tpu_custom_call.1} parent=11 // pred_region
          _
        $region48: #{tpu_custom_call.1} parent=11 // pred_fallthru
          _
        // Predicated region
        $region49: #{tpu_custom_call.1} parent=11 // pred_check
          %p546 = pneg %p270
        $region50: #{tpu_custom_call.1} parent=11 // pred_check_branch
          %548 = sbr.rel (%p546) target = $region52
        $region51: #{tpu_custom_call.1} parent=11 // pred_region
          _
        $region52: #{tpu_custom_call.1} parent=11 // pred_fallthru
          _
        // Predicated region
        $region53: #{tpu_custom_call.1} parent=11 // pred_check
          %p549 = pneg %p291
        $region54: #{tpu_custom_call.1} parent=11 // pred_check_branch
          %551 = sbr.rel (%p549) target = $region56
        $region55: #{tpu_custom_call.1} parent=11 // pred_region
          %s553 = ssub.s32 2048, 2048
          %554 = vsyncadd [#allocation12], %s553
          %s555 = sshll.u32 [#allocation11], 4
          %s556 = int_to_ptr.vmem [resolvable:$true] %s555
          %561 = dma.hbm_to_vmem [thread:$0]  %s11, 2048, %s556, [#allocation12], 128, 128, 8
        $region56: #{tpu_custom_call.1} parent=11 // pred_fallthru
          _
        // Predicated region
        $region57: #{tpu_custom_call.1} parent=11 // pred_check
          %p562 = pneg %p312
        $region58: #{tpu_custom_call.1} parent=11 // pred_check_branch
          %564 = sbr.rel (%p562) target = $region60
        $region59: #{tpu_custom_call.1} parent=11 // pred_region
          %s566 = ssub.s32 4096, 4096
          %567 = vsyncadd [#allocation12], %s566
          %s568 = sshll.u32 [#allocation13], 4
          %s569 = int_to_ptr.vmem [resolvable:$true] %s568
          %574 = dma.hbm_to_vmem [thread:$0]  %s12, 4096, %s569, [#allocation12], 64, 64, 4
        $region60: #{tpu_custom_call.1} parent=11 // pred_fallthru
          _
        // Predicated region
        $region61: #{tpu_custom_call.1} parent=11 // pred_check
          %p575 = pneg %p333
        $region62: #{tpu_custom_call.1} parent=11 // pred_check_branch
          %577 = sbr.rel (%p575) target = $region64
        $region63: #{tpu_custom_call.1} parent=11 // pred_region
          _
        $region64: #{tpu_custom_call.1} parent=11 // pred_fallthru
          _
        // Predicated region
        $region65: #{tpu_custom_call.1} parent=11 // pred_check
          %p578 = pneg %p354
        $region66: #{tpu_custom_call.1} parent=11 // pred_check_branch
          %580 = sbr.rel (%p578) target = $region68
        $region67: #{tpu_custom_call.1} parent=11 // pred_region
          _
        $region68: #{tpu_custom_call.1} parent=11 // pred_fallthru
          _
        // Predicated region
        $region69: #{tpu_custom_call.1} parent=11 // pred_check
          %p581 = pneg %p375
        $region70: #{tpu_custom_call.1} parent=11 // pred_check_branch
          %583 = sbr.rel (%p581) target = $region72
        $region71: #{tpu_custom_call.1} parent=11 // pred_region
          %s585 = ssub.s32 2048, 2048
          %586 = vsyncadd [#allocation15], %s585
          %s587 = sshll.u32 [#allocation14], 4
          %s588 = int_to_ptr.vmem [resolvable:$true] %s587
          %593 = dma.hbm_to_vmem [thread:$0]  %s15, 2048, %s588, [#allocation15], 128, 128, 8
        $region72: #{tpu_custom_call.1} parent=11 // pred_fallthru
          _
        // Predicated region
        $region73: #{tpu_custom_call.1} parent=11 // pred_check
          %p594 = pneg %p396
        $region74: #{tpu_custom_call.1} parent=11 // pred_check_branch
          %596 = sbr.rel (%p594) target = $region76
        $region75: #{tpu_custom_call.1} parent=11 // pred_region
          _
        $region76: #{tpu_custom_call.1} parent=11 // pred_fallthru
          _
        // Predicated region
        $region77: #{tpu_custom_call.1} parent=11 // pred_check
          %p597 = pneg %p417
        $region78: #{tpu_custom_call.1} parent=11 // pred_check_branch
          %599 = sbr.rel (%p597) target = $region80
        $region79: #{tpu_custom_call.1} parent=11 // pred_region
          _
        $region80: #{tpu_custom_call.1} parent=11 // pred_fallthru
          _
        // Predicated region
        $region81: #{tpu_custom_call.1} parent=11 // pred_check
          %p600 = pneg %p438
        $region82: #{tpu_custom_call.1} parent=11 // pred_check_branch
          %602 = sbr.rel (%p600) target = $region84
        $region83: #{tpu_custom_call.1} parent=11 // pred_region
          _
        $region84: #{tpu_custom_call.1} parent=11 // pred_fallthru
          _
      $region12: #{tpu_custom_call.1} parent=5 // pred_fallthru
        _
      %p603 = scmp.lt.s32.totalorder %s34, 2
      // Predicated region
      $region85: #{tpu_custom_call.1} parent=5 // pred_check
        %p604 = pneg %p603
      $region86: #{tpu_custom_call.1} parent=5 // pred_check_branch
        %606 = sbr.rel (%p604) target = $region88
      $region87: #{tpu_custom_call.1} parent=5 // pred_region
        // Predicated region
        $region89: #{tpu_custom_call.1} parent=87 // pred_check
          %p607 = pneg %p54
        $region90: #{tpu_custom_call.1} parent=87 // pred_check_branch
          %609 = sbr.rel (%p607) target = $region92
        $region91: #{tpu_custom_call.1} parent=87 // pred_region
          %s610 = sand.u32 %s44, 1
          %s611 = scalar_lea.sflag [#allocation4], %s610
          %s612 = sand.u32 %s44, 1
          %s613 = smul.addr %s612, 32
          %s614 = scalar_lea.vmem [#allocation3], %s613
          %s616 = ssub.s32 512, 512
          %617 = vsyncadd %s611, %s616
          %s618 = smul.addr %s34, 4
          %s619 = smul.addr %s618, 128
          %s620 = scalar_lea.hbm %s0, %s619
          %s621 = sshll.u32 %s614, 4
          %s622 = int_to_ptr.vmem [resolvable:$true] %s621
          %627 = dma.hbm_to_vmem [thread:$0]  %s620, 512, %s622, %s611, 128, 128, 8
        $region92: #{tpu_custom_call.1} parent=87 // pred_fallthru
          _
      $region88: #{tpu_custom_call.1} parent=5 // pred_fallthru
        _
      %p628 = scmp.le.s32.totalorder 1, %s34
      %p629 = scmp.lt.s32.totalorder %s34, 3
      %p630 = pnand %p628, %p629
      %p631 = pneg %p630
      // Predicated region
      $region93: #{tpu_custom_call.1} parent=5 // pred_check
        _
      $region94: #{tpu_custom_call.1} parent=5 // pred_check_branch
        %633 = sbr.rel (%p630) target = $region96
      $region95: #{tpu_custom_call.1} parent=5 // pred_region
        %s634 = ssub.s32 %s34, 1
        %s635 = sand.u32 %s47, 1
        %s636 = scalar_lea.sflag [#allocation4], %s635
        %s637 = sand.u32 %s47, 1
        %s638 = smul.addr %s637, 32
        %s639 = scalar_lea.vmem [#allocation3], %s638
        // Predicated region
        $region97: #{tpu_custom_call.1} parent=95 // pred_check
          %p640 = pneg %p60
        $region98: #{tpu_custom_call.1} parent=95 // pred_check_branch
          %642 = sbr.rel (%p640) target = $region100
        $region99: #{tpu_custom_call.1} parent=95 // pred_region
          %643 = dma.done %s636, 512
        $region100: #{tpu_custom_call.1} parent=95 // pred_fallthru
          _
        // Predicated region
        $region101: #{tpu_custom_call.1} parent=95 // pred_check
          %p644 = pneg %p81
        $region102: #{tpu_custom_call.1} parent=95 // pred_check_branch
          %646 = sbr.rel (%p644) target = $region104
        $region103: #{tpu_custom_call.1} parent=95 // pred_region
          %647 = dma.done [#allocation6], 3072
        $region104: #{tpu_custom_call.1} parent=95 // pred_fallthru
          _
        // Predicated region
        $region105: #{tpu_custom_call.1} parent=95 // pred_check
          %p648 = pneg %p102
        $region106: #{tpu_custom_call.1} parent=95 // pred_check_branch
          %650 = sbr.rel (%p648) target = $region108
        $region107: #{tpu_custom_call.1} parent=95 // pred_region
          %651 = dma.done [#allocation6], 512
        $region108: #{tpu_custom_call.1} parent=95 // pred_fallthru
          _
        // Predicated region
        $region109: #{tpu_custom_call.1} parent=95 // pred_check
          %p652 = pneg %p207
        $region110: #{tpu_custom_call.1} parent=95 // pred_check_branch
          %654 = sbr.rel (%p652) target = $region112
        $region111: #{tpu_custom_call.1} parent=95 // pred_region
          %655 = dma.done [#allocation9], 2048
        $region112: #{tpu_custom_call.1} parent=95 // pred_fallthru
          _
        // Predicated region
        $region113: #{tpu_custom_call.1} parent=95 // pred_check
          %p656 = pneg %p228
        $region114: #{tpu_custom_call.1} parent=95 // pred_check_branch
          %658 = sbr.rel (%p656) target = $region116
        $region115: #{tpu_custom_call.1} parent=95 // pred_region
          %659 = dma.done [#allocation9], 4096
        $region116: #{tpu_custom_call.1} parent=95 // pred_fallthru
          _
        // Predicated region
        $region117: #{tpu_custom_call.1} parent=95 // pred_check
          %p660 = pneg %p291
        $region118: #{tpu_custom_call.1} parent=95 // pred_check_branch
          %662 = sbr.rel (%p660) target = $region120
        $region119: #{tpu_custom_call.1} parent=95 // pred_region
          %663 = dma.done [#allocation12], 2048
        $region120: #{tpu_custom_call.1} parent=95 // pred_fallthru
          _
        // Predicated region
        $region121: #{tpu_custom_call.1} parent=95 // pred_check
          %p664 = pneg %p312
        $region122: #{tpu_custom_call.1} parent=95 // pred_check_branch
          %666 = sbr.rel (%p664) target = $region124
        $region123: #{tpu_custom_call.1} parent=95 // pred_region
          %667 = dma.done [#allocation12], 4096
        $region124: #{tpu_custom_call.1} parent=95 // pred_fallthru
          _
        // Predicated region
        $region125: #{tpu_custom_call.1} parent=95 // pred_check
          %p668 = pneg %p375
        $region126: #{tpu_custom_call.1} parent=95 // pred_check_branch
          %670 = sbr.rel (%p668) target = $region128
        $region127: #{tpu_custom_call.1} parent=95 // pred_region
          %671 = dma.done [#allocation15], 2048
        $region128: #{tpu_custom_call.1} parent=95 // pred_fallthru
          _
        %s672 = sand.u32 %s47, 1
        %s673 = scalar_lea.sflag [#allocation4], %s672
        %s674 = sand.u32 %s47, 1
        %s675 = smul.addr %s674, 32
        %s676 = scalar_lea.vmem [#allocation3], %s675
        %p677 = pneg %p60
        %p678 = pneg %p57
        %p679 = pneg %p81
        %p680 = pneg %p78
        %p681 = pneg %p102
        %p682 = pneg %p99
        %p683 = pneg %p123
        %p684 = pneg %p120
        %p685 = pneg %p144
        %p686 = pneg %p141
        %p687 = pneg %p165
        %p688 = pneg %p162
        %p689 = pneg %p186
        %p690 = pneg %p183
        %p691 = pneg %p207
        %p692 = pneg %p204
        %p693 = pneg %p228
        %p694 = pneg %p225
        %p695 = pneg %p249
        %p696 = pneg %p246
        %p697 = pneg %p270
        %p698 = pneg %p267
        %p699 = pneg %p291
        %p700 = pneg %p288
        %p701 = pneg %p312
        %p702 = pneg %p309
        %p703 = pneg %p333
        %p704 = pneg %p330
        %p705 = pneg %p354
        %p706 = pneg %p351
        %p707 = pneg %p375
        %p708 = pneg %p372
        %p709 = pneg %p396
        %p710 = pneg %p393
        %p711 = pneg %p417
        %p712 = pneg %p414
        %p713 = pneg %p438
        %p714 = pneg %p435
        %p715 = pneg %p464
        %p716 = pneg %p461
        %p717 = scmp.lt.s32.totalorder %s39, 1
        %s718 = scalar_select %p717, %s39, 1
        %s719 = scalar_lea.vmem %s19, %s718
        %p720 = scmp.lt.s32.totalorder %s39, 1
        %s721 = scalar_select %p720, %s39, 1
        %s722 = scalar_lea.vmem %s19, %s721
        %v724 = vld [vmem:[%s639] sm:$0xff]
        %v725 = vld [vmem:[%s639 + $0x8] sm:$0xff]
        %v726 = vld [vmem:[%s639 + $0x10] sm:$0xff]
        %v727 = vld [vmem:[%s639 + $0x18] sm:$0xff]
        %v728 = vpack.c.bf16 %v725, %v724
        %v729 = vpack.c.bf16 %v727, %v726
        %v730 = vld [vmem:[#allocation7] sm:$0xf]
        %v731 = vld [vmem:[#allocation7 + $0x4] sm:$0xf]
        %v734 = vunpack.c.l.b16 %v730
        %v735 = vunpack.c.l.b16 %v731
        %v736 = vpack.c.b16 %v735, %v734
        %vm737 = vcmask 261120
        %v739 = vsel %vm737, %v736, 0
        %741 = vmatprep.subr.bf16.mxu0 0
        %742 = vmatpush1.bf16.msra.mxu0 %v728
        %743 = vmatprep.subr.bf16.mxu0 0
        %744 = vmatpush1.bf16.msra.mxu0 %v729
        %745 = vmatprep.subr.bf16.mxu0 0
        %746 = vmatpush1.bf16.msra.mxu0 0
        %747 = vmatprep.subr.bf16.mxu0 0
        %748 = vmatpush1.bf16.msra.mxu0 0
        %749 = vmatprep.subr.bf16.mxu0 0
        %750 = vmatpush1.bf16.msra.mxu0 0
        %751 = vmatprep.subr.bf16.mxu0 0
        %752 = vmatpush1.bf16.msra.mxu0 0
        %753 = vmatprep.subr.bf16.mxu0 0
        %754 = vmatpush1.bf16.msra.mxu0 0
        %755 = vmatprep.subr.bf16.mxu0 0
        %756 = vmatpush1.bf16.msra.mxu0 0
        %757 = vmatprep.subr.bf16.mxu0 0
        %758 = vmatpush1.bf16.msra.mxu0 0
        %759 = vmatprep.subr.bf16.mxu0 0
        %760 = vmatpush1.bf16.msra.mxu0 0
        %761 = vmatprep.subr.bf16.mxu0 0
        %762 = vmatpush1.bf16.msra.mxu0 0
        %763 = vmatprep.subr.bf16.mxu0 0
        %764 = vmatpush1.bf16.msra.mxu0 0
        %765 = vmatprep.subr.bf16.mxu0 0
        %766 = vmatpush1.bf16.msra.mxu0 0
        %767 = vmatprep.subr.bf16.mxu0 0
        %768 = vmatpush1.bf16.msra.mxu0 0
        %769 = vmatprep.subr.bf16.mxu0 0
        %770 = vmatpush1.bf16.msra.mxu0 0
        %771 = vmatprep.subr.bf16.mxu0 0
        %772 = vmatpush1.bf16.msra.mxu0 0
        %773 = vmatprep.mubr.bf16.mxu0 0
        %774 = vmatmul.mubr.bf16.gmra.mrb[0].mxu0 %v739
        %v775 = vpop.f32.mrb[0].mxu0
        %v776 = vadd.f32 0.0, %v775
        %v777 = vpop.f32.mrb[0].mxu0
        %v778 = vpop.f32.mrb[0].mxu0
        %v779 = vadd.f32 0.0, %v778
        %v780 = vpop.f32.mrb[0].mxu0
        %781 = vdwg.mxu0
        %v782 = vpack.c.bf16 %v779, %v776
        %v783 = vld [vmem:[#allocation5] sm:$0xf]
        %v784 = vld [vmem:[#allocation5 + $0x4] sm:$0xf]
        %v785 = vld [vmem:[#allocation5 + $0x8] sm:$0xf]
        %v786 = vld [vmem:[#allocation5 + $0xc] sm:$0xf]
        %v787 = vld [vmem:[#allocation5 + $0x10] sm:$0xf]
        %v788 = vld [vmem:[#allocation5 + $0x14] sm:$0xf]
        %v789 = vld [vmem:[#allocation5 + $0x18] sm:$0xf]
        %v790 = vld [vmem:[#allocation5 + $0x1c] sm:$0xf]
        %v791 = vld [vmem:[#allocation5 + $0x20] sm:$0xf]
        %v792 = vld [vmem:[#allocation5 + $0x24] sm:$0xf]
        %v793 = vld [vmem:[#allocation5 + $0x28] sm:$0xf]
        %v794 = vld [vmem:[#allocation5 + $0x2c] sm:$0xf]
        %s795 = scalar_lea.vmem [#allocation7], 8
        %v796 = vld [vmem:[%s795] sm:$0xf]
        %v797 = vld [vmem:[%s795 + $0x4] sm:$0xf]
        %v800 = vunpack.c.l.b16 %v796
        %v801 = vunpack.c.l.b16 %v797
        %v802 = vpack.c.b16 %v801, %v800
        %v804 = vsel %vm737, %v802, 0
        %806 = vmatprep.subr.bf16.mxu0 0
        %807 = vmatpush1.bf16.msra.mxu0 %v728
        %808 = vmatprep.subr.bf16.mxu0 0
        %809 = vmatpush1.bf16.msra.mxu0 %v729
        %810 = vmatprep.subr.bf16.mxu0 0
        %811 = vmatpush1.bf16.msra.mxu0 0
        %812 = vmatprep.subr.bf16.mxu0 0
        %813 = vmatpush1.bf16.msra.mxu0 0
        %814 = vmatprep.subr.bf16.mxu0 0
        %815 = vmatpush1.bf16.msra.mxu0 0
        %816 = vmatprep.subr.bf16.mxu0 0
        %817 = vmatpush1.bf16.msra.mxu0 0
        %818 = vmatprep.subr.bf16.mxu0 0
        %819 = vmatpush1.bf16.msra.mxu0 0
        %820 = vmatprep.subr.bf16.mxu0 0
        %821 = vmatpush1.bf16.msra.mxu0 0
        %822 = vmatprep.subr.bf16.mxu0 0
        %823 = vmatpush1.bf16.msra.mxu0 0
        %824 = vmatprep.subr.bf16.mxu0 0
        %825 = vmatpush1.bf16.msra.mxu0 0
        %826 = vmatprep.subr.bf16.mxu0 0
        %827 = vmatpush1.bf16.msra.mxu0 0
        %828 = vmatprep.subr.bf16.mxu0 0
        %829 = vmatpush1.bf16.msra.mxu0 0
        %830 = vmatprep.subr.bf16.mxu0 0
        %831 = vmatpush1.bf16.msra.mxu0 0
        %832 = vmatprep.subr.bf16.mxu0 0
        %833 = vmatpush1.bf16.msra.mxu0 0
        %834 = vmatprep.subr.bf16.mxu0 0
        %835 = vmatpush1.bf16.msra.mxu0 0
        %836 = vmatprep.subr.bf16.mxu0 0
        %837 = vmatpush1.bf16.msra.mxu0 0
        %838 = vmatprep.mubr.bf16.mxu0 0
        %839 = vmatmul.mubr.bf16.gmra.mrb[0].mxu0 %v804
        %v840 = vpop.f32.mrb[0].mxu0
        %v841 = vadd.f32 0.0, %v840
        %v842 = vpop.f32.mrb[0].mxu0
        %v843 = vpop.f32.mrb[0].mxu0
        %v844 = vadd.f32 0.0, %v843
        %v845 = vpop.f32.mrb[0].mxu0
        %846 = vdwg.mxu0
        %v847 = vpack.c.bf16 %v844, %v841
        %s848 = scalar_lea.vmem [#allocation5], 48
        %v849 = vld [vmem:[%s848] sm:$0xf]
        %v850 = vld [vmem:[%s848 + $0x4] sm:$0xf]
        %v851 = vld [vmem:[%s848 + $0x8] sm:$0xf]
        %v852 = vld [vmem:[%s848 + $0xc] sm:$0xf]
        %v853 = vld [vmem:[%s848 + $0x10] sm:$0xf]
        %v854 = vld [vmem:[%s848 + $0x14] sm:$0xf]
        %v855 = vld [vmem:[%s848 + $0x18] sm:$0xf]
        %v856 = vld [vmem:[%s848 + $0x1c] sm:$0xf]
        %v857 = vld [vmem:[%s848 + $0x20] sm:$0xf]
        %v858 = vld [vmem:[%s848 + $0x24] sm:$0xf]
        %v859 = vld [vmem:[%s848 + $0x28] sm:$0xf]
        %v860 = vld [vmem:[%s848 + $0x2c] sm:$0xf]
        %v873 = vunpack.c.l.b16 %v849
        %v874 = vunpack.c.l.b16 %v850
        %v875 = vunpack.c.l.b16 %v851
        %v876 = vunpack.c.l.b16 %v852
        %v877 = vunpack.c.l.b16 %v853
        %v878 = vunpack.c.l.b16 %v854
        %v879 = vunpack.c.l.b16 %v855
        %v880 = vunpack.c.l.b16 %v856
        %v881 = vunpack.c.l.b16 %v857
        %v882 = vunpack.c.l.b16 %v858
        %v883 = vunpack.c.l.b16 %v859
        %v884 = vunpack.c.l.b16 %v860
        %v885 = vpack.c.b16 %v874, %v873
        %v886 = vpack.c.b16 %v876, %v875
        %v887 = vpack.c.b16 %v878, %v877
        %v888 = vpack.c.b16 %v880, %v879
        %v889 = vpack.c.b16 %v882, %v881
        %v890 = vpack.c.b16 %v884, %v883
        %vm897 = vcmask 785408
        %v899 = vsel %vm897, %v847, 0
        %901 = vmatprep.subr.bf16.mxu0 0
        %902 = vmatpush1.bf16.msra.mxu0 %v885
        %903 = vmatprep.subr.bf16.mxu0 0
        %904 = vmatpush1.bf16.msra.mxu0 %v886
        %905 = vmatprep.subr.bf16.mxu0 0
        %906 = vmatpush1.bf16.msra.mxu0 %v887
        %907 = vmatprep.subr.bf16.mxu0 0
        %908 = vmatpush1.bf16.msra.mxu0 %v888
        %909 = vmatprep.subr.bf16.mxu0 0
        %910 = vmatpush1.bf16.msra.mxu0 %v889
        %911 = vmatprep.subr.bf16.mxu0 0
        %912 = vmatpush1.bf16.msra.mxu0 %v890
        %913 = vmatprep.subr.bf16.mxu0 0
        %914 = vmatpush1.bf16.msra.mxu0 0
        %915 = vmatprep.subr.bf16.mxu0 0
        %916 = vmatpush1.bf16.msra.mxu0 0
        %917 = vmatprep.subr.bf16.mxu0 0
        %918 = vmatpush1.bf16.msra.mxu0 0
        %919 = vmatprep.subr.bf16.mxu0 0
        %920 = vmatpush1.bf16.msra.mxu0 0
        %921 = vmatprep.subr.bf16.mxu0 0
        %922 = vmatpush1.bf16.msra.mxu0 0
        %923 = vmatprep.subr.bf16.mxu0 0
        %924 = vmatpush1.bf16.msra.mxu0 0
        %925 = vmatprep.subr.bf16.mxu0 0
        %926 = vmatpush1.bf16.msra.mxu0 0
        %927 = vmatprep.subr.bf16.mxu0 0
        %928 = vmatpush1.bf16.msra.mxu0 0
        %929 = vmatprep.subr.bf16.mxu0 0
        %930 = vmatpush1.bf16.msra.mxu0 0
        %931 = vmatprep.subr.bf16.mxu0 0
        %932 = vmatpush1.bf16.msra.mxu0 0
        %933 = vmatprep.mubr.bf16.mxu0 0
        %934 = vmatmul.mubr.bf16.gmra.mrb[0].mxu0 %v899
        %v935 = vpop.f32.mrb[0].mxu0
        %v936 = vadd.f32 0.0, %v935
        %v937 = vpop.f32.mrb[0].mxu0
        %v938 = vpop.f32.mrb[0].mxu0
        %v939 = vadd.f32 0.0, %v938
        %v940 = vpop.f32.mrb[0].mxu0
        %941 = vdwg.mxu0
        %v954 = vunpack.c.l.b16 %v783
        %v955 = vunpack.c.l.b16 %v784
        %v956 = vunpack.c.l.b16 %v785
        %v957 = vunpack.c.l.b16 %v786
        %v958 = vunpack.c.l.b16 %v787
        %v959 = vunpack.c.l.b16 %v788
        %v960 = vunpack.c.l.b16 %v789
        %v961 = vunpack.c.l.b16 %v790
        %v962 = vunpack.c.l.b16 %v791
        %v963 = vunpack.c.l.b16 %v792
        %v964 = vunpack.c.l.b16 %v793
        %v965 = vunpack.c.l.b16 %v794
        %v966 = vpack.c.b16 %v955, %v954
        %v967 = vpack.c.b16 %v957, %v956
        %v968 = vpack.c.b16 %v959, %v958
        %v969 = vpack.c.b16 %v961, %v960
        %v970 = vpack.c.b16 %v963, %v962
        %v971 = vpack.c.b16 %v965, %v964
        %v979 = vsel %vm897, %v782, 0
        %981 = vmatprep.subr.bf16.mxu0 0
        %982 = vmatpush1.bf16.msra.mxu0 %v966
        %983 = vmatprep.subr.bf16.mxu0 0
        %984 = vmatpush1.bf16.msra.mxu0 %v967
        %985 = vmatprep.subr.bf16.mxu0 0
        %986 = vmatpush1.bf16.msra.mxu0 %v968
        %987 = vmatprep.subr.bf16.mxu0 0
        %988 = vmatpush1.bf16.msra.mxu0 %v969
        %989 = vmatprep.subr.bf16.mxu0 0
        %990 = vmatpush1.bf16.msra.mxu0 %v970
        %991 = vmatprep.subr.bf16.mxu0 0
        %992 = vmatpush1.bf16.msra.mxu0 %v971
        %993 = vmatprep.subr.bf16.mxu0 0
        %994 = vmatpush1.bf16.msra.mxu0 0
        %995 = vmatprep.subr.bf16.mxu0 0
        %996 = vmatpush1.bf16.msra.mxu0 0
        %997 = vmatprep.subr.bf16.mxu0 0
        %998 = vmatpush1.bf16.msra.mxu0 0
        %999 = vmatprep.subr.bf16.mxu0 0
        %1000 = vmatpush1.bf16.msra.mxu0 0
        %1001 = vmatprep.subr.bf16.mxu0 0
        %1002 = vmatpush1.bf16.msra.mxu0 0
        %1003 = vmatprep.subr.bf16.mxu0 0
        %1004 = vmatpush1.bf16.msra.mxu0 0
        %1005 = vmatprep.subr.bf16.mxu0 0
        %1006 = vmatpush1.bf16.msra.mxu0 0
        %1007 = vmatprep.subr.bf16.mxu0 0
        %1008 = vmatpush1.bf16.msra.mxu0 0
        %1009 = vmatprep.subr.bf16.mxu0 0
        %1010 = vmatpush1.bf16.msra.mxu0 0
        %1011 = vmatprep.subr.bf16.mxu0 0
        %1012 = vmatpush1.bf16.msra.mxu0 0
        %1013 = vmatprep.mubr.bf16.mxu0 0
        %1014 = vmatmul.mubr.bf16.gmra.mrb[0].mxu0 %v979
        %v1015 = vpop.f32.mrb[0].mxu0
        %v1016 = vadd.f32 %v936, %v1015
        %v1017 = vpop.f32.mrb[0].mxu0
        %v1018 = vpop.f32.mrb[0].mxu0
        %v1019 = vadd.f32 %v939, %v1018
        %v1020 = vpop.f32.mrb[0].mxu0
        %1021 = vdwg.mxu0
        %s1022 = scalar_lea.vmem [#allocation7], 16
        %v1023 = vld [vmem:[%s1022] sm:$0xf]
        %v1024 = vld [vmem:[%s1022 + $0x4] sm:$0xf]
        %v1027 = vunpack.c.l.b16 %v1023
        %v1028 = vunpack.c.l.b16 %v1024
        %v1029 = vpack.c.b16 %v1028, %v1027
        %v1031 = vsel %vm737, %v1029, 0
        %1033 = vmatprep.subr.bf16.mxu0 0
        %1034 = vmatpush1.bf16.msra.mxu0 %v728
        %1035 = vmatprep.subr.bf16.mxu0 0
        %1036 = vmatpush1.bf16.msra.mxu0 %v729
        %1037 = vmatprep.subr.bf16.mxu0 0
        %1038 = vmatpush1.bf16.msra.mxu0 0
        %1039 = vmatprep.subr.bf16.mxu0 0
        %1040 = vmatpush1.bf16.msra.mxu0 0
        %1041 = vmatprep.subr.bf16.mxu0 0
        %1042 = vmatpush1.bf16.msra.mxu0 0
        %1043 = vmatprep.subr.bf16.mxu0 0
        %1044 = vmatpush1.bf16.msra.mxu0 0
        %1045 = vmatprep.subr.bf16.mxu0 0
        %1046 = vmatpush1.bf16.msra.mxu0 0
        %1047 = vmatprep.subr.bf16.mxu0 0
        %1048 = vmatpush1.bf16.msra.mxu0 0
        %1049 = vmatprep.subr.bf16.mxu0 0
        %1050 = vmatpush1.bf16.msra.mxu0 0
        %1051 = vmatprep.subr.bf16.mxu0 0
        %1052 = vmatpush1.bf16.msra.mxu0 0
        %1053 = vmatprep.subr.bf16.mxu0 0
        %1054 = vmatpush1.bf16.msra.mxu0 0
        %1055 = vmatprep.subr.bf16.mxu0 0
        %1056 = vmatpush1.bf16.msra.mxu0 0
        %1057 = vmatprep.subr.bf16.mxu0 0
        %1058 = vmatpush1.bf16.msra.mxu0 0
        %1059 = vmatprep.subr.bf16.mxu0 0
        %1060 = vmatpush1.bf16.msra.mxu0 0
        %1061 = vmatprep.subr.bf16.mxu0 0
        %1062 = vmatpush1.bf16.msra.mxu0 0
        %1063 = vmatprep.subr.bf16.mxu0 0
        %1064 = vmatpush1.bf16.msra.mxu0 0
        %1065 = vmatprep.mubr.bf16.mxu0 0
        %1066 = vmatmul.mubr.bf16.gmra.mrb[0].mxu0 %v1031
        %v1067 = vpop.f32.mrb[0].mxu0
        %v1068 = vadd.f32 0.0, %v1067
        %v1069 = vpop.f32.mrb[0].mxu0
        %v1070 = vpop.f32.mrb[0].mxu0
        %v1071 = vadd.f32 0.0, %v1070
        %v1072 = vpop.f32.mrb[0].mxu0
        %1073 = vdwg.mxu0
        %v1074 = vpack.c.bf16 %v1071, %v1068
        %s1075 = scalar_lea.vmem [#allocation5], 96
        %v1076 = vld [vmem:[%s1075] sm:$0xf]
        %v1077 = vld [vmem:[%s1075 + $0x4] sm:$0xf]
        %v1078 = vld [vmem:[%s1075 + $0x8] sm:$0xf]
        %v1079 = vld [vmem:[%s1075 + $0xc] sm:$0xf]
        %v1080 = vld [vmem:[%s1075 + $0x10] sm:$0xf]
        %v1081 = vld [vmem:[%s1075 + $0x14] sm:$0xf]
        %v1082 = vld [vmem:[%s1075 + $0x18] sm:$0xf]
        %v1083 = vld [vmem:[%s1075 + $0x1c] sm:$0xf]
        %v1084 = vld [vmem:[%s1075 + $0x20] sm:$0xf]
        %v1085 = vld [vmem:[%s1075 + $0x24] sm:$0xf]
        %v1086 = vld [vmem:[%s1075 + $0x28] sm:$0xf]
        %v1087 = vld [vmem:[%s1075 + $0x2c] sm:$0xf]
        %v1100 = vunpack.c.l.b16 %v1076
        %v1101 = vunpack.c.l.b16 %v1077
        %v1102 = vunpack.c.l.b16 %v1078
        %v1103 = vunpack.c.l.b16 %v1079
        %v1104 = vunpack.c.l.b16 %v1080
        %v1105 = vunpack.c.l.b16 %v1081
        %v1106 = vunpack.c.l.b16 %v1082
        %v1107 = vunpack.c.l.b16 %v1083
        %v1108 = vunpack.c.l.b16 %v1084
        %v1109 = vunpack.c.l.b16 %v1085
        %v1110 = vunpack.c.l.b16 %v1086
        %v1111 = vunpack.c.l.b16 %v1087
        %v1112 = vpack.c.b16 %v1101, %v1100
        %v1113 = vpack.c.b16 %v1103, %v1102
        %v1114 = vpack.c.b16 %v1105, %v1104
        %v1115 = vpack.c.b16 %v1107, %v1106
        %v1116 = vpack.c.b16 %v1109, %v1108
        %v1117 = vpack.c.b16 %v1111, %v1110
        %v1125 = vsel %vm897, %v1074, 0
        %1127 = vmatprep.subr.bf16.mxu0 0
        %1128 = vmatpush1.bf16.msra.mxu0 %v1112
        %1129 = vmatprep.subr.bf16.mxu0 0
        %1130 = vmatpush1.bf16.msra.mxu0 %v1113
        %1131 = vmatprep.subr.bf16.mxu0 0
        %1132 = vmatpush1.bf16.msra.mxu0 %v1114
        %1133 = vmatprep.subr.bf16.mxu0 0
        %1134 = vmatpush1.bf16.msra.mxu0 %v1115
        %1135 = vmatprep.subr.bf16.mxu0 0
        %1136 = vmatpush1.bf16.msra.mxu0 %v1116
        %1137 = vmatprep.subr.bf16.mxu0 0
        %1138 = vmatpush1.bf16.msra.mxu0 %v1117
        %1139 = vmatprep.subr.bf16.mxu0 0
        %1140 = vmatpush1.bf16.msra.mxu0 0
        %1141 = vmatprep.subr.bf16.mxu0 0
        %1142 = vmatpush1.bf16.msra.mxu0 0
        %1143 = vmatprep.subr.bf16.mxu0 0
        %1144 = vmatpush1.bf16.msra.mxu0 0
        %1145 = vmatprep.subr.bf16.mxu0 0
        %1146 = vmatpush1.bf16.msra.mxu0 0
        %1147 = vmatprep.subr.bf16.mxu0 0
        %1148 = vmatpush1.bf16.msra.mxu0 0
        %1149 = vmatprep.subr.bf16.mxu0 0
        %1150 = vmatpush1.bf16.msra.mxu0 0
        %1151 = vmatprep.subr.bf16.mxu0 0
        %1152 = vmatpush1.bf16.msra.mxu0 0
        %1153 = vmatprep.subr.bf16.mxu0 0
        %1154 = vmatpush1.bf16.msra.mxu0 0
        %1155 = vmatprep.subr.bf16.mxu0 0
        %1156 = vmatpush1.bf16.msra.mxu0 0
        %1157 = vmatprep.subr.bf16.mxu0 0
        %1158 = vmatpush1.bf16.msra.mxu0 0
        %1159 = vmatprep.mubr.bf16.mxu0 0
        %1160 = vmatmul.mubr.bf16.gmra.mrb[0].mxu0 %v1125
        %v1161 = vpop.f32.mrb[0].mxu0
        %v1162 = vadd.f32 0.0, %v1161
        %v1163 = vpop.f32.mrb[0].mxu0
        %v1164 = vpop.f32.mrb[0].mxu0
        %v1165 = vadd.f32 0.0, %v1164
        %v1166 = vpop.f32.mrb[0].mxu0
        %1167 = vdwg.mxu0
        %v1168 = vadd.f32 %v1016, %v1162
        %v1169 = vadd.f32 %v1019, %v1165
        %s1170 = scalar_lea.vmem [#allocation7], 24
        %v1171 = vld [vmem:[%s1170] sm:$0xf]
        %v1172 = vld [vmem:[%s1170 + $0x4] sm:$0xf]
        %v1175 = vunpack.c.l.b16 %v1171
        %v1176 = vunpack.c.l.b16 %v1172
        %v1177 = vpack.c.b16 %v1176, %v1175
        %v1179 = vsel %vm737, %v1177, 0
        %1181 = vmatprep.subr.bf16.mxu0 0
        %1182 = vmatpush1.bf16.msra.mxu0 %v728
        %1183 = vmatprep.subr.bf16.mxu0 0
        %1184 = vmatpush1.bf16.msra.mxu0 %v729
        %1185 = vmatprep.subr.bf16.mxu0 0
        %1186 = vmatpush1.bf16.msra.mxu0 0
        %1187 = vmatprep.subr.bf16.mxu0 0
        %1188 = vmatpush1.bf16.msra.mxu0 0
        %1189 = vmatprep.subr.bf16.mxu0 0
        %1190 = vmatpush1.bf16.msra.mxu0 0
        %1191 = vmatprep.subr.bf16.mxu0 0
        %1192 = vmatpush1.bf16.msra.mxu0 0
        %1193 = vmatprep.subr.bf16.mxu0 0
        %1194 = vmatpush1.bf16.msra.mxu0 0
        %1195 = vmatprep.subr.bf16.mxu0 0
        %1196 = vmatpush1.bf16.msra.mxu0 0
        %1197 = vmatprep.subr.bf16.mxu0 0
        %1198 = vmatpush1.bf16.msra.mxu0 0
        %1199 = vmatprep.subr.bf16.mxu0 0
        %1200 = vmatpush1.bf16.msra.mxu0 0
        %1201 = vmatprep.subr.bf16.mxu0 0
        %1202 = vmatpush1.bf16.msra.mxu0 0
        %1203 = vmatprep.subr.bf16.mxu0 0
        %1204 = vmatpush1.bf16.msra.mxu0 0
        %1205 = vmatprep.subr.bf16.mxu0 0
        %1206 = vmatpush1.bf16.msra.mxu0 0
        %1207 = vmatprep.subr.bf16.mxu0 0
        %1208 = vmatpush1.bf16.msra.mxu0 0
        %1209 = vmatprep.subr.bf16.mxu0 0
        %1210 = vmatpush1.bf16.msra.mxu0 0
        %1211 = vmatprep.subr.bf16.mxu0 0
        %1212 = vmatpush1.bf16.msra.mxu0 0
        %1213 = vmatprep.mubr.bf16.mxu0 0
        %1214 = vmatmul.mubr.bf16.gmra.mrb[0].mxu0 %v1179
        %v1215 = vpop.f32.mrb[0].mxu0
        %v1216 = vadd.f32 0.0, %v1215
        %v1217 = vpop.f32.mrb[0].mxu0
        %v1218 = vpop.f32.mrb[0].mxu0
        %v1219 = vadd.f32 0.0, %v1218
        %v1220 = vpop.f32.mrb[0].mxu0
        %1221 = vdwg.mxu0
        %v1222 = vpack.c.bf16 %v1219, %v1216
        %s1223 = scalar_lea.vmem [#allocation5], 144
        %v1224 = vld [vmem:[%s1223] sm:$0xf]
        %v1225 = vld [vmem:[%s1223 + $0x4] sm:$0xf]
        %v1226 = vld [vmem:[%s1223 + $0x8] sm:$0xf]
        %v1227 = vld [vmem:[%s1223 + $0xc] sm:$0xf]
        %v1228 = vld [vmem:[%s1223 + $0x10] sm:$0xf]
        %v1229 = vld [vmem:[%s1223 + $0x14] sm:$0xf]
        %v1230 = vld [vmem:[%s1223 + $0x18] sm:$0xf]
        %v1231 = vld [vmem:[%s1223 + $0x1c] sm:$0xf]
        %v1232 = vld [vmem:[%s1223 + $0x20] sm:$0xf]
        %v1233 = vld [vmem:[%s1223 + $0x24] sm:$0xf]
        %v1234 = vld [vmem:[%s1223 + $0x28] sm:$0xf]
        %v1235 = vld [vmem:[%s1223 + $0x2c] sm:$0xf]
        %v1248 = vunpack.c.l.b16 %v1224
        %v1249 = vunpack.c.l.b16 %v1225
        %v1250 = vunpack.c.l.b16 %v1226
        %v1251 = vunpack.c.l.b16 %v1227
        %v1252 = vunpack.c.l.b16 %v1228
        %v1253 = vunpack.c.l.b16 %v1229
        %v1254 = vunpack.c.l.b16 %v1230
        %v1255 = vunpack.c.l.b16 %v1231
        %v1256 = vunpack.c.l.b16 %v1232
        %v1257 = vunpack.c.l.b16 %v1233
        %v1258 = vunpack.c.l.b16 %v1234
        %v1259 = vunpack.c.l.b16 %v1235
        %v1260 = vpack.c.b16 %v1249, %v1248
        %v1261 = vpack.c.b16 %v1251, %v1250
        %v1262 = vpack.c.b16 %v1253, %v1252
        %v1263 = vpack.c.b16 %v1255, %v1254
        %v1264 = vpack.c.b16 %v1257, %v1256
        %v1265 = vpack.c.b16 %v1259, %v1258
        %v1273 = vsel %vm897, %v1222, 0
        %1275 = vmatprep.subr.bf16.mxu0 0
        %1276 = vmatpush1.bf16.msra.mxu0 %v1260
        %1277 = vmatprep.subr.bf16.mxu0 0
        %1278 = vmatpush1.bf16.msra.mxu0 %v1261
        %1279 = vmatprep.subr.bf16.mxu0 0
        %1280 = vmatpush1.bf16.msra.mxu0 %v1262
        %1281 = vmatprep.subr.bf16.mxu0 0
        %1282 = vmatpush1.bf16.msra.mxu0 %v1263
        %1283 = vmatprep.subr.bf16.mxu0 0
        %1284 = vmatpush1.bf16.msra.mxu0 %v1264
        %1285 = vmatprep.subr.bf16.mxu0 0
        %1286 = vmatpush1.bf16.msra.mxu0 %v1265
        %1287 = vmatprep.subr.bf16.mxu0 0
        %1288 = vmatpush1.bf16.msra.mxu0 0
        %1289 = vmatprep.subr.bf16.mxu0 0
        %1290 = vmatpush1.bf16.msra.mxu0 0
        %1291 = vmatprep.subr.bf16.mxu0 0
        %1292 = vmatpush1.bf16.msra.mxu0 0
        %1293 = vmatprep.subr.bf16.mxu0 0
        %1294 = vmatpush1.bf16.msra.mxu0 0
        %1295 = vmatprep.subr.bf16.mxu0 0
        %1296 = vmatpush1.bf16.msra.mxu0 0
        %1297 = vmatprep.subr.bf16.mxu0 0
        %1298 = vmatpush1.bf16.msra.mxu0 0
        %1299 = vmatprep.subr.bf16.mxu0 0
        %1300 = vmatpush1.bf16.msra.mxu0 0
        %1301 = vmatprep.subr.bf16.mxu0 0
        %1302 = vmatpush1.bf16.msra.mxu0 0
        %1303 = vmatprep.subr.bf16.mxu0 0
        %1304 = vmatpush1.bf16.msra.mxu0 0
        %1305 = vmatprep.subr.bf16.mxu0 0
        %1306 = vmatpush1.bf16.msra.mxu0 0
        %1307 = vmatprep.mubr.bf16.mxu0 0
        %1308 = vmatmul.mubr.bf16.gmra.mrb[0].mxu0 %v1273
        %v1309 = vpop.f32.mrb[0].mxu0
        %v1310 = vadd.f32 0.0, %v1309
        %v1311 = vpop.f32.mrb[0].mxu0
        %v1312 = vpop.f32.mrb[0].mxu0
        %v1313 = vadd.f32 0.0, %v1312
        %v1314 = vpop.f32.mrb[0].mxu0
        %1315 = vdwg.mxu0
        %v1316 = vadd.f32 %v1168, %v1310
        %v1317 = vadd.f32 %v1169, %v1313
        %v1318 = vld [vmem:[%s3] sm:$0x1]
        %v1320 = vlaneseq
        %v1321 = vshrl.u32 %v1320, 7
        %v1322 = vsub.s32 0, %v1321
        %v1323 = vrot.slane %v1318, %v1322
        %v1325 = vadd.f32 %v1316, %v1323
        %v1326 = vadd.f32 %v1317, %v1323
        %vm1327 = vcmp.ge.f32.partialorder %v1325, 0.0
        %vm1328 = vcmp.ge.f32.partialorder %v1326, 0.0
        %v1329 = vmul.f32 %v1325, 0.2
        %v1330 = vmul.f32 %v1326, 0.2
        %v1331 = vsel %vm1327, %v1325, %v1329
        %v1332 = vsel %vm1328, %v1326, %v1330
        %v1333 = vpack.c.bf16 %v1332, %v1331
        %v1334 = vld [vmem:[%s5] sm:$0xf]
        %vm1335 = vcmask 130048
        %v1337 = vsel %vm1335, %v1334, 0
        %1339 = vmatprep.subr.bf16.mxu0 0
        %1340 = vmatpush1.bf16.msra.mxu0 %v1333
        %1341 = vmatprep.subr.bf16.mxu0 0
        %1342 = vmatpush1.bf16.msra.mxu0 0
        %1343 = vmatprep.subr.bf16.mxu0 0
        %1344 = vmatpush1.bf16.msra.mxu0 0
        %1345 = vmatprep.subr.bf16.mxu0 0
        %1346 = vmatpush1.bf16.msra.mxu0 0
        %1347 = vmatprep.subr.bf16.mxu0 0
        %1348 = vmatpush1.bf16.msra.mxu0 0
        %1349 = vmatprep.subr.bf16.mxu0 0
        %1350 = vmatpush1.bf16.msra.mxu0 0
        %1351 = vmatprep.subr.bf16.mxu0 0
        %1352 = vmatpush1.bf16.msra.mxu0 0
        %1353 = vmatprep.subr.bf16.mxu0 0
        %1354 = vmatpush1.bf16.msra.mxu0 0
        %1355 = vmatprep.subr.bf16.mxu0 0
        %1356 = vmatpush1.bf16.msra.mxu0 0
        %1357 = vmatprep.subr.bf16.mxu0 0
        %1358 = vmatpush1.bf16.msra.mxu0 0
        %1359 = vmatprep.subr.bf16.mxu0 0
        %1360 = vmatpush1.bf16.msra.mxu0 0
        %1361 = vmatprep.subr.bf16.mxu0 0
        %1362 = vmatpush1.bf16.msra.mxu0 0
        %1363 = vmatprep.subr.bf16.mxu0 0
        %1364 = vmatpush1.bf16.msra.mxu0 0
        %1365 = vmatprep.subr.bf16.mxu0 0
        %1366 = vmatpush1.bf16.msra.mxu0 0
        %1367 = vmatprep.subr.bf16.mxu0 0
        %1368 = vmatpush1.bf16.msra.mxu0 0
        %1369 = vmatprep.subr.bf16.mxu0 0
        %1370 = vmatpush1.bf16.msra.mxu0 0
        %1371 = vmatprep.mubr.bf16.mxu0 0
        %1372 = vmatmul.mubr.bf16.gmra.mrb[0].mxu0 %v1337
        %v1373 = vpop.f32.mrb[0].mxu0
        %v1374 = vadd.f32 0.0, %v1373
        %v1375 = vpop.f32.mrb[0].mxu0
        %v1376 = vpop.f32.mrb[0].mxu0
        %v1377 = vpop.f32.mrb[0].mxu0
        %1378 = vdwg.mxu0
        %v1379 = vpack.c.bf16 %v1374, %v1374
        %v1380 = vld [vmem:[%s4] sm:$0xf]
        %v1381 = vld [vmem:[%s4 + $0x4] sm:$0xf]
        %v1382 = vld [vmem:[%s4 + $0x8] sm:$0xf]
        %v1383 = vld [vmem:[%s4 + $0xc] sm:$0xf]
        %v1384 = vld [vmem:[%s4 + $0x10] sm:$0xf]
        %v1385 = vld [vmem:[%s4 + $0x14] sm:$0xf]
        %v1386 = vld [vmem:[%s4 + $0x18] sm:$0xf]
        %v1387 = vld [vmem:[%s4 + $0x1c] sm:$0xf]
        %v1388 = vld [vmem:[%s4 + $0x20] sm:$0xf]
        %v1389 = vld [vmem:[%s4 + $0x24] sm:$0xf]
        %v1390 = vld [vmem:[%s4 + $0x28] sm:$0xf]
        %v1391 = vld [vmem:[%s4 + $0x2c] sm:$0xf]
        %v1392 = vld [vmem:[%s4 + $0x30] sm:$0xf]
        %v1393 = vld [vmem:[%s4 + $0x34] sm:$0xf]
        %v1394 = vld [vmem:[%s4 + $0x38] sm:$0xf]
        %v1395 = vld [vmem:[%s4 + $0x3c] sm:$0xf]
        %s1396 = scalar_lea.vmem %s5, 4
        %v1397 = vld [vmem:[%s1396] sm:$0xf]
        %v1399 = vsel %vm1335, %v1397, 0
        %1401 = vmatprep.subr.bf16.mxu0 0
        %1402 = vmatpush1.bf16.msra.mxu0 %v1333
        %1403 = vmatprep.subr.bf16.mxu0 0
        %1404 = vmatpush1.bf16.msra.mxu0 0
        %1405 = vmatprep.subr.bf16.mxu0 0
        %1406 = vmatpush1.bf16.msra.mxu0 0
        %1407 = vmatprep.subr.bf16.mxu0 0
        %1408 = vmatpush1.bf16.msra.mxu0 0
        %1409 = vmatprep.subr.bf16.mxu0 0
        %1410 = vmatpush1.bf16.msra.mxu0 0
        %1411 = vmatprep.subr.bf16.mxu0 0
        %1412 = vmatpush1.bf16.msra.mxu0 0
        %1413 = vmatprep.subr.bf16.mxu0 0
        %1414 = vmatpush1.bf16.msra.mxu0 0
        %1415 = vmatprep.subr.bf16.mxu0 0
        %1416 = vmatpush1.bf16.msra.mxu0 0
        %1417 = vmatprep.subr.bf16.mxu0 0
        %1418 = vmatpush1.bf16.msra.mxu0 0
        %1419 = vmatprep.subr.bf16.mxu0 0
        %1420 = vmatpush1.bf16.msra.mxu0 0
        %1421 = vmatprep.subr.bf16.mxu0 0
        %1422 = vmatpush1.bf16.msra.mxu0 0
        %1423 = vmatprep.subr.bf16.mxu0 0
        %1424 = vmatpush1.bf16.msra.mxu0 0
        %1425 = vmatprep.subr.bf16.mxu0 0
        %1426 = vmatpush1.bf16.msra.mxu0 0
        %1427 = vmatprep.subr.bf16.mxu0 0
        %1428 = vmatpush1.bf16.msra.mxu0 0
        %1429 = vmatprep.subr.bf16.mxu0 0
        %1430 = vmatpush1.bf16.msra.mxu0 0
        %1431 = vmatprep.subr.bf16.mxu0 0
        %1432 = vmatpush1.bf16.msra.mxu0 0
        %1433 = vmatprep.mubr.bf16.mxu0 0
        %1434 = vmatmul.mubr.bf16.gmra.mrb[0].mxu0 %v1399
        %v1435 = vpop.f32.mrb[0].mxu0
        %v1436 = vadd.f32 0.0, %v1435
        %v1437 = vpop.f32.mrb[0].mxu0
        %v1438 = vpop.f32.mrb[0].mxu0
        %v1439 = vpop.f32.mrb[0].mxu0
        %1440 = vdwg.mxu0
        %v1441 = vpack.c.bf16 %v1436, %v1436
        %s1442 = scalar_lea.vmem %s4, 64
        %v1443 = vld [vmem:[%s1442] sm:$0xf]
        %v1444 = vld [vmem:[%s1442 + $0x4] sm:$0xf]
        %v1445 = vld [vmem:[%s1442 + $0x8] sm:$0xf]
        %v1446 = vld [vmem:[%s1442 + $0xc] sm:$0xf]
        %v1447 = vld [vmem:[%s1442 + $0x10] sm:$0xf]
        %v1448 = vld [vmem:[%s1442 + $0x14] sm:$0xf]
        %v1449 = vld [vmem:[%s1442 + $0x18] sm:$0xf]
        %v1450 = vld [vmem:[%s1442 + $0x1c] sm:$0xf]
        %v1451 = vld [vmem:[%s1442 + $0x20] sm:$0xf]
        %v1452 = vld [vmem:[%s1442 + $0x24] sm:$0xf]
        %v1453 = vld [vmem:[%s1442 + $0x28] sm:$0xf]
        %v1454 = vld [vmem:[%s1442 + $0x2c] sm:$0xf]
        %v1455 = vld [vmem:[%s1442 + $0x30] sm:$0xf]
        %v1456 = vld [vmem:[%s1442 + $0x34] sm:$0xf]
        %v1457 = vld [vmem:[%s1442 + $0x38] sm:$0xf]
        %v1458 = vld [vmem:[%s1442 + $0x3c] sm:$0xf]
        %v1475 = vunpack.c.l.b16 %v1443
        %v1476 = vunpack.c.l.b16 %v1444
        %v1477 = vunpack.c.l.b16 %v1445
        %v1478 = vunpack.c.l.b16 %v1446
        %v1479 = vunpack.c.l.b16 %v1447
        %v1480 = vunpack.c.l.b16 %v1448
        %v1481 = vunpack.c.l.b16 %v1449
        %v1482 = vunpack.c.l.b16 %v1450
        %v1483 = vunpack.c.l.b16 %v1451
        %v1484 = vunpack.c.l.b16 %v1452
        %v1485 = vunpack.c.l.b16 %v1453
        %v1486 = vunpack.c.l.b16 %v1454
        %v1487 = vunpack.c.l.b16 %v1455
        %v1488 = vunpack.c.l.b16 %v1456
        %v1489 = vunpack.c.l.b16 %v1457
        %v1490 = vunpack.c.l.b16 %v1458
        %v1491 = vpack.c.b16 %v1476, %v1475
        %v1492 = vpack.c.b16 %v1478, %v1477
        %v1493 = vpack.c.b16 %v1480, %v1479
        %v1494 = vpack.c.b16 %v1482, %v1481
        %v1495 = vpack.c.b16 %v1484, %v1483
        %v1496 = vpack.c.b16 %v1486, %v1485
        %v1497 = vpack.c.b16 %v1488, %v1487
        %v1498 = vpack.c.b16 %v1490, %v1489
        %1507 = vmatprep.subr.bf16.mxu0 0
        %1508 = vmatpush1.bf16.msra.mxu0 %v1491
        %1509 = vmatprep.subr.bf16.mxu0 0
        %1510 = vmatpush1.bf16.msra.mxu0 %v1492
        %1511 = vmatprep.subr.bf16.mxu0 0
        %1512 = vmatpush1.bf16.msra.mxu0 %v1493
        %1513 = vmatprep.subr.bf16.mxu0 0
        %1514 = vmatpush1.bf16.msra.mxu0 %v1494
        %1515 = vmatprep.subr.bf16.mxu0 0
        %1516 = vmatpush1.bf16.msra.mxu0 %v1495
        %1517 = vmatprep.subr.bf16.mxu0 0
        %1518 = vmatpush1.bf16.msra.mxu0 %v1496
        %1519 = vmatprep.subr.bf16.mxu0 0
        %1520 = vmatpush1.bf16.msra.mxu0 %v1497
        %1521 = vmatprep.subr.bf16.mxu0 0
        %1522 = vmatpush1.bf16.msra.mxu0 %v1498
        %1523 = vmatprep.subr.bf16.mxu0 0
        %1524 = vmatpush1.bf16.msra.mxu0 0
        %1525 = vmatprep.subr.bf16.mxu0 0
        %1526 = vmatpush1.bf16.msra.mxu0 0
        %1527 = vmatprep.subr.bf16.mxu0 0
        %1528 = vmatpush1.bf16.msra.mxu0 0
        %1529 = vmatprep.subr.bf16.mxu0 0
        %1530 = vmatpush1.bf16.msra.mxu0 0
        %1531 = vmatprep.subr.bf16.mxu0 0
        %1532 = vmatpush1.bf16.msra.mxu0 0
        %1533 = vmatprep.subr.bf16.mxu0 0
        %1534 = vmatpush1.bf16.msra.mxu0 0
        %1535 = vmatprep.subr.bf16.mxu0 0
        %1536 = vmatpush1.bf16.msra.mxu0 0
        %1537 = vmatprep.subr.bf16.mxu0 0
        %1538 = vmatpush1.bf16.msra.mxu0 0
        %1539 = vmatprep.mubr.bf16.mxu0 0
        %1540 = vmatmul.mubr.bf16.gmra.mrb[0].mxu0 %v1441
        %v1541 = vpop.f32.mrb[0].mxu0
        %v1542 = vadd.f32 0.0, %v1541
        %v1543 = vpop.f32.mrb[0].mxu0
        %v1544 = vpop.f32.mrb[0].mxu0
        %v1545 = vpop.f32.mrb[0].mxu0
        %1546 = vdwg.mxu0
        %v1563 = vunpack.c.l.b16 %v1380
        %v1564 = vunpack.c.l.b16 %v1381
        %v1565 = vunpack.c.l.b16 %v1382
        %v1566 = vunpack.c.l.b16 %v1383
        %v1567 = vunpack.c.l.b16 %v1384
        %v1568 = vunpack.c.l.b16 %v1385
        %v1569 = vunpack.c.l.b16 %v1386
        %v1570 = vunpack.c.l.b16 %v1387
        %v1571 = vunpack.c.l.b16 %v1388
        %v1572 = vunpack.c.l.b16 %v1389
        %v1573 = vunpack.c.l.b16 %v1390
        %v1574 = vunpack.c.l.b16 %v1391
        %v1575 = vunpack.c.l.b16 %v1392
        %v1576 = vunpack.c.l.b16 %v1393
        %v1577 = vunpack.c.l.b16 %v1394
        %v1578 = vunpack.c.l.b16 %v1395
        %v1579 = vpack.c.b16 %v1564, %v1563
        %v1580 = vpack.c.b16 %v1566, %v1565
        %v1581 = vpack.c.b16 %v1568, %v1567
        %v1582 = vpack.c.b16 %v1570, %v1569
        %v1583 = vpack.c.b16 %v1572, %v1571
        %v1584 = vpack.c.b16 %v1574, %v1573
        %v1585 = vpack.c.b16 %v1576, %v1575
        %v1586 = vpack.c.b16 %v1578, %v1577
        %1595 = vmatprep.subr.bf16.mxu0 0
        %1596 = vmatpush1.bf16.msra.mxu0 %v1579
        %1597 = vmatprep.subr.bf16.mxu0 0
        %1598 = vmatpush1.bf16.msra.mxu0 %v1580
        %1599 = vmatprep.subr.bf16.mxu0 0
        %1600 = vmatpush1.bf16.msra.mxu0 %v1581
        %1601 = vmatprep.subr.bf16.mxu0 0
        %1602 = vmatpush1.bf16.msra.mxu0 %v1582
        %1603 = vmatprep.subr.bf16.mxu0 0
        %1604 = vmatpush1.bf16.msra.mxu0 %v1583
        %1605 = vmatprep.subr.bf16.mxu0 0
        %1606 = vmatpush1.bf16.msra.mxu0 %v1584
        %1607 = vmatprep.subr.bf16.mxu0 0
        %1608 = vmatpush1.bf16.msra.mxu0 %v1585
        %1609 = vmatprep.subr.bf16.mxu0 0
        %1610 = vmatpush1.bf16.msra.mxu0 %v1586
        %1611 = vmatprep.subr.bf16.mxu0 0
        %1612 = vmatpush1.bf16.msra.mxu0 0
        %1613 = vmatprep.subr.bf16.mxu0 0
        %1614 = vmatpush1.bf16.msra.mxu0 0
        %1615 = vmatprep.subr.bf16.mxu0 0
        %1616 = vmatpush1.bf16.msra.mxu0 0
        %1617 = vmatprep.subr.bf16.mxu0 0
        %1618 = vmatpush1.bf16.msra.mxu0 0
        %1619 = vmatprep.subr.bf16.mxu0 0
        %1620 = vmatpush1.bf16.msra.mxu0 0
        %1621 = vmatprep.subr.bf16.mxu0 0
        %1622 = vmatpush1.bf16.msra.mxu0 0
        %1623 = vmatprep.subr.bf16.mxu0 0
        %1624 = vmatpush1.bf16.msra.mxu0 0
        %1625 = vmatprep.subr.bf16.mxu0 0
        %1626 = vmatpush1.bf16.msra.mxu0 0
        %1627 = vmatprep.mubr.bf16.mxu0 0
        %1628 = vmatmul.mubr.bf16.gmra.mrb[0].mxu0 %v1379
        %v1629 = vpop.f32.mrb[0].mxu0
        %v1630 = vadd.f32 %v1542, %v1629
        %v1631 = vpop.f32.mrb[0].mxu0
        %v1632 = vpop.f32.mrb[0].mxu0
        %v1633 = vpop.f32.mrb[0].mxu0
        %1634 = vdwg.mxu0
        %s1635 = scalar_lea.vmem %s5, 8
        %v1636 = vld [vmem:[%s1635] sm:$0xf]
        %v1638 = vsel %vm1335, %v1636, 0
        %1640 = vmatprep.subr.bf16.mxu0 0
        %1641 = vmatpush1.bf16.msra.mxu0 %v1333
        %1642 = vmatprep.subr.bf16.mxu0 0
        %1643 = vmatpush1.bf16.msra.mxu0 0
        %1644 = vmatprep.subr.bf16.mxu0 0
        %1645 = vmatpush1.bf16.msra.mxu0 0
        %1646 = vmatprep.subr.bf16.mxu0 0
        %1647 = vmatpush1.bf16.msra.mxu0 0
        %1648 = vmatprep.subr.bf16.mxu0 0
        %1649 = vmatpush1.bf16.msra.mxu0 0
        %1650 = vmatprep.subr.bf16.mxu0 0
        %1651 = vmatpush1.bf16.msra.mxu0 0
        %1652 = vmatprep.subr.bf16.mxu0 0
        %1653 = vmatpush1.bf16.msra.mxu0 0
        %1654 = vmatprep.subr.bf16.mxu0 0
        %1655 = vmatpush1.bf16.msra.mxu0 0
        %1656 = vmatprep.subr.bf16.mxu0 0
        %1657 = vmatpush1.bf16.msra.mxu0 0
        %1658 = vmatprep.subr.bf16.mxu0 0
        %1659 = vmatpush1.bf16.msra.mxu0 0
        %1660 = vmatprep.subr.bf16.mxu0 0
        %1661 = vmatpush1.bf16.msra.mxu0 0
        %1662 = vmatprep.subr.bf16.mxu0 0
        %1663 = vmatpush1.bf16.msra.mxu0 0
        %1664 = vmatprep.subr.bf16.mxu0 0
        %1665 = vmatpush1.bf16.msra.mxu0 0
        %1666 = vmatprep.subr.bf16.mxu0 0
        %1667 = vmatpush1.bf16.msra.mxu0 0
        %1668 = vmatprep.subr.bf16.mxu0 0
        %1669 = vmatpush1.bf16.msra.mxu0 0
        %1670 = vmatprep.subr.bf16.mxu0 0
        %1671 = vmatpush1.bf16.msra.mxu0 0
        %1672 = vmatprep.mubr.bf16.mxu0 0
        %1673 = vmatmul.mubr.bf16.gmra.mrb[0].mxu0 %v1638
        %v1674 = vpop.f32.mrb[0].mxu0
        %v1675 = vadd.f32 0.0, %v1674
        %v1676 = vpop.f32.mrb[0].mxu0
        %v1677 = vpop.f32.mrb[0].mxu0
        %v1678 = vpop.f32.mrb[0].mxu0
        %1679 = vdwg.mxu0
        %v1680 = vpack.c.bf16 %v1675, %v1675
        %s1681 = scalar_lea.vmem %s4, 128
        %v1682 = vld [vmem:[%s1681] sm:$0xf]
        %v1683 = vld [vmem:[%s1681 + $0x4] sm:$0xf]
        %v1684 = vld [vmem:[%s1681 + $0x8] sm:$0xf]
        %v1685 = vld [vmem:[%s1681 + $0xc] sm:$0xf]
        %v1686 = vld [vmem:[%s1681 + $0x10] sm:$0xf]
        %v1687 = vld [vmem:[%s1681 + $0x14] sm:$0xf]
        %v1688 = vld [vmem:[%s1681 + $0x18] sm:$0xf]
        %v1689 = vld [vmem:[%s1681 + $0x1c] sm:$0xf]
        %v1690 = vld [vmem:[%s1681 + $0x20] sm:$0xf]
        %v1691 = vld [vmem:[%s1681 + $0x24] sm:$0xf]
        %v1692 = vld [vmem:[%s1681 + $0x28] sm:$0xf]
        %v1693 = vld [vmem:[%s1681 + $0x2c] sm:$0xf]
        %v1694 = vld [vmem:[%s1681 + $0x30] sm:$0xf]
        %v1695 = vld [vmem:[%s1681 + $0x34] sm:$0xf]
        %v1696 = vld [vmem:[%s1681 + $0x38] sm:$0xf]
        %v1697 = vld [vmem:[%s1681 + $0x3c] sm:$0xf]
        %v1714 = vunpack.c.l.b16 %v1682
        %v1715 = vunpack.c.l.b16 %v1683
        %v1716 = vunpack.c.l.b16 %v1684
        %v1717 = vunpack.c.l.b16 %v1685
        %v1718 = vunpack.c.l.b16 %v1686
        %v1719 = vunpack.c.l.b16 %v1687
        %v1720 = vunpack.c.l.b16 %v1688
        %v1721 = vunpack.c.l.b16 %v1689
        %v1722 = vunpack.c.l.b16 %v1690
        %v1723 = vunpack.c.l.b16 %v1691
        %v1724 = vunpack.c.l.b16 %v1692
        %v1725 = vunpack.c.l.b16 %v1693
        %v1726 = vunpack.c.l.b16 %v1694
        %v1727 = vunpack.c.l.b16 %v1695
        %v1728 = vunpack.c.l.b16 %v1696
        %v1729 = vunpack.c.l.b16 %v1697
        %v1730 = vpack.c.b16 %v1715, %v1714
        %v1731 = vpack.c.b16 %v1717, %v1716
        %v1732 = vpack.c.b16 %v1719, %v1718
        %v1733 = vpack.c.b16 %v1721, %v1720
        %v1734 = vpack.c.b16 %v1723, %v1722
        %v1735 = vpack.c.b16 %v1725, %v1724
        %v1736 = vpack.c.b16 %v1727, %v1726
        %v1737 = vpack.c.b16 %v1729, %v1728
        %1746 = vmatprep.subr.bf16.mxu0 0
        %1747 = vmatpush1.bf16.msra.mxu0 %v1730
        %1748 = vmatprep.subr.bf16.mxu0 0
        %1749 = vmatpush1.bf16.msra.mxu0 %v1731
        %1750 = vmatprep.subr.bf16.mxu0 0
        %1751 = vmatpush1.bf16.msra.mxu0 %v1732
        %1752 = vmatprep.subr.bf16.mxu0 0
        %1753 = vmatpush1.bf16.msra.mxu0 %v1733
        %1754 = vmatprep.subr.bf16.mxu0 0
        %1755 = vmatpush1.bf16.msra.mxu0 %v1734
        %1756 = vmatprep.subr.bf16.mxu0 0
        %1757 = vmatpush1.bf16.msra.mxu0 %v1735
        %1758 = vmatprep.subr.bf16.mxu0 0
        %1759 = vmatpush1.bf16.msra.mxu0 %v1736
        %1760 = vmatprep.subr.bf16.mxu0 0
        %1761 = vmatpush1.bf16.msra.mxu0 %v1737
        %1762 = vmatprep.subr.bf16.mxu0 0
        %1763 = vmatpush1.bf16.msra.mxu0 0
        %1764 = vmatprep.subr.bf16.mxu0 0
        %1765 = vmatpush1.bf16.msra.mxu0 0
        %1766 = vmatprep.subr.bf16.mxu0 0
        %1767 = vmatpush1.bf16.msra.mxu0 0
        %1768 = vmatprep.subr.bf16.mxu0 0
        %1769 = vmatpush1.bf16.msra.mxu0 0
        %1770 = vmatprep.subr.bf16.mxu0 0
        %1771 = vmatpush1.bf16.msra.mxu0 0
        %1772 = vmatprep.subr.bf16.mxu0 0
        %1773 = vmatpush1.bf16.msra.mxu0 0
        %1774 = vmatprep.subr.bf16.mxu0 0
        %1775 = vmatpush1.bf16.msra.mxu0 0
        %1776 = vmatprep.subr.bf16.mxu0 0
        %1777 = vmatpush1.bf16.msra.mxu0 0
        %1778 = vmatprep.mubr.bf16.mxu0 0
        %1779 = vmatmul.mubr.bf16.gmra.mrb[0].mxu0 %v1680
        %v1780 = vpop.f32.mrb[0].mxu0
        %v1781 = vadd.f32 0.0, %v1780
        %v1782 = vpop.f32.mrb[0].mxu0
        %v1783 = vpop.f32.mrb[0].mxu0
        %v1784 = vpop.f32.mrb[0].mxu0
        %1785 = vdwg.mxu0
        %v1786 = vadd.f32 %v1630, %v1781
        %s1787 = scalar_lea.vmem %s5, 12
        %v1788 = vld [vmem:[%s1787] sm:$0xf]
        %v1790 = vsel %vm1335, %v1788, 0
        %1792 = vmatprep.subr.bf16.mxu0 0
        %1793 = vmatpush1.bf16.msra.mxu0 %v1333
        %1794 = vmatprep.subr.bf16.mxu0 0
        %1795 = vmatpush1.bf16.msra.mxu0 0
        %1796 = vmatprep.subr.bf16.mxu0 0
        %1797 = vmatpush1.bf16.msra.mxu0 0
        %1798 = vmatprep.subr.bf16.mxu0 0
        %1799 = vmatpush1.bf16.msra.mxu0 0
        %1800 = vmatprep.subr.bf16.mxu0 0
        %1801 = vmatpush1.bf16.msra.mxu0 0
        %1802 = vmatprep.subr.bf16.mxu0 0
        %1803 = vmatpush1.bf16.msra.mxu0 0
        %1804 = vmatprep.subr.bf16.mxu0 0
        %1805 = vmatpush1.bf16.msra.mxu0 0
        %1806 = vmatprep.subr.bf16.mxu0 0
        %1807 = vmatpush1.bf16.msra.mxu0 0
        %1808 = vmatprep.subr.bf16.mxu0 0
        %1809 = vmatpush1.bf16.msra.mxu0 0
        %1810 = vmatprep.subr.bf16.mxu0 0
        %1811 = vmatpush1.bf16.msra.mxu0 0
        %1812 = vmatprep.subr.bf16.mxu0 0
        %1813 = vmatpush1.bf16.msra.mxu0 0
        %1814 = vmatprep.subr.bf16.mxu0 0
        %1815 = vmatpush1.bf16.msra.mxu0 0
        %1816 = vmatprep.subr.bf16.mxu0 0
        %1817 = vmatpush1.bf16.msra.mxu0 0
        %1818 = vmatprep.subr.bf16.mxu0 0
        %1819 = vmatpush1.bf16.msra.mxu0 0
        %1820 = vmatprep.subr.bf16.mxu0 0
        %1821 = vmatpush1.bf16.msra.mxu0 0
        %1822 = vmatprep.subr.bf16.mxu0 0
        %1823 = vmatpush1.bf16.msra.mxu0 0
        %1824 = vmatprep.mubr.bf16.mxu0 0
        %1825 = vmatmul.mubr.bf16.gmra.mrb[0].mxu0 %v1790
        %v1826 = vpop.f32.mrb[0].mxu0
        %v1827 = vadd.f32 0.0, %v1826
        %v1828 = vpop.f32.mrb[0].mxu0
        %v1829 = vpop.f32.mrb[0].mxu0
        %v1830 = vpop.f32.mrb[0].mxu0
        %1831 = vdwg.mxu0
        %v1832 = vpack.c.bf16 %v1827, %v1827
        %s1833 = scalar_lea.vmem %s4, 192
        %v1834 = vld [vmem:[%s1833] sm:$0xf]
        %v1835 = vld [vmem:[%s1833 + $0x4] sm:$0xf]
        %v1836 = vld [vmem:[%s1833 + $0x8] sm:$0xf]
        %v1837 = vld [vmem:[%s1833 + $0xc] sm:$0xf]
        %v1838 = vld [vmem:[%s1833 + $0x10] sm:$0xf]
        %v1839 = vld [vmem:[%s1833 + $0x14] sm:$0xf]
        %v1840 = vld [vmem:[%s1833 + $0x18] sm:$0xf]
        %v1841 = vld [vmem:[%s1833 + $0x1c] sm:$0xf]
        %v1842 = vld [vmem:[%s1833 + $0x20] sm:$0xf]
        %v1843 = vld [vmem:[%s1833 + $0x24] sm:$0xf]
        %v1844 = vld [vmem:[%s1833 + $0x28] sm:$0xf]
        %v1845 = vld [vmem:[%s1833 + $0x2c] sm:$0xf]
        %v1846 = vld [vmem:[%s1833 + $0x30] sm:$0xf]
        %v1847 = vld [vmem:[%s1833 + $0x34] sm:$0xf]
        %v1848 = vld [vmem:[%s1833 + $0x38] sm:$0xf]
        %v1849 = vld [vmem:[%s1833 + $0x3c] sm:$0xf]
        %v1866 = vunpack.c.l.b16 %v1834
        %v1867 = vunpack.c.l.b16 %v1835
        %v1868 = vunpack.c.l.b16 %v1836
        %v1869 = vunpack.c.l.b16 %v1837
        %v1870 = vunpack.c.l.b16 %v1838
        %v1871 = vunpack.c.l.b16 %v1839
        %v1872 = vunpack.c.l.b16 %v1840
        %v1873 = vunpack.c.l.b16 %v1841
        %v1874 = vunpack.c.l.b16 %v1842
        %v1875 = vunpack.c.l.b16 %v1843
        %v1876 = vunpack.c.l.b16 %v1844
        %v1877 = vunpack.c.l.b16 %v1845
        %v1878 = vunpack.c.l.b16 %v1846
        %v1879 = vunpack.c.l.b16 %v1847
        %v1880 = vunpack.c.l.b16 %v1848
        %v1881 = vunpack.c.l.b16 %v1849
        %v1882 = vpack.c.b16 %v1867, %v1866
        %v1883 = vpack.c.b16 %v1869, %v1868
        %v1884 = vpack.c.b16 %v1871, %v1870
        %v1885 = vpack.c.b16 %v1873, %v1872
        %v1886 = vpack.c.b16 %v1875, %v1874
        %v1887 = vpack.c.b16 %v1877, %v1876
        %v1888 = vpack.c.b16 %v1879, %v1878
        %v1889 = vpack.c.b16 %v1881, %v1880
        %1898 = vmatprep.subr.bf16.mxu0 0
        %1899 = vmatpush1.bf16.msra.mxu0 %v1882
        %1900 = vmatprep.subr.bf16.mxu0 0
        %1901 = vmatpush1.bf16.msra.mxu0 %v1883
        %1902 = vmatprep.subr.bf16.mxu0 0
        %1903 = vmatpush1.bf16.msra.mxu0 %v1884
        %1904 = vmatprep.subr.bf16.mxu0 0
        %1905 = vmatpush1.bf16.msra.mxu0 %v1885
        %1906 = vmatprep.subr.bf16.mxu0 0
        %1907 = vmatpush1.bf16.msra.mxu0 %v1886
        %1908 = vmatprep.subr.bf16.mxu0 0
        %1909 = vmatpush1.bf16.msra.mxu0 %v1887
        %1910 = vmatprep.subr.bf16.mxu0 0
        %1911 = vmatpush1.bf16.msra.mxu0 %v1888
        %1912 = vmatprep.subr.bf16.mxu0 0
        %1913 = vmatpush1.bf16.msra.mxu0 %v1889
        %1914 = vmatprep.subr.bf16.mxu0 0
        %1915 = vmatpush1.bf16.msra.mxu0 0
        %1916 = vmatprep.subr.bf16.mxu0 0
        %1917 = vmatpush1.bf16.msra.mxu0 0
        %1918 = vmatprep.subr.bf16.mxu0 0
        %1919 = vmatpush1.bf16.msra.mxu0 0
        %1920 = vmatprep.subr.bf16.mxu0 0
        %1921 = vmatpush1.bf16.msra.mxu0 0
        %1922 = vmatprep.subr.bf16.mxu0 0
        %1923 = vmatpush1.bf16.msra.mxu0 0
        %1924 = vmatprep.subr.bf16.mxu0 0
        %1925 = vmatpush1.bf16.msra.mxu0 0
        %1926 = vmatprep.subr.bf16.mxu0 0
        %1927 = vmatpush1.bf16.msra.mxu0 0
        %1928 = vmatprep.subr.bf16.mxu0 0
        %1929 = vmatpush1.bf16.msra.mxu0 0
        %1930 = vmatprep.mubr.bf16.mxu0 0
        %1931 = vmatmul.mubr.bf16.gmra.mrb[0].mxu0 %v1832
        %v1932 = vpop.f32.mrb[0].mxu0
        %v1933 = vadd.f32 0.0, %v1932
        %v1934 = vpop.f32.mrb[0].mxu0
        %v1935 = vpop.f32.mrb[0].mxu0
        %v1936 = vpop.f32.mrb[0].mxu0
        %1937 = vdwg.mxu0
        %v1938 = vadd.f32 %v1786, %v1933
        %v1939 = vld [vmem:[%s6] sm:$0x1]
        %v1941 = vlaneseq
        %v1942 = vshrl.u32 %v1941, 7
        %v1943 = vsub.s32 0, %v1942
        %v1944 = vrot.slane %v1939, %v1943
        %v1946 = vadd.f32 %v1938, %v1944
        %v1947 = vrot.slane %v1946, 4
        %v1948 = vadd.f32 %v1946, %v1947
        %v1949 = vrot.slane %v1948, 2
        %v1950 = vadd.f32 %v1948, %v1949
        %v1951 = vrot.slane %v1950, 1
        %v1952 = vadd.f32 %v1950, %v1951
        %v1953 = vld [vmem:[#allocation8] sm:$0xff]
        %v1954 = vld [vmem:[#allocation8 + $0x8] sm:$0xff]
        %v1955 = vld [vmem:[#allocation8 + $0x10] sm:$0xff]
        %v1956 = vld [vmem:[#allocation8 + $0x18] sm:$0xff]
        %v1957 = vld [vmem:[#allocation8 + $0x20] sm:$0xff]
        %v1958 = vld [vmem:[#allocation8 + $0x28] sm:$0xff]
        %v1959 = vld [vmem:[#allocation8 + $0x30] sm:$0xff]
        %v1960 = vld [vmem:[#allocation8 + $0x38] sm:$0xff]
        %v1961 = vld [vmem:[#allocation8 + $0x40] sm:$0xff]
        %v1962 = vld [vmem:[#allocation8 + $0x48] sm:$0xff]
        %v1963 = vld [vmem:[#allocation8 + $0x50] sm:$0xff]
        %v1964 = vld [vmem:[#allocation8 + $0x58] sm:$0xff]
        %v1965 = vld [vmem:[#allocation8 + $0x60] sm:$0xff]
        %v1966 = vld [vmem:[#allocation8 + $0x68] sm:$0xff]
        %v1967 = vld [vmem:[#allocation8 + $0x70] sm:$0xff]
        %v1968 = vld [vmem:[#allocation8 + $0x78] sm:$0xff]
        %1969 = vmatprep.subr.mxu0 0.0
        %1970 = vmatpush1.msra.mxu0 %v1953
        %1971 = vmatprep.subr.mxu0 0.0
        %1972 = vmatpush1.msra.mxu0 %v1954
        %1973 = vmatprep.subr.mxu0 0.0
        %1974 = vmatpush1.msra.mxu0 %v1955
        %1975 = vmatprep.subr.mxu0 0.0
        %1976 = vmatpush1.msra.mxu0 %v1956
        %1977 = vmatprep.subr.mxu0 0.0
        %1978 = vmatpush1.msra.mxu0 %v1957
        %1979 = vmatprep.subr.mxu0 0.0
        %1980 = vmatpush1.msra.mxu0 %v1958
        %1981 = vmatprep.subr.mxu0 0.0
        %1982 = vmatpush1.msra.mxu0 %v1959
        %1983 = vmatprep.subr.mxu0 0.0
        %1984 = vmatpush1.msra.mxu0 %v1960
        %1985 = vmatprep.subr.mxu0 0.0
        %1986 = vmatpush1.msra.mxu0 %v1961
        %1987 = vmatprep.subr.mxu0 0.0
        %1988 = vmatpush1.msra.mxu0 %v1962
        %1989 = vmatprep.subr.mxu0 0.0
        %1990 = vmatpush1.msra.mxu0 %v1963
        %1991 = vmatprep.subr.mxu0 0.0
        %1992 = vmatpush1.msra.mxu0 %v1964
        %1993 = vmatprep.subr.mxu0 0.0
        %1994 = vmatpush1.msra.mxu0 %v1965
        %1995 = vmatprep.subr.mxu0 0.0
        %1996 = vmatpush1.msra.mxu0 %v1966
        %1997 = vmatprep.subr.mxu0 0.0
        %1998 = vmatpush1.msra.mxu0 %v1967
        %1999 = vmatprep.subr.mxu0 0.0
        %2000 = vmatpush1.msra.mxu0 %v1968
        %2001 = vmatprep.subr.mxu0 0.0
        %2002 = vmatpush1.msra.mxu0 0.0
        %2003 = vmatprep.subr.mxu0 0.0
        %2004 = vmatpush1.msra.mxu0 0.0
        %2005 = vmatprep.subr.mxu0 0.0
        %2006 = vmatpush1.msra.mxu0 0.0
        %2007 = vmatprep.subr.mxu0 0.0
        %2008 = vmatpush1.msra.mxu0 0.0
        %2009 = vmatprep.subr.mxu0 0.0
        %2010 = vmatpush1.msra.mxu0 0.0
        %2011 = vmatprep.subr.mxu0 0.0
        %2012 = vmatpush1.msra.mxu0 0.0
        %2013 = vmatprep.subr.mxu0 0.0
        %2014 = vmatpush1.msra.mxu0 0.0
        %2015 = vmatprep.subr.mxu0 0.0
        %2016 = vmatpush1.msra.mxu0 0.0
        %2017 = vmatprep.subr.mxu0 0.0
        %2018 = vmatpush1.msra.mxu0 0.0
        %2019 = vmatprep.subr.mxu0 0.0
        %2020 = vmatpush1.msra.mxu0 0.0
        %2021 = vmatprep.subr.mxu0 0.0
        %2022 = vmatpush1.msra.mxu0 0.0
        %2023 = vmatprep.subr.mxu0 0.0
        %2024 = vmatpush1.msra.mxu0 0.0
        %2025 = vmatprep.subr.mxu0 0.0
        %2026 = vmatpush1.msra.mxu0 0.0
        %2027 = vmatprep.subr.mxu0 0.0
        %2028 = vmatpush1.msra.mxu0 0.0
        %2029 = vmatprep.subr.mxu0 0.0
        %2030 = vmatpush1.msra.mxu0 0.0
        %2031 = vmatprep.subr.mxu0 0.0
        %2032 = vmatpush1.msra.mxu0 0.0
        %2033 = vmatprep.mubr.f32.mxu0 0.0
        %2034 = vmatmul.mubr.f32.gmra.mrb[0].mxu0 %v1952
        %v2035 = vpop.f32.mrb[0].mxu0
        %v2036 = vadd.f32 0.0, %v2035
        %v2037 = vpop.f32.mrb[0].mxu0
        %2038 = vdwg.mxu0
        %v2039 = vlaneseq
        %v2040 = vshrl.u32 %v2039, 7
        %v2041 = vsub.s32 0, %v2040
        %v2042 = vrot.slane %v2036, %v2041
        %v2043 = vsub.f32 %v1946, %v2042
        %v2044 = vmul.f32 %v2043, %v2043
        %v2045 = vrot.slane %v2044, 4
        %v2046 = vadd.f32 %v2044, %v2045
        %v2047 = vrot.slane %v2046, 2
        %v2048 = vadd.f32 %v2046, %v2047
        %v2049 = vrot.slane %v2048, 1
        %v2050 = vadd.f32 %v2048, %v2049
        %2051 = vmatprep.subr.mxu0 0.0
        %2052 = vmatpush1.msra.mxu0 %v1953
        %2053 = vmatprep.subr.mxu0 0.0
        %2054 = vmatpush1.msra.mxu0 %v1954
        %2055 = vmatprep.subr.mxu0 0.0
        %2056 = vmatpush1.msra.mxu0 %v1955
        %2057 = vmatprep.subr.mxu0 0.0
        %2058 = vmatpush1.msra.mxu0 %v1956
        %2059 = vmatprep.subr.mxu0 0.0
        %2060 = vmatpush1.msra.mxu0 %v1957
        %2061 = vmatprep.subr.mxu0 0.0
        %2062 = vmatpush1.msra.mxu0 %v1958
        %2063 = vmatprep.subr.mxu0 0.0
        %2064 = vmatpush1.msra.mxu0 %v1959
        %2065 = vmatprep.subr.mxu0 0.0
        %2066 = vmatpush1.msra.mxu0 %v1960
        %2067 = vmatprep.subr.mxu0 0.0
        %2068 = vmatpush1.msra.mxu0 %v1961
        %2069 = vmatprep.subr.mxu0 0.0
        %2070 = vmatpush1.msra.mxu0 %v1962
        %2071 = vmatprep.subr.mxu0 0.0
        %2072 = vmatpush1.msra.mxu0 %v1963
        %2073 = vmatprep.subr.mxu0 0.0
        %2074 = vmatpush1.msra.mxu0 %v1964
        %2075 = vmatprep.subr.mxu0 0.0
        %2076 = vmatpush1.msra.mxu0 %v1965
        %2077 = vmatprep.subr.mxu0 0.0
        %2078 = vmatpush1.msra.mxu0 %v1966
        %2079 = vmatprep.subr.mxu0 0.0
        %2080 = vmatpush1.msra.mxu0 %v1967
        %2081 = vmatprep.subr.mxu0 0.0
        %2082 = vmatpush1.msra.mxu0 %v1968
        %2083 = vmatprep.subr.mxu0 0.0
        %2084 = vmatpush1.msra.mxu0 0.0
        %2085 = vmatprep.subr.mxu0 0.0
        %2086 = vmatpush1.msra.mxu0 0.0
        %2087 = vmatprep.subr.mxu0 0.0
        %2088 = vmatpush1.msra.mxu0 0.0
        %2089 = vmatprep.subr.mxu0 0.0
        %2090 = vmatpush1.msra.mxu0 0.0
        %2091 = vmatprep.subr.mxu0 0.0
        %2092 = vmatpush1.msra.mxu0 0.0
        %2093 = vmatprep.subr.mxu0 0.0
        %2094 = vmatpush1.msra.mxu0 0.0
        %2095 = vmatprep.subr.mxu0 0.0
        %2096 = vmatpush1.msra.mxu0 0.0
        %2097 = vmatprep.subr.mxu0 0.0
        %2098 = vmatpush1.msra.mxu0 0.0
        %2099 = vmatprep.subr.mxu0 0.0
        %2100 = vmatpush1.msra.mxu0 0.0
        %2101 = vmatprep.subr.mxu0 0.0
        %2102 = vmatpush1.msra.mxu0 0.0
        %2103 = vmatprep.subr.mxu0 0.0
        %2104 = vmatpush1.msra.mxu0 0.0
        %2105 = vmatprep.subr.mxu0 0.0
        %2106 = vmatpush1.msra.mxu0 0.0
        %2107 = vmatprep.subr.mxu0 0.0
        %2108 = vmatpush1.msra.mxu0 0.0
        %2109 = vmatprep.subr.mxu0 0.0
        %2110 = vmatpush1.msra.mxu0 0.0
        %2111 = vmatprep.subr.mxu0 0.0
        %2112 = vmatpush1.msra.mxu0 0.0
        %2113 = vmatprep.subr.mxu0 0.0
        %2114 = vmatpush1.msra.mxu0 0.0
        %2115 = vmatprep.mubr.f32.mxu0 0.0
        %2116 = vmatmul.mubr.f32.gmra.mrb[0].mxu0 %v2050
        %v2117 = vpop.f32.mrb[0].mxu0
        %v2118 = vadd.f32 1e-05, %v2117
        %v2119 = vpop.f32.mrb[0].mxu0
        %2120 = vdwg.mxu0
        %v2121 = vrsqrt.pop %v2118
        %v2122 = vlaneseq
        %v2123 = vshrl.u32 %v2122, 7
        %v2124 = vsub.s32 0, %v2123
        %v2125 = vrot.slane %v2121, %v2124
        %v2126 = vmul.f32 %v2043, %v2125
        %vm2127 = vcmp.ge.f32.partialorder %v2126, 0.0
        %v2128 = vmul.f32 %v2126, 0.2
        %v2129 = vsel %vm2127, %v2126, %v2128
        %v2130 = vpack.c.bf16 %v2129, %v2129
        %v2131 = vld [vmem:[%s9] sm:$0x3]
        %vm2132 = vcmask 64512
        %v2134 = vsel %vm2132, %v2131, 0
        %vm2136 = vcmask 1043456
        %v2138 = vsel %vm2136, %v2130, 0
        %2140 = vmatprep.subr.bf16.mxu0 0
        %2141 = vmatpush1.bf16.msra.mxu0 %v2138
        %2142 = vmatprep.subr.bf16.mxu0 0
        %2143 = vmatpush1.bf16.msra.mxu0 0
        %2144 = vmatprep.subr.bf16.mxu0 0
        %2145 = vmatpush1.bf16.msra.mxu0 0
        %2146 = vmatprep.subr.bf16.mxu0 0
        %2147 = vmatpush1.bf16.msra.mxu0 0
        %2148 = vmatprep.subr.bf16.mxu0 0
        %2149 = vmatpush1.bf16.msra.mxu0 0
        %2150 = vmatprep.subr.bf16.mxu0 0
        %2151 = vmatpush1.bf16.msra.mxu0 0
        %2152 = vmatprep.subr.bf16.mxu0 0
        %2153 = vmatpush1.bf16.msra.mxu0 0
        %2154 = vmatprep.subr.bf16.mxu0 0
        %2155 = vmatpush1.bf16.msra.mxu0 0
        %2156 = vmatprep.subr.bf16.mxu0 0
        %2157 = vmatpush1.bf16.msra.mxu0 0
        %2158 = vmatprep.subr.bf16.mxu0 0
        %2159 = vmatpush1.bf16.msra.mxu0 0
        %2160 = vmatprep.subr.bf16.mxu0 0
        %2161 = vmatpush1.bf16.msra.mxu0 0
        %2162 = vmatprep.subr.bf16.mxu0 0
        %2163 = vmatpush1.bf16.msra.mxu0 0
        %2164 = vmatprep.subr.bf16.mxu0 0
        %2165 = vmatpush1.bf16.msra.mxu0 0
        %2166 = vmatprep.subr.bf16.mxu0 0
        %2167 = vmatpush1.bf16.msra.mxu0 0
        %2168 = vmatprep.subr.bf16.mxu0 0
        %2169 = vmatpush1.bf16.msra.mxu0 0
        %2170 = vmatprep.subr.bf16.mxu0 0
        %2171 = vmatpush1.bf16.msra.mxu0 0
        %2172 = vmatprep.mubr.bf16.mxu0 0
        %2173 = vmatmul.mubr.bf16.gmra.mrb[0].mxu0 %v2134
        %v2174 = vpop.f32.mrb[0].mxu0
        %v2175 = vadd.f32 0.0, %v2174
        %v2176 = vpop.f32.mrb[0].mxu0
        %v2177 = vpop.f32.mrb[0].mxu0
        %v2178 = vpop.f32.mrb[0].mxu0
        %2179 = vdwg.mxu0
        %v2180 = vpack.c.bf16 %v2175, %v2175
        %v2181 = vld [vmem:[#allocation10] sm:$0xf]
        %v2182 = vld [vmem:[#allocation10 + $0x4] sm:$0xf]
        %v2183 = vld [vmem:[#allocation10 + $0x8] sm:$0xf]
        %v2184 = vld [vmem:[#allocation10 + $0xc] sm:$0xf]
        %v2185 = vld [vmem:[#allocation10 + $0x10] sm:$0xf]
        %v2186 = vld [vmem:[#allocation10 + $0x14] sm:$0xf]
        %v2187 = vld [vmem:[#allocation10 + $0x18] sm:$0xf]
        %v2188 = vld [vmem:[#allocation10 + $0x1c] sm:$0xf]
        %v2189 = vld [vmem:[#allocation10 + $0x20] sm:$0xf]
        %v2190 = vld [vmem:[#allocation10 + $0x24] sm:$0xf]
        %v2191 = vld [vmem:[#allocation10 + $0x28] sm:$0xf]
        %v2192 = vld [vmem:[#allocation10 + $0x2c] sm:$0xf]
        %v2193 = vld [vmem:[#allocation10 + $0x30] sm:$0xf]
        %v2194 = vld [vmem:[#allocation10 + $0x34] sm:$0xf]
        %v2195 = vld [vmem:[#allocation10 + $0x38] sm:$0xf]
        %v2196 = vld [vmem:[#allocation10 + $0x3c] sm:$0xf]
        %s2197 = scalar_lea.vmem %s9, 2
        %v2198 = vld [vmem:[%s2197] sm:$0x3]
        %v2200 = vsel %vm2132, %v2198, 0
        %2202 = vmatprep.subr.bf16.mxu0 0
        %2203 = vmatpush1.bf16.msra.mxu0 %v2138
        %2204 = vmatprep.subr.bf16.mxu0 0
        %2205 = vmatpush1.bf16.msra.mxu0 0
        %2206 = vmatprep.subr.bf16.mxu0 0
        %2207 = vmatpush1.bf16.msra.mxu0 0
        %2208 = vmatprep.subr.bf16.mxu0 0
        %2209 = vmatpush1.bf16.msra.mxu0 0
        %2210 = vmatprep.subr.bf16.mxu0 0
        %2211 = vmatpush1.bf16.msra.mxu0 0
        %2212 = vmatprep.subr.bf16.mxu0 0
        %2213 = vmatpush1.bf16.msra.mxu0 0
        %2214 = vmatprep.subr.bf16.mxu0 0
        %2215 = vmatpush1.bf16.msra.mxu0 0
        %2216 = vmatprep.subr.bf16.mxu0 0
        %2217 = vmatpush1.bf16.msra.mxu0 0
        %2218 = vmatprep.subr.bf16.mxu0 0
        %2219 = vmatpush1.bf16.msra.mxu0 0
        %2220 = vmatprep.subr.bf16.mxu0 0
        %2221 = vmatpush1.bf16.msra.mxu0 0
        %2222 = vmatprep.subr.bf16.mxu0 0
        %2223 = vmatpush1.bf16.msra.mxu0 0
        %2224 = vmatprep.subr.bf16.mxu0 0
        %2225 = vmatpush1.bf16.msra.mxu0 0
        %2226 = vmatprep.subr.bf16.mxu0 0
        %2227 = vmatpush1.bf16.msra.mxu0 0
        %2228 = vmatprep.subr.bf16.mxu0 0
        %2229 = vmatpush1.bf16.msra.mxu0 0
        %2230 = vmatprep.subr.bf16.mxu0 0
        %2231 = vmatpush1.bf16.msra.mxu0 0
        %2232 = vmatprep.subr.bf16.mxu0 0
        %2233 = vmatpush1.bf16.msra.mxu0 0
        %2234 = vmatprep.mubr.bf16.mxu0 0
        %2235 = vmatmul.mubr.bf16.gmra.mrb[0].mxu0 %v2200
        %v2236 = vpop.f32.mrb[0].mxu0
        %v2237 = vadd.f32 0.0, %v2236
        %v2238 = vpop.f32.mrb[0].mxu0
        %v2239 = vpop.f32.mrb[0].mxu0
        %v2240 = vpop.f32.mrb[0].mxu0
        %2241 = vdwg.mxu0
        %v2242 = vpack.c.bf16 %v2237, %v2237
        %s2243 = scalar_lea.vmem [#allocation10], 64
        %v2244 = vld [vmem:[%s2243] sm:$0xf]
        %v2245 = vld [vmem:[%s2243 + $0x4] sm:$0xf]
        %v2246 = vld [vmem:[%s2243 + $0x8] sm:$0xf]
        %v2247 = vld [vmem:[%s2243 + $0xc] sm:$0xf]
        %v2248 = vld [vmem:[%s2243 + $0x10] sm:$0xf]
        %v2249 = vld [vmem:[%s2243 + $0x14] sm:$0xf]
        %v2250 = vld [vmem:[%s2243 + $0x18] sm:$0xf]
        %v2251 = vld [vmem:[%s2243 + $0x1c] sm:$0xf]
        %v2252 = vld [vmem:[%s2243 + $0x20] sm:$0xf]
        %v2253 = vld [vmem:[%s2243 + $0x24] sm:$0xf]
        %v2254 = vld [vmem:[%s2243 + $0x28] sm:$0xf]
        %v2255 = vld [vmem:[%s2243 + $0x2c] sm:$0xf]
        %v2256 = vld [vmem:[%s2243 + $0x30] sm:$0xf]
        %v2257 = vld [vmem:[%s2243 + $0x34] sm:$0xf]
        %v2258 = vld [vmem:[%s2243 + $0x38] sm:$0xf]
        %v2259 = vld [vmem:[%s2243 + $0x3c] sm:$0xf]
        %v2276 = vunpack.c.l.b16 %v2244
        %v2277 = vunpack.c.l.b16 %v2245
        %v2278 = vunpack.c.l.b16 %v2246
        %v2279 = vunpack.c.l.b16 %v2247
        %v2280 = vunpack.c.l.b16 %v2248
        %v2281 = vunpack.c.l.b16 %v2249
        %v2282 = vunpack.c.l.b16 %v2250
        %v2283 = vunpack.c.l.b16 %v2251
        %v2284 = vunpack.c.l.b16 %v2252
        %v2285 = vunpack.c.l.b16 %v2253
        %v2286 = vunpack.c.l.b16 %v2254
        %v2287 = vunpack.c.l.b16 %v2255
        %v2288 = vunpack.c.l.b16 %v2256
        %v2289 = vunpack.c.l.b16 %v2257
        %v2290 = vunpack.c.l.b16 %v2258
        %v2291 = vunpack.c.l.b16 %v2259
        %v2292 = vpack.c.b16 %v2277, %v2276
        %v2293 = vpack.c.b16 %v2279, %v2278
        %v2294 = vpack.c.b16 %v2281, %v2280
        %v2295 = vpack.c.b16 %v2283, %v2282
        %v2296 = vpack.c.b16 %v2285, %v2284
        %v2297 = vpack.c.b16 %v2287, %v2286
        %v2298 = vpack.c.b16 %v2289, %v2288
        %v2299 = vpack.c.b16 %v2291, %v2290
        %2308 = vmatprep.subr.bf16.mxu0 0
        %2309 = vmatpush1.bf16.msra.mxu0 %v2292
        %2310 = vmatprep.subr.bf16.mxu0 0
        %2311 = vmatpush1.bf16.msra.mxu0 %v2293
        %2312 = vmatprep.subr.bf16.mxu0 0
        %2313 = vmatpush1.bf16.msra.mxu0 %v2294
        %2314 = vmatprep.subr.bf16.mxu0 0
        %2315 = vmatpush1.bf16.msra.mxu0 %v2295
        %2316 = vmatprep.subr.bf16.mxu0 0
        %2317 = vmatpush1.bf16.msra.mxu0 %v2296
        %2318 = vmatprep.subr.bf16.mxu0 0
        %2319 = vmatpush1.bf16.msra.mxu0 %v2297
        %2320 = vmatprep.subr.bf16.mxu0 0
        %2321 = vmatpush1.bf16.msra.mxu0 %v2298
        %2322 = vmatprep.subr.bf16.mxu0 0
        %2323 = vmatpush1.bf16.msra.mxu0 %v2299
        %2324 = vmatprep.subr.bf16.mxu0 0
        %2325 = vmatpush1.bf16.msra.mxu0 0
        %2326 = vmatprep.subr.bf16.mxu0 0
        %2327 = vmatpush1.bf16.msra.mxu0 0
        %2328 = vmatprep.subr.bf16.mxu0 0
        %2329 = vmatpush1.bf16.msra.mxu0 0
        %2330 = vmatprep.subr.bf16.mxu0 0
        %2331 = vmatpush1.bf16.msra.mxu0 0
        %2332 = vmatprep.subr.bf16.mxu0 0
        %2333 = vmatpush1.bf16.msra.mxu0 0
        %2334 = vmatprep.subr.bf16.mxu0 0
        %2335 = vmatpush1.bf16.msra.mxu0 0
        %2336 = vmatprep.subr.bf16.mxu0 0
        %2337 = vmatpush1.bf16.msra.mxu0 0
        %2338 = vmatprep.subr.bf16.mxu0 0
        %2339 = vmatpush1.bf16.msra.mxu0 0
        %2340 = vmatprep.mubr.bf16.mxu0 0
        %2341 = vmatmul.mubr.bf16.gmra.mrb[0].mxu0 %v2242
        %v2342 = vpop.f32.mrb[0].mxu0
        %v2343 = vadd.f32 0.0, %v2342
        %v2344 = vpop.f32.mrb[0].mxu0
        %v2345 = vpop.f32.mrb[0].mxu0
        %v2346 = vpop.f32.mrb[0].mxu0
        %2347 = vdwg.mxu0
        %v2364 = vunpack.c.l.b16 %v2181
        %v2365 = vunpack.c.l.b16 %v2182
        %v2366 = vunpack.c.l.b16 %v2183
        %v2367 = vunpack.c.l.b16 %v2184
        %v2368 = vunpack.c.l.b16 %v2185
        %v2369 = vunpack.c.l.b16 %v2186
        %v2370 = vunpack.c.l.b16 %v2187
        %v2371 = vunpack.c.l.b16 %v2188
        %v2372 = vunpack.c.l.b16 %v2189
        %v2373 = vunpack.c.l.b16 %v2190
        %v2374 = vunpack.c.l.b16 %v2191
        %v2375 = vunpack.c.l.b16 %v2192
        %v2376 = vunpack.c.l.b16 %v2193
        %v2377 = vunpack.c.l.b16 %v2194
        %v2378 = vunpack.c.l.b16 %v2195
        %v2379 = vunpack.c.l.b16 %v2196
        %v2380 = vpack.c.b16 %v2365, %v2364
        %v2381 = vpack.c.b16 %v2367, %v2366
        %v2382 = vpack.c.b16 %v2369, %v2368
        %v2383 = vpack.c.b16 %v2371, %v2370
        %v2384 = vpack.c.b16 %v2373, %v2372
        %v2385 = vpack.c.b16 %v2375, %v2374
        %v2386 = vpack.c.b16 %v2377, %v2376
        %v2387 = vpack.c.b16 %v2379, %v2378
        %2396 = vmatprep.subr.bf16.mxu0 0
        %2397 = vmatpush1.bf16.msra.mxu0 %v2380
        %2398 = vmatprep.subr.bf16.mxu0 0
        %2399 = vmatpush1.bf16.msra.mxu0 %v2381
        %2400 = vmatprep.subr.bf16.mxu0 0
        %2401 = vmatpush1.bf16.msra.mxu0 %v2382
        %2402 = vmatprep.subr.bf16.mxu0 0
        %2403 = vmatpush1.bf16.msra.mxu0 %v2383
        %2404 = vmatprep.subr.bf16.mxu0 0
        %2405 = vmatpush1.bf16.msra.mxu0 %v2384
        %2406 = vmatprep.subr.bf16.mxu0 0
        %2407 = vmatpush1.bf16.msra.mxu0 %v2385
        %2408 = vmatprep.subr.bf16.mxu0 0
        %2409 = vmatpush1.bf16.msra.mxu0 %v2386
        %2410 = vmatprep.subr.bf16.mxu0 0
        %2411 = vmatpush1.bf16.msra.mxu0 %v2387
        %2412 = vmatprep.subr.bf16.mxu0 0
        %2413 = vmatpush1.bf16.msra.mxu0 0
        %2414 = vmatprep.subr.bf16.mxu0 0
        %2415 = vmatpush1.bf16.msra.mxu0 0
        %2416 = vmatprep.subr.bf16.mxu0 0
        %2417 = vmatpush1.bf16.msra.mxu0 0
        %2418 = vmatprep.subr.bf16.mxu0 0
        %2419 = vmatpush1.bf16.msra.mxu0 0
        %2420 = vmatprep.subr.bf16.mxu0 0
        %2421 = vmatpush1.bf16.msra.mxu0 0
        %2422 = vmatprep.subr.bf16.mxu0 0
        %2423 = vmatpush1.bf16.msra.mxu0 0
        %2424 = vmatprep.subr.bf16.mxu0 0
        %2425 = vmatpush1.bf16.msra.mxu0 0
        %2426 = vmatprep.subr.bf16.mxu0 0
        %2427 = vmatpush1.bf16.msra.mxu0 0
        %2428 = vmatprep.mubr.bf16.mxu0 0
        %2429 = vmatmul.mubr.bf16.gmra.mrb[0].mxu0 %v2180
        %v2430 = vpop.f32.mrb[0].mxu0
        %v2431 = vadd.f32 %v2343, %v2430
        %v2432 = vpop.f32.mrb[0].mxu0
        %v2433 = vpop.f32.mrb[0].mxu0
        %v2434 = vpop.f32.mrb[0].mxu0
        %2435 = vdwg.mxu0
        %s2436 = scalar_lea.vmem %s9, 4
        %v2437 = vld [vmem:[%s2436] sm:$0x3]
        %v2439 = vsel %vm2132, %v2437, 0
        %2441 = vmatprep.subr.bf16.mxu0 0
        %2442 = vmatpush1.bf16.msra.mxu0 %v2138
        %2443 = vmatprep.subr.bf16.mxu0 0
        %2444 = vmatpush1.bf16.msra.mxu0 0
        %2445 = vmatprep.subr.bf16.mxu0 0
        %2446 = vmatpush1.bf16.msra.mxu0 0
        %2447 = vmatprep.subr.bf16.mxu0 0
        %2448 = vmatpush1.bf16.msra.mxu0 0
        %2449 = vmatprep.subr.bf16.mxu0 0
        %2450 = vmatpush1.bf16.msra.mxu0 0
        %2451 = vmatprep.subr.bf16.mxu0 0
        %2452 = vmatpush1.bf16.msra.mxu0 0
        %2453 = vmatprep.subr.bf16.mxu0 0
        %2454 = vmatpush1.bf16.msra.mxu0 0
        %2455 = vmatprep.subr.bf16.mxu0 0
        %2456 = vmatpush1.bf16.msra.mxu0 0
        %2457 = vmatprep.subr.bf16.mxu0 0
        %2458 = vmatpush1.bf16.msra.mxu0 0
        %2459 = vmatprep.subr.bf16.mxu0 0
        %2460 = vmatpush1.bf16.msra.mxu0 0
        %2461 = vmatprep.subr.bf16.mxu0 0
        %2462 = vmatpush1.bf16.msra.mxu0 0
        %2463 = vmatprep.subr.bf16.mxu0 0
        %2464 = vmatpush1.bf16.msra.mxu0 0
        %2465 = vmatprep.subr.bf16.mxu0 0
        %2466 = vmatpush1.bf16.msra.mxu0 0
        %2467 = vmatprep.subr.bf16.mxu0 0
        %2468 = vmatpush1.bf16.msra.mxu0 0
        %2469 = vmatprep.subr.bf16.mxu0 0
        %2470 = vmatpush1.bf16.msra.mxu0 0
        %2471 = vmatprep.subr.bf16.mxu0 0
        %2472 = vmatpush1.bf16.msra.mxu0 0
        %2473 = vmatprep.mubr.bf16.mxu0 0
        %2474 = vmatmul.mubr.bf16.gmra.mrb[0].mxu0 %v2439
        %v2475 = vpop.f32.mrb[0].mxu0
        %v2476 = vadd.f32 0.0, %v2475
        %v2477 = vpop.f32.mrb[0].mxu0
        %v2478 = vpop.f32.mrb[0].mxu0
        %v2479 = vpop.f32.mrb[0].mxu0
        %2480 = vdwg.mxu0
        %v2481 = vpack.c.bf16 %v2476, %v2476
        %s2482 = scalar_lea.vmem [#allocation10], 128
        %v2483 = vld [vmem:[%s2482] sm:$0xf]
        %v2484 = vld [vmem:[%s2482 + $0x4] sm:$0xf]
        %v2485 = vld [vmem:[%s2482 + $0x8] sm:$0xf]
        %v2486 = vld [vmem:[%s2482 + $0xc] sm:$0xf]
        %v2487 = vld [vmem:[%s2482 + $0x10] sm:$0xf]
        %v2488 = vld [vmem:[%s2482 + $0x14] sm:$0xf]
        %v2489 = vld [vmem:[%s2482 + $0x18] sm:$0xf]
        %v2490 = vld [vmem:[%s2482 + $0x1c] sm:$0xf]
        %v2491 = vld [vmem:[%s2482 + $0x20] sm:$0xf]
        %v2492 = vld [vmem:[%s2482 + $0x24] sm:$0xf]
        %v2493 = vld [vmem:[%s2482 + $0x28] sm:$0xf]
        %v2494 = vld [vmem:[%s2482 + $0x2c] sm:$0xf]
        %v2495 = vld [vmem:[%s2482 + $0x30] sm:$0xf]
        %v2496 = vld [vmem:[%s2482 + $0x34] sm:$0xf]
        %v2497 = vld [vmem:[%s2482 + $0x38] sm:$0xf]
        %v2498 = vld [vmem:[%s2482 + $0x3c] sm:$0xf]
        %v2515 = vunpack.c.l.b16 %v2483
        %v2516 = vunpack.c.l.b16 %v2484
        %v2517 = vunpack.c.l.b16 %v2485
        %v2518 = vunpack.c.l.b16 %v2486
        %v2519 = vunpack.c.l.b16 %v2487
        %v2520 = vunpack.c.l.b16 %v2488
        %v2521 = vunpack.c.l.b16 %v2489
        %v2522 = vunpack.c.l.b16 %v2490
        %v2523 = vunpack.c.l.b16 %v2491
        %v2524 = vunpack.c.l.b16 %v2492
        %v2525 = vunpack.c.l.b16 %v2493
        %v2526 = vunpack.c.l.b16 %v2494
        %v2527 = vunpack.c.l.b16 %v2495
        %v2528 = vunpack.c.l.b16 %v2496
        %v2529 = vunpack.c.l.b16 %v2497
        %v2530 = vunpack.c.l.b16 %v2498
        %v2531 = vpack.c.b16 %v2516, %v2515
        %v2532 = vpack.c.b16 %v2518, %v2517
        %v2533 = vpack.c.b16 %v2520, %v2519
        %v2534 = vpack.c.b16 %v2522, %v2521
        %v2535 = vpack.c.b16 %v2524, %v2523
        %v2536 = vpack.c.b16 %v2526, %v2525
        %v2537 = vpack.c.b16 %v2528, %v2527
        %v2538 = vpack.c.b16 %v2530, %v2529
        %2547 = vmatprep.subr.bf16.mxu0 0
        %2548 = vmatpush1.bf16.msra.mxu0 %v2531
        %2549 = vmatprep.subr.bf16.mxu0 0
        %2550 = vmatpush1.bf16.msra.mxu0 %v2532
        %2551 = vmatprep.subr.bf16.mxu0 0
        %2552 = vmatpush1.bf16.msra.mxu0 %v2533
        %2553 = vmatprep.subr.bf16.mxu0 0
        %2554 = vmatpush1.bf16.msra.mxu0 %v2534
        %2555 = vmatprep.subr.bf16.mxu0 0
        %2556 = vmatpush1.bf16.msra.mxu0 %v2535
        %2557 = vmatprep.subr.bf16.mxu0 0
        %2558 = vmatpush1.bf16.msra.mxu0 %v2536
        %2559 = vmatprep.subr.bf16.mxu0 0
        %2560 = vmatpush1.bf16.msra.mxu0 %v2537
        %2561 = vmatprep.subr.bf16.mxu0 0
        %2562 = vmatpush1.bf16.msra.mxu0 %v2538
        %2563 = vmatprep.subr.bf16.mxu0 0
        %2564 = vmatpush1.bf16.msra.mxu0 0
        %2565 = vmatprep.subr.bf16.mxu0 0
        %2566 = vmatpush1.bf16.msra.mxu0 0
        %2567 = vmatprep.subr.bf16.mxu0 0
        %2568 = vmatpush1.bf16.msra.mxu0 0
        %2569 = vmatprep.subr.bf16.mxu0 0
        %2570 = vmatpush1.bf16.msra.mxu0 0
        %2571 = vmatprep.subr.bf16.mxu0 0
        %2572 = vmatpush1.bf16.msra.mxu0 0
        %2573 = vmatprep.subr.bf16.mxu0 0
        %2574 = vmatpush1.bf16.msra.mxu0 0
        %2575 = vmatprep.subr.bf16.mxu0 0
        %2576 = vmatpush1.bf16.msra.mxu0 0
        %2577 = vmatprep.subr.bf16.mxu0 0
        %2578 = vmatpush1.bf16.msra.mxu0 0
        %2579 = vmatprep.mubr.bf16.mxu0 0
        %2580 = vmatmul.mubr.bf16.gmra.mrb[0].mxu0 %v2481
        %v2581 = vpop.f32.mrb[0].mxu0
        %v2582 = vadd.f32 0.0, %v2581
        %v2583 = vpop.f32.mrb[0].mxu0
        %v2584 = vpop.f32.mrb[0].mxu0
        %v2585 = vpop.f32.mrb[0].mxu0
        %2586 = vdwg.mxu0
        %v2587 = vadd.f32 %v2431, %v2582
        %s2588 = scalar_lea.vmem %s9, 6
        %v2589 = vld [vmem:[%s2588] sm:$0x3]
        %v2591 = vsel %vm2132, %v2589, 0
        %2593 = vmatprep.subr.bf16.mxu0 0
        %2594 = vmatpush1.bf16.msra.mxu0 %v2138
        %2595 = vmatprep.subr.bf16.mxu0 0
        %2596 = vmatpush1.bf16.msra.mxu0 0
        %2597 = vmatprep.subr.bf16.mxu0 0
        %2598 = vmatpush1.bf16.msra.mxu0 0
        %2599 = vmatprep.subr.bf16.mxu0 0
        %2600 = vmatpush1.bf16.msra.mxu0 0
        %2601 = vmatprep.subr.bf16.mxu0 0
        %2602 = vmatpush1.bf16.msra.mxu0 0
        %2603 = vmatprep.subr.bf16.mxu0 0
        %2604 = vmatpush1.bf16.msra.mxu0 0
        %2605 = vmatprep.subr.bf16.mxu0 0
        %2606 = vmatpush1.bf16.msra.mxu0 0
        %2607 = vmatprep.subr.bf16.mxu0 0
        %2608 = vmatpush1.bf16.msra.mxu0 0
        %2609 = vmatprep.subr.bf16.mxu0 0
        %2610 = vmatpush1.bf16.msra.mxu0 0
        %2611 = vmatprep.subr.bf16.mxu0 0
        %2612 = vmatpush1.bf16.msra.mxu0 0
        %2613 = vmatprep.subr.bf16.mxu0 0
        %2614 = vmatpush1.bf16.msra.mxu0 0
        %2615 = vmatprep.subr.bf16.mxu0 0
        %2616 = vmatpush1.bf16.msra.mxu0 0
        %2617 = vmatprep.subr.bf16.mxu0 0
        %2618 = vmatpush1.bf16.msra.mxu0 0
        %2619 = vmatprep.subr.bf16.mxu0 0
        %2620 = vmatpush1.bf16.msra.mxu0 0
        %2621 = vmatprep.subr.bf16.mxu0 0
        %2622 = vmatpush1.bf16.msra.mxu0 0
        %2623 = vmatprep.subr.bf16.mxu0 0
        %2624 = vmatpush1.bf16.msra.mxu0 0
        %2625 = vmatprep.mubr.bf16.mxu0 0
        %2626 = vmatmul.mubr.bf16.gmra.mrb[0].mxu0 %v2591
        %v2627 = vpop.f32.mrb[0].mxu0
        %v2628 = vadd.f32 0.0, %v2627
        %v2629 = vpop.f32.mrb[0].mxu0
        %v2630 = vpop.f32.mrb[0].mxu0
        %v2631 = vpop.f32.mrb[0].mxu0
        %2632 = vdwg.mxu0
        %v2633 = vpack.c.bf16 %v2628, %v2628
        %s2634 = scalar_lea.vmem [#allocation10], 192
        %v2635 = vld [vmem:[%s2634] sm:$0xf]
        %v2636 = vld [vmem:[%s2634 + $0x4] sm:$0xf]
        %v2637 = vld [vmem:[%s2634 + $0x8] sm:$0xf]
        %v2638 = vld [vmem:[%s2634 + $0xc] sm:$0xf]
        %v2639 = vld [vmem:[%s2634 + $0x10] sm:$0xf]
        %v2640 = vld [vmem:[%s2634 + $0x14] sm:$0xf]
        %v2641 = vld [vmem:[%s2634 + $0x18] sm:$0xf]
        %v2642 = vld [vmem:[%s2634 + $0x1c] sm:$0xf]
        %v2643 = vld [vmem:[%s2634 + $0x20] sm:$0xf]
        %v2644 = vld [vmem:[%s2634 + $0x24] sm:$0xf]
        %v2645 = vld [vmem:[%s2634 + $0x28] sm:$0xf]
        %v2646 = vld [vmem:[%s2634 + $0x2c] sm:$0xf]
        %v2647 = vld [vmem:[%s2634 + $0x30] sm:$0xf]
        %v2648 = vld [vmem:[%s2634 + $0x34] sm:$0xf]
        %v2649 = vld [vmem:[%s2634 + $0x38] sm:$0xf]
        %v2650 = vld [vmem:[%s2634 + $0x3c] sm:$0xf]
        %v2667 = vunpack.c.l.b16 %v2635
        %v2668 = vunpack.c.l.b16 %v2636
        %v2669 = vunpack.c.l.b16 %v2637
        %v2670 = vunpack.c.l.b16 %v2638
        %v2671 = vunpack.c.l.b16 %v2639
        %v2672 = vunpack.c.l.b16 %v2640
        %v2673 = vunpack.c.l.b16 %v2641
        %v2674 = vunpack.c.l.b16 %v2642
        %v2675 = vunpack.c.l.b16 %v2643
        %v2676 = vunpack.c.l.b16 %v2644
        %v2677 = vunpack.c.l.b16 %v2645
        %v2678 = vunpack.c.l.b16 %v2646
        %v2679 = vunpack.c.l.b16 %v2647
        %v2680 = vunpack.c.l.b16 %v2648
        %v2681 = vunpack.c.l.b16 %v2649
        %v2682 = vunpack.c.l.b16 %v2650
        %v2683 = vpack.c.b16 %v2668, %v2667
        %v2684 = vpack.c.b16 %v2670, %v2669
        %v2685 = vpack.c.b16 %v2672, %v2671
        %v2686 = vpack.c.b16 %v2674, %v2673
        %v2687 = vpack.c.b16 %v2676, %v2675
        %v2688 = vpack.c.b16 %v2678, %v2677
        %v2689 = vpack.c.b16 %v2680, %v2679
        %v2690 = vpack.c.b16 %v2682, %v2681
        %2699 = vmatprep.subr.bf16.mxu0 0
        %2700 = vmatpush1.bf16.msra.mxu0 %v2683
        %2701 = vmatprep.subr.bf16.mxu0 0
        %2702 = vmatpush1.bf16.msra.mxu0 %v2684
        %2703 = vmatprep.subr.bf16.mxu0 0
        %2704 = vmatpush1.bf16.msra.mxu0 %v2685
        %2705 = vmatprep.subr.bf16.mxu0 0
        %2706 = vmatpush1.bf16.msra.mxu0 %v2686
        %2707 = vmatprep.subr.bf16.mxu0 0
        %2708 = vmatpush1.bf16.msra.mxu0 %v2687
        %2709 = vmatprep.subr.bf16.mxu0 0
        %2710 = vmatpush1.bf16.msra.mxu0 %v2688
        %2711 = vmatprep.subr.bf16.mxu0 0
        %2712 = vmatpush1.bf16.msra.mxu0 %v2689
        %2713 = vmatprep.subr.bf16.mxu0 0
        %2714 = vmatpush1.bf16.msra.mxu0 %v2690
        %2715 = vmatprep.subr.bf16.mxu0 0
        %2716 = vmatpush1.bf16.msra.mxu0 0
        %2717 = vmatprep.subr.bf16.mxu0 0
        %2718 = vmatpush1.bf16.msra.mxu0 0
        %2719 = vmatprep.subr.bf16.mxu0 0
        %2720 = vmatpush1.bf16.msra.mxu0 0
        %2721 = vmatprep.subr.bf16.mxu0 0
        %2722 = vmatpush1.bf16.msra.mxu0 0
        %2723 = vmatprep.subr.bf16.mxu0 0
        %2724 = vmatpush1.bf16.msra.mxu0 0
        %2725 = vmatprep.subr.bf16.mxu0 0
        %2726 = vmatpush1.bf16.msra.mxu0 0
        %2727 = vmatprep.subr.bf16.mxu0 0
        %2728 = vmatpush1.bf16.msra.mxu0 0
        %2729 = vmatprep.subr.bf16.mxu0 0
        %2730 = vmatpush1.bf16.msra.mxu0 0
        %2731 = vmatprep.mubr.bf16.mxu0 0
        %2732 = vmatmul.mubr.bf16.gmra.mrb[0].mxu0 %v2633
        %v2733 = vpop.f32.mrb[0].mxu0
        %v2734 = vadd.f32 0.0, %v2733
        %v2735 = vpop.f32.mrb[0].mxu0
        %v2736 = vpop.f32.mrb[0].mxu0
        %v2737 = vpop.f32.mrb[0].mxu0
        %2738 = vdwg.mxu0
        %v2739 = vadd.f32 %v2587, %v2734
        %v2740 = vld [vmem:[%s10] sm:$0x1]
        %v2742 = vlaneseq
        %v2743 = vshrl.u32 %v2742, 7
        %v2744 = vsub.s32 0, %v2743
        %v2745 = vrot.slane %v2740, %v2744
        %v2747 = vadd.f32 %v2739, %v2745
        %v2748 = vsel %vm2136, %v2747, 0.0
        %v2749 = vrot.slane %v2748, 4
        %v2750 = vadd.f32 %v2748, %v2749
        %v2751 = vrot.slane %v2750, 2
        %v2752 = vadd.f32 %v2750, %v2751
        %v2753 = vrot.slane %v2752, 1
        %v2754 = vadd.f32 %v2752, %v2753
        %v2755 = vld [vmem:[#allocation11] sm:$0xff]
        %v2756 = vld [vmem:[#allocation11 + $0x8] sm:$0xff]
        %v2757 = vld [vmem:[#allocation11 + $0x10] sm:$0xff]
        %v2758 = vld [vmem:[#allocation11 + $0x18] sm:$0xff]
        %v2759 = vld [vmem:[#allocation11 + $0x20] sm:$0xff]
        %v2760 = vld [vmem:[#allocation11 + $0x28] sm:$0xff]
        %v2761 = vld [vmem:[#allocation11 + $0x30] sm:$0xff]
        %v2762 = vld [vmem:[#allocation11 + $0x38] sm:$0xff]
        %v2763 = vld [vmem:[#allocation11 + $0x40] sm:$0xff]
        %v2764 = vld [vmem:[#allocation11 + $0x48] sm:$0xff]
        %v2765 = vld [vmem:[#allocation11 + $0x50] sm:$0xff]
        %v2766 = vld [vmem:[#allocation11 + $0x58] sm:$0xff]
        %v2767 = vld [vmem:[#allocation11 + $0x60] sm:$0xff]
        %v2768 = vld [vmem:[#allocation11 + $0x68] sm:$0xff]
        %v2769 = vld [vmem:[#allocation11 + $0x70] sm:$0xff]
        %v2770 = vld [vmem:[#allocation11 + $0x78] sm:$0xff]
        %2771 = vmatprep.subr.mxu0 0.0
        %2772 = vmatpush1.msra.mxu0 %v2755
        %2773 = vmatprep.subr.mxu0 0.0
        %2774 = vmatpush1.msra.mxu0 %v2756
        %2775 = vmatprep.subr.mxu0 0.0
        %2776 = vmatpush1.msra.mxu0 %v2757
        %2777 = vmatprep.subr.mxu0 0.0
        %2778 = vmatpush1.msra.mxu0 %v2758
        %2779 = vmatprep.subr.mxu0 0.0
        %2780 = vmatpush1.msra.mxu0 %v2759
        %2781 = vmatprep.subr.mxu0 0.0
        %2782 = vmatpush1.msra.mxu0 %v2760
        %2783 = vmatprep.subr.mxu0 0.0
        %2784 = vmatpush1.msra.mxu0 %v2761
        %2785 = vmatprep.subr.mxu0 0.0
        %2786 = vmatpush1.msra.mxu0 %v2762
        %2787 = vmatprep.subr.mxu0 0.0
        %2788 = vmatpush1.msra.mxu0 %v2763
        %2789 = vmatprep.subr.mxu0 0.0
        %2790 = vmatpush1.msra.mxu0 %v2764
        %2791 = vmatprep.subr.mxu0 0.0
        %2792 = vmatpush1.msra.mxu0 %v2765
        %2793 = vmatprep.subr.mxu0 0.0
        %2794 = vmatpush1.msra.mxu0 %v2766
        %2795 = vmatprep.subr.mxu0 0.0
        %2796 = vmatpush1.msra.mxu0 %v2767
        %2797 = vmatprep.subr.mxu0 0.0
        %2798 = vmatpush1.msra.mxu0 %v2768
        %2799 = vmatprep.subr.mxu0 0.0
        %2800 = vmatpush1.msra.mxu0 %v2769
        %2801 = vmatprep.subr.mxu0 0.0
        %2802 = vmatpush1.msra.mxu0 %v2770
        %2803 = vmatprep.subr.mxu0 0.0
        %2804 = vmatpush1.msra.mxu0 0.0
        %2805 = vmatprep.subr.mxu0 0.0
        %2806 = vmatpush1.msra.mxu0 0.0
        %2807 = vmatprep.subr.mxu0 0.0
        %2808 = vmatpush1.msra.mxu0 0.0
        %2809 = vmatprep.subr.mxu0 0.0
        %2810 = vmatpush1.msra.mxu0 0.0
        %2811 = vmatprep.subr.mxu0 0.0
        %2812 = vmatpush1.msra.mxu0 0.0
        %2813 = vmatprep.subr.mxu0 0.0
        %2814 = vmatpush1.msra.mxu0 0.0
        %2815 = vmatprep.subr.mxu0 0.0
        %2816 = vmatpush1.msra.mxu0 0.0
        %2817 = vmatprep.subr.mxu0 0.0
        %2818 = vmatpush1.msra.mxu0 0.0
        %2819 = vmatprep.subr.mxu0 0.0
        %2820 = vmatpush1.msra.mxu0 0.0
        %2821 = vmatprep.subr.mxu0 0.0
        %2822 = vmatpush1.msra.mxu0 0.0
        %2823 = vmatprep.subr.mxu0 0.0
        %2824 = vmatpush1.msra.mxu0 0.0
        %2825 = vmatprep.subr.mxu0 0.0
        %2826 = vmatpush1.msra.mxu0 0.0
        %2827 = vmatprep.subr.mxu0 0.0
        %2828 = vmatpush1.msra.mxu0 0.0
        %2829 = vmatprep.subr.mxu0 0.0
        %2830 = vmatpush1.msra.mxu0 0.0
        %2831 = vmatprep.subr.mxu0 0.0
        %2832 = vmatpush1.msra.mxu0 0.0
        %2833 = vmatprep.subr.mxu0 0.0
        %2834 = vmatpush1.msra.mxu0 0.0
        %2835 = vmatprep.mubr.f32.mxu0 0.0
        %2836 = vmatmul.mubr.f32.gmra.mrb[0].mxu0 %v2754
        %v2837 = vpop.f32.mrb[0].mxu0
        %v2838 = vadd.f32 0.0, %v2837
        %v2839 = vpop.f32.mrb[0].mxu0
        %2840 = vdwg.mxu0
        %v2841 = vlaneseq
        %v2842 = vshrl.u32 %v2841, 7
        %v2843 = vsub.s32 0, %v2842
        %v2844 = vrot.slane %v2838, %v2843
        %v2845 = vsub.f32 %v2747, %v2844
        %v2846 = vmul.f32 %v2845, %v2845
        %v2847 = vsel %vm2136, %v2846, 0.0
        %v2848 = vrot.slane %v2847, 4
        %v2849 = vadd.f32 %v2847, %v2848
        %v2850 = vrot.slane %v2849, 2
        %v2851 = vadd.f32 %v2849, %v2850
        %v2852 = vrot.slane %v2851, 1
        %v2853 = vadd.f32 %v2851, %v2852
        %2854 = vmatprep.subr.mxu0 0.0
        %2855 = vmatpush1.msra.mxu0 %v2755
        %2856 = vmatprep.subr.mxu0 0.0
        %2857 = vmatpush1.msra.mxu0 %v2756
        %2858 = vmatprep.subr.mxu0 0.0
        %2859 = vmatpush1.msra.mxu0 %v2757
        %2860 = vmatprep.subr.mxu0 0.0
        %2861 = vmatpush1.msra.mxu0 %v2758
        %2862 = vmatprep.subr.mxu0 0.0
        %2863 = vmatpush1.msra.mxu0 %v2759
        %2864 = vmatprep.subr.mxu0 0.0
        %2865 = vmatpush1.msra.mxu0 %v2760
        %2866 = vmatprep.subr.mxu0 0.0
        %2867 = vmatpush1.msra.mxu0 %v2761
        %2868 = vmatprep.subr.mxu0 0.0
        %2869 = vmatpush1.msra.mxu0 %v2762
        %2870 = vmatprep.subr.mxu0 0.0
        %2871 = vmatpush1.msra.mxu0 %v2763
        %2872 = vmatprep.subr.mxu0 0.0
        %2873 = vmatpush1.msra.mxu0 %v2764
        %2874 = vmatprep.subr.mxu0 0.0
        %2875 = vmatpush1.msra.mxu0 %v2765
        %2876 = vmatprep.subr.mxu0 0.0
        %2877 = vmatpush1.msra.mxu0 %v2766
        %2878 = vmatprep.subr.mxu0 0.0
        %2879 = vmatpush1.msra.mxu0 %v2767
        %2880 = vmatprep.subr.mxu0 0.0
        %2881 = vmatpush1.msra.mxu0 %v2768
        %2882 = vmatprep.subr.mxu0 0.0
        %2883 = vmatpush1.msra.mxu0 %v2769
        %2884 = vmatprep.subr.mxu0 0.0
        %2885 = vmatpush1.msra.mxu0 %v2770
        %2886 = vmatprep.subr.mxu0 0.0
        %2887 = vmatpush1.msra.mxu0 0.0
        %2888 = vmatprep.subr.mxu0 0.0
        %2889 = vmatpush1.msra.mxu0 0.0
        %2890 = vmatprep.subr.mxu0 0.0
        %2891 = vmatpush1.msra.mxu0 0.0
        %2892 = vmatprep.subr.mxu0 0.0
        %2893 = vmatpush1.msra.mxu0 0.0
        %2894 = vmatprep.subr.mxu0 0.0
        %2895 = vmatpush1.msra.mxu0 0.0
        %2896 = vmatprep.subr.mxu0 0.0
        %2897 = vmatpush1.msra.mxu0 0.0
        %2898 = vmatprep.subr.mxu0 0.0
        %2899 = vmatpush1.msra.mxu0 0.0
        %2900 = vmatprep.subr.mxu0 0.0
        %2901 = vmatpush1.msra.mxu0 0.0
        %2902 = vmatprep.subr.mxu0 0.0
        %2903 = vmatpush1.msra.mxu0 0.0
        %2904 = vmatprep.subr.mxu0 0.0
        %2905 = vmatpush1.msra.mxu0 0.0
        %2906 = vmatprep.subr.mxu0 0.0
        %2907 = vmatpush1.msra.mxu0 0.0
        %2908 = vmatprep.subr.mxu0 0.0
        %2909 = vmatpush1.msra.mxu0 0.0
        %2910 = vmatprep.subr.mxu0 0.0
        %2911 = vmatpush1.msra.mxu0 0.0
        %2912 = vmatprep.subr.mxu0 0.0
        %2913 = vmatpush1.msra.mxu0 0.0
        %2914 = vmatprep.subr.mxu0 0.0
        %2915 = vmatpush1.msra.mxu0 0.0
        %2916 = vmatprep.subr.mxu0 0.0
        %2917 = vmatpush1.msra.mxu0 0.0
        %2918 = vmatprep.mubr.f32.mxu0 0.0
        %2919 = vmatmul.mubr.f32.gmra.mrb[0].mxu0 %v2853
        %v2920 = vpop.f32.mrb[0].mxu0
        %v2921 = vadd.f32 1e-05, %v2920
        %v2922 = vpop.f32.mrb[0].mxu0
        %2923 = vdwg.mxu0
        %v2924 = vrsqrt.pop %v2921
        %v2925 = vlaneseq
        %v2926 = vshrl.u32 %v2925, 7
        %v2927 = vsub.s32 0, %v2926
        %v2928 = vrot.slane %v2924, %v2927
        %v2929 = vmul.f32 %v2845, %v2928
        %vm2930 = vcmp.ge.f32.partialorder %v2929, 0.0
        %v2931 = vmul.f32 %v2929, 0.2
        %v2932 = vsel %vm2930, %v2929, %v2931
        %v2933 = vpack.c.bf16 %v2932, %v2932
        %v2934 = vld [vmem:[%s13] sm:$0x1]
        %vm2935 = vcmask 31744
        %v2937 = vsel %vm2935, %v2934, 0
        %vm2939 = vcmask 1041408
        %v2941 = vsel %vm2939, %v2933, 0
        %2943 = vmatprep.subr.bf16.mxu0 0
        %2944 = vmatpush1.bf16.msra.mxu0 %v2941
        %2945 = vmatprep.subr.bf16.mxu0 0
        %2946 = vmatpush1.bf16.msra.mxu0 0
        %2947 = vmatprep.subr.bf16.mxu0 0
        %2948 = vmatpush1.bf16.msra.mxu0 0
        %2949 = vmatprep.subr.bf16.mxu0 0
        %2950 = vmatpush1.bf16.msra.mxu0 0
        %2951 = vmatprep.subr.bf16.mxu0 0
        %2952 = vmatpush1.bf16.msra.mxu0 0
        %2953 = vmatprep.subr.bf16.mxu0 0
        %2954 = vmatpush1.bf16.msra.mxu0 0
        %2955 = vmatprep.subr.bf16.mxu0 0
        %2956 = vmatpush1.bf16.msra.mxu0 0
        %2957 = vmatprep.subr.bf16.mxu0 0
        %2958 = vmatpush1.bf16.msra.mxu0 0
        %2959 = vmatprep.subr.bf16.mxu0 0
        %2960 = vmatpush1.bf16.msra.mxu0 0
        %2961 = vmatprep.subr.bf16.mxu0 0
        %2962 = vmatpush1.bf16.msra.mxu0 0
        %2963 = vmatprep.subr.bf16.mxu0 0
        %2964 = vmatpush1.bf16.msra.mxu0 0
        %2965 = vmatprep.subr.bf16.mxu0 0
        %2966 = vmatpush1.bf16.msra.mxu0 0
        %2967 = vmatprep.subr.bf16.mxu0 0
        %2968 = vmatpush1.bf16.msra.mxu0 0
        %2969 = vmatprep.subr.bf16.mxu0 0
        %2970 = vmatpush1.bf16.msra.mxu0 0
        %2971 = vmatprep.subr.bf16.mxu0 0
        %2972 = vmatpush1.bf16.msra.mxu0 0
        %2973 = vmatprep.subr.bf16.mxu0 0
        %2974 = vmatpush1.bf16.msra.mxu0 0
        %2975 = vmatprep.mubr.bf16.mxu0 0
        %2976 = vmatmul.mubr.bf16.gmra.mrb[0].mxu0 %v2937
        %v2977 = vpop.f32.mrb[0].mxu0
        %v2978 = vadd.f32 0.0, %v2977
        %v2979 = vpop.f32.mrb[0].mxu0
        %v2980 = vpop.f32.mrb[0].mxu0
        %v2981 = vpop.f32.mrb[0].mxu0
        %2982 = vdwg.mxu0
        %v2983 = vpack.c.bf16 %v2978, %v2978
        %v2984 = vld [vmem:[#allocation13] sm:$0xf]
        %v2985 = vld [vmem:[#allocation13 + $0x4] sm:$0xf]
        %v2986 = vld [vmem:[#allocation13 + $0x8] sm:$0xf]
        %v2987 = vld [vmem:[#allocation13 + $0xc] sm:$0xf]
        %v2988 = vld [vmem:[#allocation13 + $0x10] sm:$0xf]
        %v2989 = vld [vmem:[#allocation13 + $0x14] sm:$0xf]
        %v2990 = vld [vmem:[#allocation13 + $0x18] sm:$0xf]
        %v2991 = vld [vmem:[#allocation13 + $0x1c] sm:$0xf]
        %v2992 = vld [vmem:[#allocation13 + $0x20] sm:$0xf]
        %v2993 = vld [vmem:[#allocation13 + $0x24] sm:$0xf]
        %v2994 = vld [vmem:[#allocation13 + $0x28] sm:$0xf]
        %v2995 = vld [vmem:[#allocation13 + $0x2c] sm:$0xf]
        %v2996 = vld [vmem:[#allocation13 + $0x30] sm:$0xf]
        %v2997 = vld [vmem:[#allocation13 + $0x34] sm:$0xf]
        %v2998 = vld [vmem:[#allocation13 + $0x38] sm:$0xf]
        %v2999 = vld [vmem:[#allocation13 + $0x3c] sm:$0xf]
        %s3000 = scalar_lea.vmem %s13, 1
        %v3001 = vld [vmem:[%s3000] sm:$0x1]
        %v3003 = vsel %vm2935, %v3001, 0
        %3005 = vmatprep.subr.bf16.mxu0 0
        %3006 = vmatpush1.bf16.msra.mxu0 %v2941
        %3007 = vmatprep.subr.bf16.mxu0 0
        %3008 = vmatpush1.bf16.msra.mxu0 0
        %3009 = vmatprep.subr.bf16.mxu0 0
        %3010 = vmatpush1.bf16.msra.mxu0 0
        %3011 = vmatprep.subr.bf16.mxu0 0
        %3012 = vmatpush1.bf16.msra.mxu0 0
        %3013 = vmatprep.subr.bf16.mxu0 0
        %3014 = vmatpush1.bf16.msra.mxu0 0
        %3015 = vmatprep.subr.bf16.mxu0 0
        %3016 = vmatpush1.bf16.msra.mxu0 0
        %3017 = vmatprep.subr.bf16.mxu0 0
        %3018 = vmatpush1.bf16.msra.mxu0 0
        %3019 = vmatprep.subr.bf16.mxu0 0
        %3020 = vmatpush1.bf16.msra.mxu0 0
        %3021 = vmatprep.subr.bf16.mxu0 0
        %3022 = vmatpush1.bf16.msra.mxu0 0
        %3023 = vmatprep.subr.bf16.mxu0 0
        %3024 = vmatpush1.bf16.msra.mxu0 0
        %3025 = vmatprep.subr.bf16.mxu0 0
        %3026 = vmatpush1.bf16.msra.mxu0 0
        %3027 = vmatprep.subr.bf16.mxu0 0
        %3028 = vmatpush1.bf16.msra.mxu0 0
        %3029 = vmatprep.subr.bf16.mxu0 0
        %3030 = vmatpush1.bf16.msra.mxu0 0
        %3031 = vmatprep.subr.bf16.mxu0 0
        %3032 = vmatpush1.bf16.msra.mxu0 0
        %3033 = vmatprep.subr.bf16.mxu0 0
        %3034 = vmatpush1.bf16.msra.mxu0 0
        %3035 = vmatprep.subr.bf16.mxu0 0
        %3036 = vmatpush1.bf16.msra.mxu0 0
        %3037 = vmatprep.mubr.bf16.mxu0 0
        %3038 = vmatmul.mubr.bf16.gmra.mrb[0].mxu0 %v3003
        %v3039 = vpop.f32.mrb[0].mxu0
        %v3040 = vadd.f32 0.0, %v3039
        %v3041 = vpop.f32.mrb[0].mxu0
        %v3042 = vpop.f32.mrb[0].mxu0
        %v3043 = vpop.f32.mrb[0].mxu0
        %3044 = vdwg.mxu0
        %v3045 = vpack.c.bf16 %v3040, %v3040
        %s3046 = scalar_lea.vmem [#allocation13], 64
        %v3047 = vld [vmem:[%s3046] sm:$0xf]
        %v3048 = vld [vmem:[%s3046 + $0x4] sm:$0xf]
        %v3049 = vld [vmem:[%s3046 + $0x8] sm:$0xf]
        %v3050 = vld [vmem:[%s3046 + $0xc] sm:$0xf]
        %v3051 = vld [vmem:[%s3046 + $0x10] sm:$0xf]
        %v3052 = vld [vmem:[%s3046 + $0x14] sm:$0xf]
        %v3053 = vld [vmem:[%s3046 + $0x18] sm:$0xf]
        %v3054 = vld [vmem:[%s3046 + $0x1c] sm:$0xf]
        %v3055 = vld [vmem:[%s3046 + $0x20] sm:$0xf]
        %v3056 = vld [vmem:[%s3046 + $0x24] sm:$0xf]
        %v3057 = vld [vmem:[%s3046 + $0x28] sm:$0xf]
        %v3058 = vld [vmem:[%s3046 + $0x2c] sm:$0xf]
        %v3059 = vld [vmem:[%s3046 + $0x30] sm:$0xf]
        %v3060 = vld [vmem:[%s3046 + $0x34] sm:$0xf]
        %v3061 = vld [vmem:[%s3046 + $0x38] sm:$0xf]
        %v3062 = vld [vmem:[%s3046 + $0x3c] sm:$0xf]
        %v3079 = vunpack.c.l.b16 %v3047
        %v3080 = vunpack.c.l.b16 %v3048
        %v3081 = vunpack.c.l.b16 %v3049
        %v3082 = vunpack.c.l.b16 %v3050
        %v3083 = vunpack.c.l.b16 %v3051
        %v3084 = vunpack.c.l.b16 %v3052
        %v3085 = vunpack.c.l.b16 %v3053
        %v3086 = vunpack.c.l.b16 %v3054
        %v3087 = vunpack.c.l.b16 %v3055
        %v3088 = vunpack.c.l.b16 %v3056
        %v3089 = vunpack.c.l.b16 %v3057
        %v3090 = vunpack.c.l.b16 %v3058
        %v3091 = vunpack.c.l.b16 %v3059
        %v3092 = vunpack.c.l.b16 %v3060
        %v3093 = vunpack.c.l.b16 %v3061
        %v3094 = vunpack.c.l.b16 %v3062
        %v3095 = vpack.c.b16 %v3080, %v3079
        %v3096 = vpack.c.b16 %v3082, %v3081
        %v3097 = vpack.c.b16 %v3084, %v3083
        %v3098 = vpack.c.b16 %v3086, %v3085
        %v3099 = vpack.c.b16 %v3088, %v3087
        %v3100 = vpack.c.b16 %v3090, %v3089
        %v3101 = vpack.c.b16 %v3092, %v3091
        %v3102 = vpack.c.b16 %v3094, %v3093
        %3111 = vmatprep.subr.bf16.mxu0 0
        %3112 = vmatpush1.bf16.msra.mxu0 %v3095
        %3113 = vmatprep.subr.bf16.mxu0 0
        %3114 = vmatpush1.bf16.msra.mxu0 %v3096
        %3115 = vmatprep.subr.bf16.mxu0 0
        %3116 = vmatpush1.bf16.msra.mxu0 %v3097
        %3117 = vmatprep.subr.bf16.mxu0 0
        %3118 = vmatpush1.bf16.msra.mxu0 %v3098
        %3119 = vmatprep.subr.bf16.mxu0 0
        %3120 = vmatpush1.bf16.msra.mxu0 %v3099
        %3121 = vmatprep.subr.bf16.mxu0 0
        %3122 = vmatpush1.bf16.msra.mxu0 %v3100
        %3123 = vmatprep.subr.bf16.mxu0 0
        %3124 = vmatpush1.bf16.msra.mxu0 %v3101
        %3125 = vmatprep.subr.bf16.mxu0 0
        %3126 = vmatpush1.bf16.msra.mxu0 %v3102
        %3127 = vmatprep.subr.bf16.mxu0 0
        %3128 = vmatpush1.bf16.msra.mxu0 0
        %3129 = vmatprep.subr.bf16.mxu0 0
        %3130 = vmatpush1.bf16.msra.mxu0 0
        %3131 = vmatprep.subr.bf16.mxu0 0
        %3132 = vmatpush1.bf16.msra.mxu0 0
        %3133 = vmatprep.subr.bf16.mxu0 0
        %3134 = vmatpush1.bf16.msra.mxu0 0
        %3135 = vmatprep.subr.bf16.mxu0 0
        %3136 = vmatpush1.bf16.msra.mxu0 0
        %3137 = vmatprep.subr.bf16.mxu0 0
        %3138 = vmatpush1.bf16.msra.mxu0 0
        %3139 = vmatprep.subr.bf16.mxu0 0
        %3140 = vmatpush1.bf16.msra.mxu0 0
        %3141 = vmatprep.subr.bf16.mxu0 0
        %3142 = vmatpush1.bf16.msra.mxu0 0
        %3143 = vmatprep.mubr.bf16.mxu0 0
        %3144 = vmatmul.mubr.bf16.gmra.mrb[0].mxu0 %v3045
        %v3145 = vpop.f32.mrb[0].mxu0
        %v3146 = vadd.f32 0.0, %v3145
        %v3147 = vpop.f32.mrb[0].mxu0
        %v3148 = vpop.f32.mrb[0].mxu0
        %v3149 = vpop.f32.mrb[0].mxu0
        %3150 = vdwg.mxu0
        %v3167 = vunpack.c.l.b16 %v2984
        %v3168 = vunpack.c.l.b16 %v2985
        %v3169 = vunpack.c.l.b16 %v2986
        %v3170 = vunpack.c.l.b16 %v2987
        %v3171 = vunpack.c.l.b16 %v2988
        %v3172 = vunpack.c.l.b16 %v2989
        %v3173 = vunpack.c.l.b16 %v2990
        %v3174 = vunpack.c.l.b16 %v2991
        %v3175 = vunpack.c.l.b16 %v2992
        %v3176 = vunpack.c.l.b16 %v2993
        %v3177 = vunpack.c.l.b16 %v2994
        %v3178 = vunpack.c.l.b16 %v2995
        %v3179 = vunpack.c.l.b16 %v2996
        %v3180 = vunpack.c.l.b16 %v2997
        %v3181 = vunpack.c.l.b16 %v2998
        %v3182 = vunpack.c.l.b16 %v2999
        %v3183 = vpack.c.b16 %v3168, %v3167
        %v3184 = vpack.c.b16 %v3170, %v3169
        %v3185 = vpack.c.b16 %v3172, %v3171
        %v3186 = vpack.c.b16 %v3174, %v3173
        %v3187 = vpack.c.b16 %v3176, %v3175
        %v3188 = vpack.c.b16 %v3178, %v3177
        %v3189 = vpack.c.b16 %v3180, %v3179
        %v3190 = vpack.c.b16 %v3182, %v3181
        %3199 = vmatprep.subr.bf16.mxu0 0
        %3200 = vmatpush1.bf16.msra.mxu0 %v3183
        %3201 = vmatprep.subr.bf16.mxu0 0
        %3202 = vmatpush1.bf16.msra.mxu0 %v3184
        %3203 = vmatprep.subr.bf16.mxu0 0
        %3204 = vmatpush1.bf16.msra.mxu0 %v3185
        %3205 = vmatprep.subr.bf16.mxu0 0
        %3206 = vmatpush1.bf16.msra.mxu0 %v3186
        %3207 = vmatprep.subr.bf16.mxu0 0
        %3208 = vmatpush1.bf16.msra.mxu0 %v3187
        %3209 = vmatprep.subr.bf16.mxu0 0
        %3210 = vmatpush1.bf16.msra.mxu0 %v3188
        %3211 = vmatprep.subr.bf16.mxu0 0
        %3212 = vmatpush1.bf16.msra.mxu0 %v3189
        %3213 = vmatprep.subr.bf16.mxu0 0
        %3214 = vmatpush1.bf16.msra.mxu0 %v3190
        %3215 = vmatprep.subr.bf16.mxu0 0
        %3216 = vmatpush1.bf16.msra.mxu0 0
        %3217 = vmatprep.subr.bf16.mxu0 0
        %3218 = vmatpush1.bf16.msra.mxu0 0
        %3219 = vmatprep.subr.bf16.mxu0 0
        %3220 = vmatpush1.bf16.msra.mxu0 0
        %3221 = vmatprep.subr.bf16.mxu0 0
        %3222 = vmatpush1.bf16.msra.mxu0 0
        %3223 = vmatprep.subr.bf16.mxu0 0
        %3224 = vmatpush1.bf16.msra.mxu0 0
        %3225 = vmatprep.subr.bf16.mxu0 0
        %3226 = vmatpush1.bf16.msra.mxu0 0
        %3227 = vmatprep.subr.bf16.mxu0 0
        %3228 = vmatpush1.bf16.msra.mxu0 0
        %3229 = vmatprep.subr.bf16.mxu0 0
        %3230 = vmatpush1.bf16.msra.mxu0 0
        %3231 = vmatprep.mubr.bf16.mxu0 0
        %3232 = vmatmul.mubr.bf16.gmra.mrb[0].mxu0 %v2983
        %v3233 = vpop.f32.mrb[0].mxu0
        %v3234 = vadd.f32 %v3146, %v3233
        %v3235 = vpop.f32.mrb[0].mxu0
        %v3236 = vpop.f32.mrb[0].mxu0
        %v3237 = vpop.f32.mrb[0].mxu0
        %3238 = vdwg.mxu0
        %s3239 = scalar_lea.vmem %s13, 2
        %v3240 = vld [vmem:[%s3239] sm:$0x1]
        %v3242 = vsel %vm2935, %v3240, 0
        %3244 = vmatprep.subr.bf16.mxu0 0
        %3245 = vmatpush1.bf16.msra.mxu0 %v2941
        %3246 = vmatprep.subr.bf16.mxu0 0
        %3247 = vmatpush1.bf16.msra.mxu0 0
        %3248 = vmatprep.subr.bf16.mxu0 0
        %3249 = vmatpush1.bf16.msra.mxu0 0
        %3250 = vmatprep.subr.bf16.mxu0 0
        %3251 = vmatpush1.bf16.msra.mxu0 0
        %3252 = vmatprep.subr.bf16.mxu0 0
        %3253 = vmatpush1.bf16.msra.mxu0 0
        %3254 = vmatprep.subr.bf16.mxu0 0
        %3255 = vmatpush1.bf16.msra.mxu0 0
        %3256 = vmatprep.subr.bf16.mxu0 0
        %3257 = vmatpush1.bf16.msra.mxu0 0
        %3258 = vmatprep.subr.bf16.mxu0 0
        %3259 = vmatpush1.bf16.msra.mxu0 0
        %3260 = vmatprep.subr.bf16.mxu0 0
        %3261 = vmatpush1.bf16.msra.mxu0 0
        %3262 = vmatprep.subr.bf16.mxu0 0
        %3263 = vmatpush1.bf16.msra.mxu0 0
        %3264 = vmatprep.subr.bf16.mxu0 0
        %3265 = vmatpush1.bf16.msra.mxu0 0
        %3266 = vmatprep.subr.bf16.mxu0 0
        %3267 = vmatpush1.bf16.msra.mxu0 0
        %3268 = vmatprep.subr.bf16.mxu0 0
        %3269 = vmatpush1.bf16.msra.mxu0 0
        %3270 = vmatprep.subr.bf16.mxu0 0
        %3271 = vmatpush1.bf16.msra.mxu0 0
        %3272 = vmatprep.subr.bf16.mxu0 0
        %3273 = vmatpush1.bf16.msra.mxu0 0
        %3274 = vmatprep.subr.bf16.mxu0 0
        %3275 = vmatpush1.bf16.msra.mxu0 0
        %3276 = vmatprep.mubr.bf16.mxu0 0
        %3277 = vmatmul.mubr.bf16.gmra.mrb[0].mxu0 %v3242
        %v3278 = vpop.f32.mrb[0].mxu0
        %v3279 = vadd.f32 0.0, %v3278
        %v3280 = vpop.f32.mrb[0].mxu0
        %v3281 = vpop.f32.mrb[0].mxu0
        %v3282 = vpop.f32.mrb[0].mxu0
        %3283 = vdwg.mxu0
        %v3284 = vpack.c.bf16 %v3279, %v3279
        %s3285 = scalar_lea.vmem [#allocation13], 128
        %v3286 = vld [vmem:[%s3285] sm:$0xf]
        %v3287 = vld [vmem:[%s3285 + $0x4] sm:$0xf]
        %v3288 = vld [vmem:[%s3285 + $0x8] sm:$0xf]
        %v3289 = vld [vmem:[%s3285 + $0xc] sm:$0xf]
        %v3290 = vld [vmem:[%s3285 + $0x10] sm:$0xf]
        %v3291 = vld [vmem:[%s3285 + $0x14] sm:$0xf]
        %v3292 = vld [vmem:[%s3285 + $0x18] sm:$0xf]
        %v3293 = vld [vmem:[%s3285 + $0x1c] sm:$0xf]
        %v3294 = vld [vmem:[%s3285 + $0x20] sm:$0xf]
        %v3295 = vld [vmem:[%s3285 + $0x24] sm:$0xf]
        %v3296 = vld [vmem:[%s3285 + $0x28] sm:$0xf]
        %v3297 = vld [vmem:[%s3285 + $0x2c] sm:$0xf]
        %v3298 = vld [vmem:[%s3285 + $0x30] sm:$0xf]
        %v3299 = vld [vmem:[%s3285 + $0x34] sm:$0xf]
        %v3300 = vld [vmem:[%s3285 + $0x38] sm:$0xf]
        %v3301 = vld [vmem:[%s3285 + $0x3c] sm:$0xf]
        %v3318 = vunpack.c.l.b16 %v3286
        %v3319 = vunpack.c.l.b16 %v3287
        %v3320 = vunpack.c.l.b16 %v3288
        %v3321 = vunpack.c.l.b16 %v3289
        %v3322 = vunpack.c.l.b16 %v3290
        %v3323 = vunpack.c.l.b16 %v3291
        %v3324 = vunpack.c.l.b16 %v3292
        %v3325 = vunpack.c.l.b16 %v3293
        %v3326 = vunpack.c.l.b16 %v3294
        %v3327 = vunpack.c.l.b16 %v3295
        %v3328 = vunpack.c.l.b16 %v3296
        %v3329 = vunpack.c.l.b16 %v3297
        %v3330 = vunpack.c.l.b16 %v3298
        %v3331 = vunpack.c.l.b16 %v3299
        %v3332 = vunpack.c.l.b16 %v3300
        %v3333 = vunpack.c.l.b16 %v3301
        %v3334 = vpack.c.b16 %v3319, %v3318
        %v3335 = vpack.c.b16 %v3321, %v3320
        %v3336 = vpack.c.b16 %v3323, %v3322
        %v3337 = vpack.c.b16 %v3325, %v3324
        %v3338 = vpack.c.b16 %v3327, %v3326
        %v3339 = vpack.c.b16 %v3329, %v3328
        %v3340 = vpack.c.b16 %v3331, %v3330
        %v3341 = vpack.c.b16 %v3333, %v3332
        %3350 = vmatprep.subr.bf16.mxu0 0
        %3351 = vmatpush1.bf16.msra.mxu0 %v3334
        %3352 = vmatprep.subr.bf16.mxu0 0
        %3353 = vmatpush1.bf16.msra.mxu0 %v3335
        %3354 = vmatprep.subr.bf16.mxu0 0
        %3355 = vmatpush1.bf16.msra.mxu0 %v3336
        %3356 = vmatprep.subr.bf16.mxu0 0
        %3357 = vmatpush1.bf16.msra.mxu0 %v3337
        %3358 = vmatprep.subr.bf16.mxu0 0
        %3359 = vmatpush1.bf16.msra.mxu0 %v3338
        %3360 = vmatprep.subr.bf16.mxu0 0
        %3361 = vmatpush1.bf16.msra.mxu0 %v3339
        %3362 = vmatprep.subr.bf16.mxu0 0
        %3363 = vmatpush1.bf16.msra.mxu0 %v3340
        %3364 = vmatprep.subr.bf16.mxu0 0
        %3365 = vmatpush1.bf16.msra.mxu0 %v3341
        %3366 = vmatprep.subr.bf16.mxu0 0
        %3367 = vmatpush1.bf16.msra.mxu0 0
        %3368 = vmatprep.subr.bf16.mxu0 0
        %3369 = vmatpush1.bf16.msra.mxu0 0
        %3370 = vmatprep.subr.bf16.mxu0 0
        %3371 = vmatpush1.bf16.msra.mxu0 0
        %3372 = vmatprep.subr.bf16.mxu0 0
        %3373 = vmatpush1.bf16.msra.mxu0 0
        %3374 = vmatprep.subr.bf16.mxu0 0
        %3375 = vmatpush1.bf16.msra.mxu0 0
        %3376 = vmatprep.subr.bf16.mxu0 0
        %3377 = vmatpush1.bf16.msra.mxu0 0
        %3378 = vmatprep.subr.bf16.mxu0 0
        %3379 = vmatpush1.bf16.msra.mxu0 0
        %3380 = vmatprep.subr.bf16.mxu0 0
        %3381 = vmatpush1.bf16.msra.mxu0 0
        %3382 = vmatprep.mubr.bf16.mxu0 0
        %3383 = vmatmul.mubr.bf16.gmra.mrb[0].mxu0 %v3284
        %v3384 = vpop.f32.mrb[0].mxu0
        %v3385 = vadd.f32 0.0, %v3384
        %v3386 = vpop.f32.mrb[0].mxu0
        %v3387 = vpop.f32.mrb[0].mxu0
        %v3388 = vpop.f32.mrb[0].mxu0
        %3389 = vdwg.mxu0
        %v3390 = vadd.f32 %v3234, %v3385
        %s3391 = scalar_lea.vmem %s13, 3
        %v3392 = vld [vmem:[%s3391] sm:$0x1]
        %v3394 = vsel %vm2935, %v3392, 0
        %3396 = vmatprep.subr.bf16.mxu0 0
        %3397 = vmatpush1.bf16.msra.mxu0 %v2941
        %3398 = vmatprep.subr.bf16.mxu0 0
        %3399 = vmatpush1.bf16.msra.mxu0 0
        %3400 = vmatprep.subr.bf16.mxu0 0
        %3401 = vmatpush1.bf16.msra.mxu0 0
        %3402 = vmatprep.subr.bf16.mxu0 0
        %3403 = vmatpush1.bf16.msra.mxu0 0
        %3404 = vmatprep.subr.bf16.mxu0 0
        %3405 = vmatpush1.bf16.msra.mxu0 0
        %3406 = vmatprep.subr.bf16.mxu0 0
        %3407 = vmatpush1.bf16.msra.mxu0 0
        %3408 = vmatprep.subr.bf16.mxu0 0
        %3409 = vmatpush1.bf16.msra.mxu0 0
        %3410 = vmatprep.subr.bf16.mxu0 0
        %3411 = vmatpush1.bf16.msra.mxu0 0
        %3412 = vmatprep.subr.bf16.mxu0 0
        %3413 = vmatpush1.bf16.msra.mxu0 0
        %3414 = vmatprep.subr.bf16.mxu0 0
        %3415 = vmatpush1.bf16.msra.mxu0 0
        %3416 = vmatprep.subr.bf16.mxu0 0
        %3417 = vmatpush1.bf16.msra.mxu0 0
        %3418 = vmatprep.subr.bf16.mxu0 0
        %3419 = vmatpush1.bf16.msra.mxu0 0
        %3420 = vmatprep.subr.bf16.mxu0 0
        %3421 = vmatpush1.bf16.msra.mxu0 0
        %3422 = vmatprep.subr.bf16.mxu0 0
        %3423 = vmatpush1.bf16.msra.mxu0 0
        %3424 = vmatprep.subr.bf16.mxu0 0
        %3425 = vmatpush1.bf16.msra.mxu0 0
        %3426 = vmatprep.subr.bf16.mxu0 0
        %3427 = vmatpush1.bf16.msra.mxu0 0
        %3428 = vmatprep.mubr.bf16.mxu0 0
        %3429 = vmatmul.mubr.bf16.gmra.mrb[0].mxu0 %v3394
        %v3430 = vpop.f32.mrb[0].mxu0
        %v3431 = vadd.f32 0.0, %v3430
        %v3432 = vpop.f32.mrb[0].mxu0
        %v3433 = vpop.f32.mrb[0].mxu0
        %v3434 = vpop.f32.mrb[0].mxu0
        %3435 = vdwg.mxu0
        %v3436 = vpack.c.bf16 %v3431, %v3431
        %s3437 = scalar_lea.vmem [#allocation13], 192
        %v3438 = vld [vmem:[%s3437] sm:$0xf]
        %v3439 = vld [vmem:[%s3437 + $0x4] sm:$0xf]
        %v3440 = vld [vmem:[%s3437 + $0x8] sm:$0xf]
        %v3441 = vld [vmem:[%s3437 + $0xc] sm:$0xf]
        %v3442 = vld [vmem:[%s3437 + $0x10] sm:$0xf]
        %v3443 = vld [vmem:[%s3437 + $0x14] sm:$0xf]
        %v3444 = vld [vmem:[%s3437 + $0x18] sm:$0xf]
        %v3445 = vld [vmem:[%s3437 + $0x1c] sm:$0xf]
        %v3446 = vld [vmem:[%s3437 + $0x20] sm:$0xf]
        %v3447 = vld [vmem:[%s3437 + $0x24] sm:$0xf]
        %v3448 = vld [vmem:[%s3437 + $0x28] sm:$0xf]
        %v3449 = vld [vmem:[%s3437 + $0x2c] sm:$0xf]
        %v3450 = vld [vmem:[%s3437 + $0x30] sm:$0xf]
        %v3451 = vld [vmem:[%s3437 + $0x34] sm:$0xf]
        %v3452 = vld [vmem:[%s3437 + $0x38] sm:$0xf]
        %v3453 = vld [vmem:[%s3437 + $0x3c] sm:$0xf]
        %v3470 = vunpack.c.l.b16 %v3438
        %v3471 = vunpack.c.l.b16 %v3439
        %v3472 = vunpack.c.l.b16 %v3440
        %v3473 = vunpack.c.l.b16 %v3441
        %v3474 = vunpack.c.l.b16 %v3442
        %v3475 = vunpack.c.l.b16 %v3443
        %v3476 = vunpack.c.l.b16 %v3444
        %v3477 = vunpack.c.l.b16 %v3445
        %v3478 = vunpack.c.l.b16 %v3446
        %v3479 = vunpack.c.l.b16 %v3447
        %v3480 = vunpack.c.l.b16 %v3448
        %v3481 = vunpack.c.l.b16 %v3449
        %v3482 = vunpack.c.l.b16 %v3450
        %v3483 = vunpack.c.l.b16 %v3451
        %v3484 = vunpack.c.l.b16 %v3452
        %v3485 = vunpack.c.l.b16 %v3453
        %v3486 = vpack.c.b16 %v3471, %v3470
        %v3487 = vpack.c.b16 %v3473, %v3472
        %v3488 = vpack.c.b16 %v3475, %v3474
        %v3489 = vpack.c.b16 %v3477, %v3476
        %v3490 = vpack.c.b16 %v3479, %v3478
        %v3491 = vpack.c.b16 %v3481, %v3480
        %v3492 = vpack.c.b16 %v3483, %v3482
        %v3493 = vpack.c.b16 %v3485, %v3484
        %3502 = vmatprep.subr.bf16.mxu0 0
        %3503 = vmatpush1.bf16.msra.mxu0 %v3486
        %3504 = vmatprep.subr.bf16.mxu0 0
        %3505 = vmatpush1.bf16.msra.mxu0 %v3487
        %3506 = vmatprep.subr.bf16.mxu0 0
        %3507 = vmatpush1.bf16.msra.mxu0 %v3488
        %3508 = vmatprep.subr.bf16.mxu0 0
        %3509 = vmatpush1.bf16.msra.mxu0 %v3489
        %3510 = vmatprep.subr.bf16.mxu0 0
        %3511 = vmatpush1.bf16.msra.mxu0 %v3490
        %3512 = vmatprep.subr.bf16.mxu0 0
        %3513 = vmatpush1.bf16.msra.mxu0 %v3491
        %3514 = vmatprep.subr.bf16.mxu0 0
        %3515 = vmatpush1.bf16.msra.mxu0 %v3492
        %3516 = vmatprep.subr.bf16.mxu0 0
        %3517 = vmatpush1.bf16.msra.mxu0 %v3493
        %3518 = vmatprep.subr.bf16.mxu0 0
        %3519 = vmatpush1.bf16.msra.mxu0 0
        %3520 = vmatprep.subr.bf16.mxu0 0
        %3521 = vmatpush1.bf16.msra.mxu0 0
        %3522 = vmatprep.subr.bf16.mxu0 0
        %3523 = vmatpush1.bf16.msra.mxu0 0
        %3524 = vmatprep.subr.bf16.mxu0 0
        %3525 = vmatpush1.bf16.msra.mxu0 0
        %3526 = vmatprep.subr.bf16.mxu0 0
        %3527 = vmatpush1.bf16.msra.mxu0 0
        %3528 = vmatprep.subr.bf16.mxu0 0
        %3529 = vmatpush1.bf16.msra.mxu0 0
        %3530 = vmatprep.subr.bf16.mxu0 0
        %3531 = vmatpush1.bf16.msra.mxu0 0
        %3532 = vmatprep.subr.bf16.mxu0 0
        %3533 = vmatpush1.bf16.msra.mxu0 0
        %3534 = vmatprep.mubr.bf16.mxu0 0
        %3535 = vmatmul.mubr.bf16.gmra.mrb[0].mxu0 %v3436
        %v3536 = vpop.f32.mrb[0].mxu0
        %v3537 = vadd.f32 0.0, %v3536
        %v3538 = vpop.f32.mrb[0].mxu0
        %v3539 = vpop.f32.mrb[0].mxu0
        %v3540 = vpop.f32.mrb[0].mxu0
        %3541 = vdwg.mxu0
        %v3542 = vadd.f32 %v3390, %v3537
        %v3543 = vld [vmem:[%s14] sm:$0x1]
        %v3545 = vlaneseq
        %v3546 = vshrl.u32 %v3545, 7
        %v3547 = vsub.s32 0, %v3546
        %v3548 = vrot.slane %v3543, %v3547
        %v3550 = vadd.f32 %v3542, %v3548
        %v3551 = vsel %vm2939, %v3550, 0.0
        %v3552 = vrot.slane %v3551, 4
        %v3553 = vadd.f32 %v3551, %v3552
        %v3554 = vrot.slane %v3553, 2
        %v3555 = vadd.f32 %v3553, %v3554
        %v3556 = vrot.slane %v3555, 1
        %v3557 = vadd.f32 %v3555, %v3556
        %v3558 = vld [vmem:[#allocation14] sm:$0xff]
        %v3559 = vld [vmem:[#allocation14 + $0x8] sm:$0xff]
        %v3560 = vld [vmem:[#allocation14 + $0x10] sm:$0xff]
        %v3561 = vld [vmem:[#allocation14 + $0x18] sm:$0xff]
        %v3562 = vld [vmem:[#allocation14 + $0x20] sm:$0xff]
        %v3563 = vld [vmem:[#allocation14 + $0x28] sm:$0xff]
        %v3564 = vld [vmem:[#allocation14 + $0x30] sm:$0xff]
        %v3565 = vld [vmem:[#allocation14 + $0x38] sm:$0xff]
        %v3566 = vld [vmem:[#allocation14 + $0x40] sm:$0xff]
        %v3567 = vld [vmem:[#allocation14 + $0x48] sm:$0xff]
        %v3568 = vld [vmem:[#allocation14 + $0x50] sm:$0xff]
        %v3569 = vld [vmem:[#allocation14 + $0x58] sm:$0xff]
        %v3570 = vld [vmem:[#allocation14 + $0x60] sm:$0xff]
        %v3571 = vld [vmem:[#allocation14 + $0x68] sm:$0xff]
        %v3572 = vld [vmem:[#allocation14 + $0x70] sm:$0xff]
        %v3573 = vld [vmem:[#allocation14 + $0x78] sm:$0xff]
        %3574 = vmatprep.subr.mxu0 0.0
        %3575 = vmatpush1.msra.mxu0 %v3558
        %3576 = vmatprep.subr.mxu0 0.0
        %3577 = vmatpush1.msra.mxu0 %v3559
        %3578 = vmatprep.subr.mxu0 0.0
        %3579 = vmatpush1.msra.mxu0 %v3560
        %3580 = vmatprep.subr.mxu0 0.0
        %3581 = vmatpush1.msra.mxu0 %v3561
        %3582 = vmatprep.subr.mxu0 0.0
        %3583 = vmatpush1.msra.mxu0 %v3562
        %3584 = vmatprep.subr.mxu0 0.0
        %3585 = vmatpush1.msra.mxu0 %v3563
        %3586 = vmatprep.subr.mxu0 0.0
        %3587 = vmatpush1.msra.mxu0 %v3564
        %3588 = vmatprep.subr.mxu0 0.0
        %3589 = vmatpush1.msra.mxu0 %v3565
        %3590 = vmatprep.subr.mxu0 0.0
        %3591 = vmatpush1.msra.mxu0 %v3566
        %3592 = vmatprep.subr.mxu0 0.0
        %3593 = vmatpush1.msra.mxu0 %v3567
        %3594 = vmatprep.subr.mxu0 0.0
        %3595 = vmatpush1.msra.mxu0 %v3568
        %3596 = vmatprep.subr.mxu0 0.0
        %3597 = vmatpush1.msra.mxu0 %v3569
        %3598 = vmatprep.subr.mxu0 0.0
        %3599 = vmatpush1.msra.mxu0 %v3570
        %3600 = vmatprep.subr.mxu0 0.0
        %3601 = vmatpush1.msra.mxu0 %v3571
        %3602 = vmatprep.subr.mxu0 0.0
        %3603 = vmatpush1.msra.mxu0 %v3572
        %3604 = vmatprep.subr.mxu0 0.0
        %3605 = vmatpush1.msra.mxu0 %v3573
        %3606 = vmatprep.subr.mxu0 0.0
        %3607 = vmatpush1.msra.mxu0 0.0
        %3608 = vmatprep.subr.mxu0 0.0
        %3609 = vmatpush1.msra.mxu0 0.0
        %3610 = vmatprep.subr.mxu0 0.0
        %3611 = vmatpush1.msra.mxu0 0.0
        %3612 = vmatprep.subr.mxu0 0.0
        %3613 = vmatpush1.msra.mxu0 0.0
        %3614 = vmatprep.subr.mxu0 0.0
        %3615 = vmatpush1.msra.mxu0 0.0
        %3616 = vmatprep.subr.mxu0 0.0
        %3617 = vmatpush1.msra.mxu0 0.0
        %3618 = vmatprep.subr.mxu0 0.0
        %3619 = vmatpush1.msra.mxu0 0.0
        %3620 = vmatprep.subr.mxu0 0.0
        %3621 = vmatpush1.msra.mxu0 0.0
        %3622 = vmatprep.subr.mxu0 0.0
        %3623 = vmatpush1.msra.mxu0 0.0
        %3624 = vmatprep.subr.mxu0 0.0
        %3625 = vmatpush1.msra.mxu0 0.0
        %3626 = vmatprep.subr.mxu0 0.0
        %3627 = vmatpush1.msra.mxu0 0.0
        %3628 = vmatprep.subr.mxu0 0.0
        %3629 = vmatpush1.msra.mxu0 0.0
        %3630 = vmatprep.subr.mxu0 0.0
        %3631 = vmatpush1.msra.mxu0 0.0
        %3632 = vmatprep.subr.mxu0 0.0
        %3633 = vmatpush1.msra.mxu0 0.0
        %3634 = vmatprep.subr.mxu0 0.0
        %3635 = vmatpush1.msra.mxu0 0.0
        %3636 = vmatprep.subr.mxu0 0.0
        %3637 = vmatpush1.msra.mxu0 0.0
        %3638 = vmatprep.mubr.f32.mxu0 0.0
        %3639 = vmatmul.mubr.f32.gmra.mrb[0].mxu0 %v3557
        %v3640 = vpop.f32.mrb[0].mxu0
        %v3641 = vadd.f32 0.0, %v3640
        %v3642 = vpop.f32.mrb[0].mxu0
        %3643 = vdwg.mxu0
        %v3644 = vlaneseq
        %v3645 = vshrl.u32 %v3644, 7
        %v3646 = vsub.s32 0, %v3645
        %v3647 = vrot.slane %v3641, %v3646
        %v3648 = vsub.f32 %v3550, %v3647
        %v3649 = vmul.f32 %v3648, %v3648
        %v3650 = vsel %vm2939, %v3649, 0.0
        %v3651 = vrot.slane %v3650, 4
        %v3652 = vadd.f32 %v3650, %v3651
        %v3653 = vrot.slane %v3652, 2
        %v3654 = vadd.f32 %v3652, %v3653
        %v3655 = vrot.slane %v3654, 1
        %v3656 = vadd.f32 %v3654, %v3655
        %3657 = vmatprep.subr.mxu0 0.0
        %3658 = vmatpush1.msra.mxu0 %v3558
        %3659 = vmatprep.subr.mxu0 0.0
        %3660 = vmatpush1.msra.mxu0 %v3559
        %3661 = vmatprep.subr.mxu0 0.0
        %3662 = vmatpush1.msra.mxu0 %v3560
        %3663 = vmatprep.subr.mxu0 0.0
        %3664 = vmatpush1.msra.mxu0 %v3561
        %3665 = vmatprep.subr.mxu0 0.0
        %3666 = vmatpush1.msra.mxu0 %v3562
        %3667 = vmatprep.subr.mxu0 0.0
        %3668 = vmatpush1.msra.mxu0 %v3563
        %3669 = vmatprep.subr.mxu0 0.0
        %3670 = vmatpush1.msra.mxu0 %v3564
        %3671 = vmatprep.subr.mxu0 0.0
        %3672 = vmatpush1.msra.mxu0 %v3565
        %3673 = vmatprep.subr.mxu0 0.0
        %3674 = vmatpush1.msra.mxu0 %v3566
        %3675 = vmatprep.subr.mxu0 0.0
        %3676 = vmatpush1.msra.mxu0 %v3567
        %3677 = vmatprep.subr.mxu0 0.0
        %3678 = vmatpush1.msra.mxu0 %v3568
        %3679 = vmatprep.subr.mxu0 0.0
        %3680 = vmatpush1.msra.mxu0 %v3569
        %3681 = vmatprep.subr.mxu0 0.0
        %3682 = vmatpush1.msra.mxu0 %v3570
        %3683 = vmatprep.subr.mxu0 0.0
        %3684 = vmatpush1.msra.mxu0 %v3571
        %3685 = vmatprep.subr.mxu0 0.0
        %3686 = vmatpush1.msra.mxu0 %v3572
        %3687 = vmatprep.subr.mxu0 0.0
        %3688 = vmatpush1.msra.mxu0 %v3573
        %3689 = vmatprep.subr.mxu0 0.0
        %3690 = vmatpush1.msra.mxu0 0.0
        %3691 = vmatprep.subr.mxu0 0.0
        %3692 = vmatpush1.msra.mxu0 0.0
        %3693 = vmatprep.subr.mxu0 0.0
        %3694 = vmatpush1.msra.mxu0 0.0
        %3695 = vmatprep.subr.mxu0 0.0
        %3696 = vmatpush1.msra.mxu0 0.0
        %3697 = vmatprep.subr.mxu0 0.0
        %3698 = vmatpush1.msra.mxu0 0.0
        %3699 = vmatprep.subr.mxu0 0.0
        %3700 = vmatpush1.msra.mxu0 0.0
        %3701 = vmatprep.subr.mxu0 0.0
        %3702 = vmatpush1.msra.mxu0 0.0
        %3703 = vmatprep.subr.mxu0 0.0
        %3704 = vmatpush1.msra.mxu0 0.0
        %3705 = vmatprep.subr.mxu0 0.0
        %3706 = vmatpush1.msra.mxu0 0.0
        %3707 = vmatprep.subr.mxu0 0.0
        %3708 = vmatpush1.msra.mxu0 0.0
        %3709 = vmatprep.subr.mxu0 0.0
        %3710 = vmatpush1.msra.mxu0 0.0
        %3711 = vmatprep.subr.mxu0 0.0
        %3712 = vmatpush1.msra.mxu0 0.0
        %3713 = vmatprep.subr.mxu0 0.0
        %3714 = vmatpush1.msra.mxu0 0.0
        %3715 = vmatprep.subr.mxu0 0.0
        %3716 = vmatpush1.msra.mxu0 0.0
        %3717 = vmatprep.subr.mxu0 0.0
        %3718 = vmatpush1.msra.mxu0 0.0
        %3719 = vmatprep.subr.mxu0 0.0
        %3720 = vmatpush1.msra.mxu0 0.0
        %3721 = vmatprep.mubr.f32.mxu0 0.0
        %3722 = vmatmul.mubr.f32.gmra.mrb[0].mxu0 %v3656
        %v3723 = vpop.f32.mrb[0].mxu0
        %v3724 = vadd.f32 1e-05, %v3723
        %v3725 = vpop.f32.mrb[0].mxu0
        %3726 = vdwg.mxu0
        %v3727 = vrsqrt.pop %v3724
        %v3728 = vlaneseq
        %v3729 = vshrl.u32 %v3728, 7
        %v3730 = vsub.s32 0, %v3729
        %v3731 = vrot.slane %v3727, %v3730
        %v3732 = vmul.f32 %v3648, %v3731
        %vm3733 = vcmp.ge.f32.partialorder %v3732, 0.0
        %v3734 = vmul.f32 %v3732, 0.2
        %v3735 = vsel %vm3733, %v3732, %v3734
        %v3736 = vpack.c.bf16 %v3735, %v3735
        %v3737 = vld [vmem:[%s17] sm:$0x1]
        %vm3738 = vcmask 15360
        %v3740 = vsel %vm3738, %v3737, 0
        %vm3742 = vcmask 1040384
        %v3744 = vsel %vm3742, %v3736, 0
        %3746 = vmatprep.subr.bf16.mxu0 0
        %3747 = vmatpush1.bf16.msra.mxu0 %v3744
        %3748 = vmatprep.subr.bf16.mxu0 0
        %3749 = vmatpush1.bf16.msra.mxu0 0
        %3750 = vmatprep.subr.bf16.mxu0 0
        %3751 = vmatpush1.bf16.msra.mxu0 0
        %3752 = vmatprep.subr.bf16.mxu0 0
        %3753 = vmatpush1.bf16.msra.mxu0 0
        %3754 = vmatprep.subr.bf16.mxu0 0
        %3755 = vmatpush1.bf16.msra.mxu0 0
        %3756 = vmatprep.subr.bf16.mxu0 0
        %3757 = vmatpush1.bf16.msra.mxu0 0
        %3758 = vmatprep.subr.bf16.mxu0 0
        %3759 = vmatpush1.bf16.msra.mxu0 0
        %3760 = vmatprep.subr.bf16.mxu0 0
        %3761 = vmatpush1.bf16.msra.mxu0 0
        %3762 = vmatprep.subr.bf16.mxu0 0
        %3763 = vmatpush1.bf16.msra.mxu0 0
        %3764 = vmatprep.subr.bf16.mxu0 0
        %3765 = vmatpush1.bf16.msra.mxu0 0
        %3766 = vmatprep.subr.bf16.mxu0 0
        %3767 = vmatpush1.bf16.msra.mxu0 0
        %3768 = vmatprep.subr.bf16.mxu0 0
        %3769 = vmatpush1.bf16.msra.mxu0 0
        %3770 = vmatprep.subr.bf16.mxu0 0
        %3771 = vmatpush1.bf16.msra.mxu0 0
        %3772 = vmatprep.subr.bf16.mxu0 0
        %3773 = vmatpush1.bf16.msra.mxu0 0
        %3774 = vmatprep.subr.bf16.mxu0 0
        %3775 = vmatpush1.bf16.msra.mxu0 0
        %3776 = vmatprep.subr.bf16.mxu0 0
        %3777 = vmatpush1.bf16.msra.mxu0 0
        %3778 = vmatprep.mubr.bf16.mxu0 0
        %3779 = vmatmul.mubr.bf16.gmra.mrb[0].mxu0 %v3740
        %v3780 = vpop.f32.mrb[0].mxu0
        %v3781 = vadd.f32 0.0, %v3780
        %v3782 = vpop.f32.mrb[0].mxu0
        %v3783 = vpop.f32.mrb[0].mxu0
        %v3784 = vpop.f32.mrb[0].mxu0
        %3785 = vdwg.mxu0
        %v3786 = vpack.c.bf16 %v3781, %v3781
        %v3787 = vld [vmem:[%s16] sm:$0xf]
        %v3788 = vld [vmem:[%s16 + $0x4] sm:$0xf]
        %v3789 = vld [vmem:[%s16 + $0x8] sm:$0xf]
        %v3790 = vld [vmem:[%s16 + $0xc] sm:$0xf]
        %v3791 = vld [vmem:[%s16 + $0x10] sm:$0xf]
        %v3792 = vld [vmem:[%s16 + $0x14] sm:$0xf]
        %v3793 = vld [vmem:[%s16 + $0x18] sm:$0xf]
        %v3794 = vld [vmem:[%s16 + $0x1c] sm:$0xf]
        %v3795 = vld [vmem:[%s16 + $0x20] sm:$0xf]
        %v3796 = vld [vmem:[%s16 + $0x24] sm:$0xf]
        %v3797 = vld [vmem:[%s16 + $0x28] sm:$0xf]
        %v3798 = vld [vmem:[%s16 + $0x2c] sm:$0xf]
        %v3799 = vld [vmem:[%s16 + $0x30] sm:$0xf]
        %v3800 = vld [vmem:[%s16 + $0x34] sm:$0xf]
        %v3801 = vld [vmem:[%s16 + $0x38] sm:$0xf]
        %v3802 = vld [vmem:[%s16 + $0x3c] sm:$0xf]
        %s3803 = scalar_lea.vmem %s17, 1
        %v3804 = vld [vmem:[%s3803] sm:$0x1]
        %v3806 = vsel %vm3738, %v3804, 0
        %3808 = vmatprep.subr.bf16.mxu0 0
        %3809 = vmatpush1.bf16.msra.mxu0 %v3744
        %3810 = vmatprep.subr.bf16.mxu0 0
        %3811 = vmatpush1.bf16.msra.mxu0 0
        %3812 = vmatprep.subr.bf16.mxu0 0
        %3813 = vmatpush1.bf16.msra.mxu0 0
        %3814 = vmatprep.subr.bf16.mxu0 0
        %3815 = vmatpush1.bf16.msra.mxu0 0
        %3816 = vmatprep.subr.bf16.mxu0 0
        %3817 = vmatpush1.bf16.msra.mxu0 0
        %3818 = vmatprep.subr.bf16.mxu0 0
        %3819 = vmatpush1.bf16.msra.mxu0 0
        %3820 = vmatprep.subr.bf16.mxu0 0
        %3821 = vmatpush1.bf16.msra.mxu0 0
        %3822 = vmatprep.subr.bf16.mxu0 0
        %3823 = vmatpush1.bf16.msra.mxu0 0
        %3824 = vmatprep.subr.bf16.mxu0 0
        %3825 = vmatpush1.bf16.msra.mxu0 0
        %3826 = vmatprep.subr.bf16.mxu0 0
        %3827 = vmatpush1.bf16.msra.mxu0 0
        %3828 = vmatprep.subr.bf16.mxu0 0
        %3829 = vmatpush1.bf16.msra.mxu0 0
        %3830 = vmatprep.subr.bf16.mxu0 0
        %3831 = vmatpush1.bf16.msra.mxu0 0
        %3832 = vmatprep.subr.bf16.mxu0 0
        %3833 = vmatpush1.bf16.msra.mxu0 0
        %3834 = vmatprep.subr.bf16.mxu0 0
        %3835 = vmatpush1.bf16.msra.mxu0 0
        %3836 = vmatprep.subr.bf16.mxu0 0
        %3837 = vmatpush1.bf16.msra.mxu0 0
        %3838 = vmatprep.subr.bf16.mxu0 0
        %3839 = vmatpush1.bf16.msra.mxu0 0
        %3840 = vmatprep.mubr.bf16.mxu0 0
        %3841 = vmatmul.mubr.bf16.gmra.mrb[0].mxu0 %v3806
        %v3842 = vpop.f32.mrb[0].mxu0
        %v3843 = vadd.f32 0.0, %v3842
        %v3844 = vpop.f32.mrb[0].mxu0
        %v3845 = vpop.f32.mrb[0].mxu0
        %v3846 = vpop.f32.mrb[0].mxu0
        %3847 = vdwg.mxu0
        %v3848 = vpack.c.bf16 %v3843, %v3843
        %s3849 = scalar_lea.vmem %s16, 64
        %v3850 = vld [vmem:[%s3849] sm:$0xf]
        %v3851 = vld [vmem:[%s3849 + $0x4] sm:$0xf]
        %v3852 = vld [vmem:[%s3849 + $0x8] sm:$0xf]
        %v3853 = vld [vmem:[%s3849 + $0xc] sm:$0xf]
        %v3854 = vld [vmem:[%s3849 + $0x10] sm:$0xf]
        %v3855 = vld [vmem:[%s3849 + $0x14] sm:$0xf]
        %v3856 = vld [vmem:[%s3849 + $0x18] sm:$0xf]
        %v3857 = vld [vmem:[%s3849 + $0x1c] sm:$0xf]
        %v3858 = vld [vmem:[%s3849 + $0x20] sm:$0xf]
        %v3859 = vld [vmem:[%s3849 + $0x24] sm:$0xf]
        %v3860 = vld [vmem:[%s3849 + $0x28] sm:$0xf]
        %v3861 = vld [vmem:[%s3849 + $0x2c] sm:$0xf]
        %v3862 = vld [vmem:[%s3849 + $0x30] sm:$0xf]
        %v3863 = vld [vmem:[%s3849 + $0x34] sm:$0xf]
        %v3864 = vld [vmem:[%s3849 + $0x38] sm:$0xf]
        %v3865 = vld [vmem:[%s3849 + $0x3c] sm:$0xf]
        %v3882 = vunpack.c.l.b16 %v3850
        %v3883 = vunpack.c.l.b16 %v3851
        %v3884 = vunpack.c.l.b16 %v3852
        %v3885 = vunpack.c.l.b16 %v3853
        %v3886 = vunpack.c.l.b16 %v3854
        %v3887 = vunpack.c.l.b16 %v3855
        %v3888 = vunpack.c.l.b16 %v3856
        %v3889 = vunpack.c.l.b16 %v3857
        %v3890 = vunpack.c.l.b16 %v3858
        %v3891 = vunpack.c.l.b16 %v3859
        %v3892 = vunpack.c.l.b16 %v3860
        %v3893 = vunpack.c.l.b16 %v3861
        %v3894 = vunpack.c.l.b16 %v3862
        %v3895 = vunpack.c.l.b16 %v3863
        %v3896 = vunpack.c.l.b16 %v3864
        %v3897 = vunpack.c.l.b16 %v3865
        %v3898 = vpack.c.b16 %v3883, %v3882
        %v3899 = vpack.c.b16 %v3885, %v3884
        %v3900 = vpack.c.b16 %v3887, %v3886
        %v3901 = vpack.c.b16 %v3889, %v3888
        %v3902 = vpack.c.b16 %v3891, %v3890
        %v3903 = vpack.c.b16 %v3893, %v3892
        %v3904 = vpack.c.b16 %v3895, %v3894
        %v3905 = vpack.c.b16 %v3897, %v3896
        %3914 = vmatprep.subr.bf16.mxu0 0
        %3915 = vmatpush1.bf16.msra.mxu0 %v3898
        %3916 = vmatprep.subr.bf16.mxu0 0
        %3917 = vmatpush1.bf16.msra.mxu0 %v3899
        %3918 = vmatprep.subr.bf16.mxu0 0
        %3919 = vmatpush1.bf16.msra.mxu0 %v3900
        %3920 = vmatprep.subr.bf16.mxu0 0
        %3921 = vmatpush1.bf16.msra.mxu0 %v3901
        %3922 = vmatprep.subr.bf16.mxu0 0
        %3923 = vmatpush1.bf16.msra.mxu0 %v3902
        %3924 = vmatprep.subr.bf16.mxu0 0
        %3925 = vmatpush1.bf16.msra.mxu0 %v3903
        %3926 = vmatprep.subr.bf16.mxu0 0
        %3927 = vmatpush1.bf16.msra.mxu0 %v3904
        %3928 = vmatprep.subr.bf16.mxu0 0
        %3929 = vmatpush1.bf16.msra.mxu0 %v3905
        %3930 = vmatprep.subr.bf16.mxu0 0
        %3931 = vmatpush1.bf16.msra.mxu0 0
        %3932 = vmatprep.subr.bf16.mxu0 0
        %3933 = vmatpush1.bf16.msra.mxu0 0
        %3934 = vmatprep.subr.bf16.mxu0 0
        %3935 = vmatpush1.bf16.msra.mxu0 0
        %3936 = vmatprep.subr.bf16.mxu0 0
        %3937 = vmatpush1.bf16.msra.mxu0 0
        %3938 = vmatprep.subr.bf16.mxu0 0
        %3939 = vmatpush1.bf16.msra.mxu0 0
        %3940 = vmatprep.subr.bf16.mxu0 0
        %3941 = vmatpush1.bf16.msra.mxu0 0
        %3942 = vmatprep.subr.bf16.mxu0 0
        %3943 = vmatpush1.bf16.msra.mxu0 0
        %3944 = vmatprep.subr.bf16.mxu0 0
        %3945 = vmatpush1.bf16.msra.mxu0 0
        %3946 = vmatprep.mubr.bf16.mxu0 0
        %3947 = vmatmul.mubr.bf16.gmra.mrb[0].mxu0 %v3848
        %v3948 = vpop.f32.mrb[0].mxu0
        %v3949 = vadd.f32 0.0, %v3948
        %v3950 = vpop.f32.mrb[0].mxu0
        %v3951 = vpop.f32.mrb[0].mxu0
        %v3952 = vpop.f32.mrb[0].mxu0
        %3953 = vdwg.mxu0
        %v3970 = vunpack.c.l.b16 %v3787
        %v3971 = vunpack.c.l.b16 %v3788
        %v3972 = vunpack.c.l.b16 %v3789
        %v3973 = vunpack.c.l.b16 %v3790
        %v3974 = vunpack.c.l.b16 %v3791
        %v3975 = vunpack.c.l.b16 %v3792
        %v3976 = vunpack.c.l.b16 %v3793
        %v3977 = vunpack.c.l.b16 %v3794
        %v3978 = vunpack.c.l.b16 %v3795
        %v3979 = vunpack.c.l.b16 %v3796
        %v3980 = vunpack.c.l.b16 %v3797
        %v3981 = vunpack.c.l.b16 %v3798
        %v3982 = vunpack.c.l.b16 %v3799
        %v3983 = vunpack.c.l.b16 %v3800
        %v3984 = vunpack.c.l.b16 %v3801
        %v3985 = vunpack.c.l.b16 %v3802
        %v3986 = vpack.c.b16 %v3971, %v3970
        %v3987 = vpack.c.b16 %v3973, %v3972
        %v3988 = vpack.c.b16 %v3975, %v3974
        %v3989 = vpack.c.b16 %v3977, %v3976
        %v3990 = vpack.c.b16 %v3979, %v3978
        %v3991 = vpack.c.b16 %v3981, %v3980
        %v3992 = vpack.c.b16 %v3983, %v3982
        %v3993 = vpack.c.b16 %v3985, %v3984
        %4002 = vmatprep.subr.bf16.mxu0 0
        %4003 = vmatpush1.bf16.msra.mxu0 %v3986
        %4004 = vmatprep.subr.bf16.mxu0 0
        %4005 = vmatpush1.bf16.msra.mxu0 %v3987
        %4006 = vmatprep.subr.bf16.mxu0 0
        %4007 = vmatpush1.bf16.msra.mxu0 %v3988
        %4008 = vmatprep.subr.bf16.mxu0 0
        %4009 = vmatpush1.bf16.msra.mxu0 %v3989
        %4010 = vmatprep.subr.bf16.mxu0 0
        %4011 = vmatpush1.bf16.msra.mxu0 %v3990
        %4012 = vmatprep.subr.bf16.mxu0 0
        %4013 = vmatpush1.bf16.msra.mxu0 %v3991
        %4014 = vmatprep.subr.bf16.mxu0 0
        %4015 = vmatpush1.bf16.msra.mxu0 %v3992
        %4016 = vmatprep.subr.bf16.mxu0 0
        %4017 = vmatpush1.bf16.msra.mxu0 %v3993
        %4018 = vmatprep.subr.bf16.mxu0 0
        %4019 = vmatpush1.bf16.msra.mxu0 0
        %4020 = vmatprep.subr.bf16.mxu0 0
        %4021 = vmatpush1.bf16.msra.mxu0 0
        %4022 = vmatprep.subr.bf16.mxu0 0
        %4023 = vmatpush1.bf16.msra.mxu0 0
        %4024 = vmatprep.subr.bf16.mxu0 0
        %4025 = vmatpush1.bf16.msra.mxu0 0
        %4026 = vmatprep.subr.bf16.mxu0 0
        %4027 = vmatpush1.bf16.msra.mxu0 0
        %4028 = vmatprep.subr.bf16.mxu0 0
        %4029 = vmatpush1.bf16.msra.mxu0 0
        %4030 = vmatprep.subr.bf16.mxu0 0
        %4031 = vmatpush1.bf16.msra.mxu0 0
        %4032 = vmatprep.subr.bf16.mxu0 0
        %4033 = vmatpush1.bf16.msra.mxu0 0
        %4034 = vmatprep.mubr.bf16.mxu0 0
        %4035 = vmatmul.mubr.bf16.gmra.mrb[0].mxu0 %v3786
        %v4036 = vpop.f32.mrb[0].mxu0
        %v4037 = vadd.f32 %v3949, %v4036
        %v4038 = vpop.f32.mrb[0].mxu0
        %v4039 = vpop.f32.mrb[0].mxu0
        %v4040 = vpop.f32.mrb[0].mxu0
        %4041 = vdwg.mxu0
        %s4042 = scalar_lea.vmem %s17, 2
        %v4043 = vld [vmem:[%s4042] sm:$0x1]
        %v4045 = vsel %vm3738, %v4043, 0
        %4047 = vmatprep.subr.bf16.mxu0 0
        %4048 = vmatpush1.bf16.msra.mxu0 %v3744
        %4049 = vmatprep.subr.bf16.mxu0 0
        %4050 = vmatpush1.bf16.msra.mxu0 0
        %4051 = vmatprep.subr.bf16.mxu0 0
        %4052 = vmatpush1.bf16.msra.mxu0 0
        %4053 = vmatprep.subr.bf16.mxu0 0
        %4054 = vmatpush1.bf16.msra.mxu0 0
        %4055 = vmatprep.subr.bf16.mxu0 0
        %4056 = vmatpush1.bf16.msra.mxu0 0
        %4057 = vmatprep.subr.bf16.mxu0 0
        %4058 = vmatpush1.bf16.msra.mxu0 0
        %4059 = vmatprep.subr.bf16.mxu0 0
        %4060 = vmatpush1.bf16.msra.mxu0 0
        %4061 = vmatprep.subr.bf16.mxu0 0
        %4062 = vmatpush1.bf16.msra.mxu0 0
        %4063 = vmatprep.subr.bf16.mxu0 0
        %4064 = vmatpush1.bf16.msra.mxu0 0
        %4065 = vmatprep.subr.bf16.mxu0 0
        %4066 = vmatpush1.bf16.msra.mxu0 0
        %4067 = vmatprep.subr.bf16.mxu0 0
        %4068 = vmatpush1.bf16.msra.mxu0 0
        %4069 = vmatprep.subr.bf16.mxu0 0
        %4070 = vmatpush1.bf16.msra.mxu0 0
        %4071 = vmatprep.subr.bf16.mxu0 0
        %4072 = vmatpush1.bf16.msra.mxu0 0
        %4073 = vmatprep.subr.bf16.mxu0 0
        %4074 = vmatpush1.bf16.msra.mxu0 0
        %4075 = vmatprep.subr.bf16.mxu0 0
        %4076 = vmatpush1.bf16.msra.mxu0 0
        %4077 = vmatprep.subr.bf16.mxu0 0
        %4078 = vmatpush1.bf16.msra.mxu0 0
        %4079 = vmatprep.mubr.bf16.mxu0 0
        %4080 = vmatmul.mubr.bf16.gmra.mrb[0].mxu0 %v4045
        %v4081 = vpop.f32.mrb[0].mxu0
        %v4082 = vadd.f32 0.0, %v4081
        %v4083 = vpop.f32.mrb[0].mxu0
        %v4084 = vpop.f32.mrb[0].mxu0
        %v4085 = vpop.f32.mrb[0].mxu0
        %4086 = vdwg.mxu0
        %v4087 = vpack.c.bf16 %v4082, %v4082
        %s4088 = scalar_lea.vmem %s16, 128
        %v4089 = vld [vmem:[%s4088] sm:$0xf]
        %v4090 = vld [vmem:[%s4088 + $0x4] sm:$0xf]
        %v4091 = vld [vmem:[%s4088 + $0x8] sm:$0xf]
        %v4092 = vld [vmem:[%s4088 + $0xc] sm:$0xf]
        %v4093 = vld [vmem:[%s4088 + $0x10] sm:$0xf]
        %v4094 = vld [vmem:[%s4088 + $0x14] sm:$0xf]
        %v4095 = vld [vmem:[%s4088 + $0x18] sm:$0xf]
        %v4096 = vld [vmem:[%s4088 + $0x1c] sm:$0xf]
        %v4097 = vld [vmem:[%s4088 + $0x20] sm:$0xf]
        %v4098 = vld [vmem:[%s4088 + $0x24] sm:$0xf]
        %v4099 = vld [vmem:[%s4088 + $0x28] sm:$0xf]
        %v4100 = vld [vmem:[%s4088 + $0x2c] sm:$0xf]
        %v4101 = vld [vmem:[%s4088 + $0x30] sm:$0xf]
        %v4102 = vld [vmem:[%s4088 + $0x34] sm:$0xf]
        %v4103 = vld [vmem:[%s4088 + $0x38] sm:$0xf]
        %v4104 = vld [vmem:[%s4088 + $0x3c] sm:$0xf]
        %v4121 = vunpack.c.l.b16 %v4089
        %v4122 = vunpack.c.l.b16 %v4090
        %v4123 = vunpack.c.l.b16 %v4091
        %v4124 = vunpack.c.l.b16 %v4092
        %v4125 = vunpack.c.l.b16 %v4093
        %v4126 = vunpack.c.l.b16 %v4094
        %v4127 = vunpack.c.l.b16 %v4095
        %v4128 = vunpack.c.l.b16 %v4096
        %v4129 = vunpack.c.l.b16 %v4097
        %v4130 = vunpack.c.l.b16 %v4098
        %v4131 = vunpack.c.l.b16 %v4099
        %v4132 = vunpack.c.l.b16 %v4100
        %v4133 = vunpack.c.l.b16 %v4101
        %v4134 = vunpack.c.l.b16 %v4102
        %v4135 = vunpack.c.l.b16 %v4103
        %v4136 = vunpack.c.l.b16 %v4104
        %v4137 = vpack.c.b16 %v4122, %v4121
        %v4138 = vpack.c.b16 %v4124, %v4123
        %v4139 = vpack.c.b16 %v4126, %v4125
        %v4140 = vpack.c.b16 %v4128, %v4127
        %v4141 = vpack.c.b16 %v4130, %v4129
        %v4142 = vpack.c.b16 %v4132, %v4131
        %v4143 = vpack.c.b16 %v4134, %v4133
        %v4144 = vpack.c.b16 %v4136, %v4135
        %4153 = vmatprep.subr.bf16.mxu0 0
        %4154 = vmatpush1.bf16.msra.mxu0 %v4137
        %4155 = vmatprep.subr.bf16.mxu0 0
        %4156 = vmatpush1.bf16.msra.mxu0 %v4138
        %4157 = vmatprep.subr.bf16.mxu0 0
        %4158 = vmatpush1.bf16.msra.mxu0 %v4139
        %4159 = vmatprep.subr.bf16.mxu0 0
        %4160 = vmatpush1.bf16.msra.mxu0 %v4140
        %4161 = vmatprep.subr.bf16.mxu0 0
        %4162 = vmatpush1.bf16.msra.mxu0 %v4141
        %4163 = vmatprep.subr.bf16.mxu0 0
        %4164 = vmatpush1.bf16.msra.mxu0 %v4142
        %4165 = vmatprep.subr.bf16.mxu0 0
        %4166 = vmatpush1.bf16.msra.mxu0 %v4143
        %4167 = vmatprep.subr.bf16.mxu0 0
        %4168 = vmatpush1.bf16.msra.mxu0 %v4144
        %4169 = vmatprep.subr.bf16.mxu0 0
        %4170 = vmatpush1.bf16.msra.mxu0 0
        %4171 = vmatprep.subr.bf16.mxu0 0
        %4172 = vmatpush1.bf16.msra.mxu0 0
        %4173 = vmatprep.subr.bf16.mxu0 0
        %4174 = vmatpush1.bf16.msra.mxu0 0
        %4175 = vmatprep.subr.bf16.mxu0 0
        %4176 = vmatpush1.bf16.msra.mxu0 0
        %4177 = vmatprep.subr.bf16.mxu0 0
        %4178 = vmatpush1.bf16.msra.mxu0 0
        %4179 = vmatprep.subr.bf16.mxu0 0
        %4180 = vmatpush1.bf16.msra.mxu0 0
        %4181 = vmatprep.subr.bf16.mxu0 0
        %4182 = vmatpush1.bf16.msra.mxu0 0
        %4183 = vmatprep.subr.bf16.mxu0 0
        %4184 = vmatpush1.bf16.msra.mxu0 0
        %4185 = vmatprep.mubr.bf16.mxu0 0
        %4186 = vmatmul.mubr.bf16.gmra.mrb[0].mxu0 %v4087
        %v4187 = vpop.f32.mrb[0].mxu0
        %v4188 = vadd.f32 0.0, %v4187
        %v4189 = vpop.f32.mrb[0].mxu0
        %v4190 = vpop.f32.mrb[0].mxu0
        %v4191 = vpop.f32.mrb[0].mxu0
        %4192 = vdwg.mxu0
        %v4193 = vadd.f32 %v4037, %v4188
        %s4194 = scalar_lea.vmem %s17, 3
        %v4195 = vld [vmem:[%s4194] sm:$0x1]
        %v4197 = vsel %vm3738, %v4195, 0
        %4199 = vmatprep.subr.bf16.mxu0 0
        %4200 = vmatpush1.bf16.msra.mxu0 %v3744
        %4201 = vmatprep.subr.bf16.mxu0 0
        %4202 = vmatpush1.bf16.msra.mxu0 0
        %4203 = vmatprep.subr.bf16.mxu0 0
        %4204 = vmatpush1.bf16.msra.mxu0 0
        %4205 = vmatprep.subr.bf16.mxu0 0
        %4206 = vmatpush1.bf16.msra.mxu0 0
        %4207 = vmatprep.subr.bf16.mxu0 0
        %4208 = vmatpush1.bf16.msra.mxu0 0
        %4209 = vmatprep.subr.bf16.mxu0 0
        %4210 = vmatpush1.bf16.msra.mxu0 0
        %4211 = vmatprep.subr.bf16.mxu0 0
        %4212 = vmatpush1.bf16.msra.mxu0 0
        %4213 = vmatprep.subr.bf16.mxu0 0
        %4214 = vmatpush1.bf16.msra.mxu0 0
        %4215 = vmatprep.subr.bf16.mxu0 0
        %4216 = vmatpush1.bf16.msra.mxu0 0
        %4217 = vmatprep.subr.bf16.mxu0 0
        %4218 = vmatpush1.bf16.msra.mxu0 0
        %4219 = vmatprep.subr.bf16.mxu0 0
        %4220 = vmatpush1.bf16.msra.mxu0 0
        %4221 = vmatprep.subr.bf16.mxu0 0
        %4222 = vmatpush1.bf16.msra.mxu0 0
        %4223 = vmatprep.subr.bf16.mxu0 0
        %4224 = vmatpush1.bf16.msra.mxu0 0
        %4225 = vmatprep.subr.bf16.mxu0 0
        %4226 = vmatpush1.bf16.msra.mxu0 0
        %4227 = vmatprep.subr.bf16.mxu0 0
        %4228 = vmatpush1.bf16.msra.mxu0 0
        %4229 = vmatprep.subr.bf16.mxu0 0
        %4230 = vmatpush1.bf16.msra.mxu0 0
        %4231 = vmatprep.mubr.bf16.mxu0 0
        %4232 = vmatmul.mubr.bf16.gmra.mrb[0].mxu0 %v4197
        %v4233 = vpop.f32.mrb[0].mxu0
        %v4234 = vadd.f32 0.0, %v4233
        %v4235 = vpop.f32.mrb[0].mxu0
        %v4236 = vpop.f32.mrb[0].mxu0
        %v4237 = vpop.f32.mrb[0].mxu0
        %4238 = vdwg.mxu0
        %v4239 = vpack.c.bf16 %v4234, %v4234
        %s4240 = scalar_lea.vmem %s16, 192
        %v4241 = vld [vmem:[%s4240] sm:$0xf]
        %v4242 = vld [vmem:[%s4240 + $0x4] sm:$0xf]
        %v4243 = vld [vmem:[%s4240 + $0x8] sm:$0xf]
        %v4244 = vld [vmem:[%s4240 + $0xc] sm:$0xf]
        %v4245 = vld [vmem:[%s4240 + $0x10] sm:$0xf]
        %v4246 = vld [vmem:[%s4240 + $0x14] sm:$0xf]
        %v4247 = vld [vmem:[%s4240 + $0x18] sm:$0xf]
        %v4248 = vld [vmem:[%s4240 + $0x1c] sm:$0xf]
        %v4249 = vld [vmem:[%s4240 + $0x20] sm:$0xf]
        %v4250 = vld [vmem:[%s4240 + $0x24] sm:$0xf]
        %v4251 = vld [vmem:[%s4240 + $0x28] sm:$0xf]
        %v4252 = vld [vmem:[%s4240 + $0x2c] sm:$0xf]
        %v4253 = vld [vmem:[%s4240 + $0x30] sm:$0xf]
        %v4254 = vld [vmem:[%s4240 + $0x34] sm:$0xf]
        %v4255 = vld [vmem:[%s4240 + $0x38] sm:$0xf]
        %v4256 = vld [vmem:[%s4240 + $0x3c] sm:$0xf]
        %v4273 = vunpack.c.l.b16 %v4241
        %v4274 = vunpack.c.l.b16 %v4242
        %v4275 = vunpack.c.l.b16 %v4243
        %v4276 = vunpack.c.l.b16 %v4244
        %v4277 = vunpack.c.l.b16 %v4245
        %v4278 = vunpack.c.l.b16 %v4246
        %v4279 = vunpack.c.l.b16 %v4247
        %v4280 = vunpack.c.l.b16 %v4248
        %v4281 = vunpack.c.l.b16 %v4249
        %v4282 = vunpack.c.l.b16 %v4250
        %v4283 = vunpack.c.l.b16 %v4251
        %v4284 = vunpack.c.l.b16 %v4252
        %v4285 = vunpack.c.l.b16 %v4253
        %v4286 = vunpack.c.l.b16 %v4254
        %v4287 = vunpack.c.l.b16 %v4255
        %v4288 = vunpack.c.l.b16 %v4256
        %v4289 = vpack.c.b16 %v4274, %v4273
        %v4290 = vpack.c.b16 %v4276, %v4275
        %v4291 = vpack.c.b16 %v4278, %v4277
        %v4292 = vpack.c.b16 %v4280, %v4279
        %v4293 = vpack.c.b16 %v4282, %v4281
        %v4294 = vpack.c.b16 %v4284, %v4283
        %v4295 = vpack.c.b16 %v4286, %v4285
        %v4296 = vpack.c.b16 %v4288, %v4287
        %4305 = vmatprep.subr.bf16.mxu0 0
        %4306 = vmatpush1.bf16.msra.mxu0 %v4289
        %4307 = vmatprep.subr.bf16.mxu0 0
        %4308 = vmatpush1.bf16.msra.mxu0 %v4290
        %4309 = vmatprep.subr.bf16.mxu0 0
        %4310 = vmatpush1.bf16.msra.mxu0 %v4291
        %4311 = vmatprep.subr.bf16.mxu0 0
        %4312 = vmatpush1.bf16.msra.mxu0 %v4292
        %4313 = vmatprep.subr.bf16.mxu0 0
        %4314 = vmatpush1.bf16.msra.mxu0 %v4293
        %4315 = vmatprep.subr.bf16.mxu0 0
        %4316 = vmatpush1.bf16.msra.mxu0 %v4294
        %4317 = vmatprep.subr.bf16.mxu0 0
        %4318 = vmatpush1.bf16.msra.mxu0 %v4295
        %4319 = vmatprep.subr.bf16.mxu0 0
        %4320 = vmatpush1.bf16.msra.mxu0 %v4296
        %4321 = vmatprep.subr.bf16.mxu0 0
        %4322 = vmatpush1.bf16.msra.mxu0 0
        %4323 = vmatprep.subr.bf16.mxu0 0
        %4324 = vmatpush1.bf16.msra.mxu0 0
        %4325 = vmatprep.subr.bf16.mxu0 0
        %4326 = vmatpush1.bf16.msra.mxu0 0
        %4327 = vmatprep.subr.bf16.mxu0 0
        %4328 = vmatpush1.bf16.msra.mxu0 0
        %4329 = vmatprep.subr.bf16.mxu0 0
        %4330 = vmatpush1.bf16.msra.mxu0 0
        %4331 = vmatprep.subr.bf16.mxu0 0
        %4332 = vmatpush1.bf16.msra.mxu0 0
        %4333 = vmatprep.subr.bf16.mxu0 0
        %4334 = vmatpush1.bf16.msra.mxu0 0
        %4335 = vmatprep.subr.bf16.mxu0 0
        %4336 = vmatpush1.bf16.msra.mxu0 0
        %4337 = vmatprep.mubr.bf16.mxu0 0
        %4338 = vmatmul.mubr.bf16.gmra.mrb[0].mxu0 %v4239
        %v4339 = vpop.f32.mrb[0].mxu0
        %v4340 = vadd.f32 0.0, %v4339
        %v4341 = vpop.f32.mrb[0].mxu0
        %v4342 = vpop.f32.mrb[0].mxu0
        %v4343 = vpop.f32.mrb[0].mxu0
        %4344 = vdwg.mxu0
        %v4345 = vadd.f32 %v4193, %v4340
        %v4346 = vld [vmem:[#allocation2] sm:$0x1]
        %v4347 = vadd.f32 %v4345, %v4346
        %v4348 = vxor.u32 %v4347, 2147483648
        %v4349 = vmul.f32 %v4348, 1.442695
        %v4350 = vpow.pop %v4349
        %v4351 = vadd.f32 %v4350, 1.0
        %v4352 = vrcp.pop %v4351
        %v4353 = vmul.f32 1.0, %v4352
        %vm4354 = vcmask 0
        %4355 = vst.msk [vmem:[%s722] sm:$0x1] %vm4354, %v4353
        %p4356 = scmp.lt.s32.totalorder %s39, 1
        %s4357 = scalar_select %p4356, %s39, 1
        %s4358 = scalar_lea.vmem %s19, %s4357
        // Predicated region
        $region129: #{tpu_custom_call.1} parent=95 // pred_check
          %p4359 = pneg %p461
        $region130: #{tpu_custom_call.1} parent=95 // pred_check_branch
          %4361 = sbr.rel (%p4359) target = $region132
        $region131: #{tpu_custom_call.1} parent=95 // pred_region
          _
        $region132: #{tpu_custom_call.1} parent=95 // pred_fallthru
          _
      $region96: #{tpu_custom_call.1} parent=5 // pred_fallthru
        _
      %p4362 = scmp.le.s32.totalorder 2, %s34
      // Predicated region
      $region133: #{tpu_custom_call.1} parent=5 // pred_check
        %p4363 = pneg %p4362
      $region134: #{tpu_custom_call.1} parent=5 // pred_check_branch
        %4365 = sbr.rel (%p4363) target = $region136
      $region135: #{tpu_custom_call.1} parent=5 // pred_region
        %s4366 = ssub.s32 %s34, 2
        // Predicated region
        $region137: #{tpu_custom_call.1} parent=135 // pred_check
          %p4367 = pneg %p467
        $region138: #{tpu_custom_call.1} parent=135 // pred_check_branch
          %4369 = sbr.rel (%p4367) target = $region140
        $region139: #{tpu_custom_call.1} parent=135 // pred_region
          %p4370 = scmp.lt.s32.totalorder %s40, 1
          %s4371 = scalar_select %p4370, %s40, 1
          %s4372 = scalar_lea.vmem %s19, %s4371
        $region140: #{tpu_custom_call.1} parent=135 // pred_fallthru
          _
      $region136: #{tpu_custom_call.1} parent=5 // pred_fallthru
        _
    $region6: #{tpu_custom_call.1} parent=1 // loop_footer
      %s38 = sadd.s32 1, %s34
    $region7: #{tpu_custom_call.1} parent=1 // loop_footer_branch
      %33 = sbr.rel target = $region3
    $region8: #{tpu_custom_call.1} parent=1 // loop_exit
      _
    %4373 = vsyncpa [#allocation4], 1
    %s4374 = scalar_lea.sflag [#allocation4], 1
    %4375 = vsyncpa %s4374, 1
    %4376 = vsyncpa [#allocation6], 1
    %4377 = vsyncpa [#allocation9], 1
    %4378 = vsyncpa [#allocation12], 1
    %4379 = vsyncpa [#allocation15], 1

</llo_original>
